<compile_context>
chip_gen: v5e
topology: v5e:2x2
jax: 0.10.0
libtpu: 0.0.40
codegen_flags: <defaults>
</compile_context>

<pallas_src>
import functools

import jax
import jax.numpy as jnp
from jax import lax
from jax.experimental import pallas as pl
from jax.experimental.pallas import tpu as pltpu

EPS = 1e-5
LPAD = 8          # left (w) pad of the conv-2 scratch -> sublane-aligned interior store


def _cnn_block_kernel(p1_ref, w1_ref, b1_ref, g1_ref, be1_ref,
                      wc_ref, bc_ref, g2_ref, be2_ref,
                      sw1_ref, sb1_ref, sw2_ref, sb2_ref,
                      out_ref, up_ref, pad2_ref,
                      *, H, W, N, C):
    f32 = jnp.float32
    NC = N * C
    R = H * W
    Hh, Wh = H // 2, W // 2
    Wp = pad2_ref.shape[1]

    def cross_n_total(v):
        # v: (1, NC) with lanes ordered (n, c).  Per-channel total over the
        # n lane-blocks, replicated back into every block.  Static lane
        # slices + lane concat of a single-sublane vector (cheap XLU work).
        tot = v[:, :C]
        for k in range(1, N):
            tot = tot + v[:, k * C:(k + 1) * C]
        if N == 1:
            return tot
        return jnp.concatenate([tot] * N, axis=1)

    def batchnorm(xv, g_ref, b_ref):
        # training-mode BatchNorm2d: single-pass biased sum / sum-of-squares.
        colsum = jnp.sum(xv, axis=0, keepdims=True)            # (1, NC)
        colsq = jnp.sum(xv * xv, axis=0, keepdims=True)        # (1, NC)
        inv_cnt = 1.0 / (N * R)
        mean = cross_n_total(colsum) * inv_cnt
        ex2 = cross_n_total(colsq) * inv_cnt
        var = jnp.maximum(ex2 - mean * mean, 0.0)
        return (xv - mean) * (lax.rsqrt(var + EPS) * g_ref[...]) + b_ref[...]

    # ---- up_conv: one clean MXU matmul on the prebuilt im2col patches -------
    up = jnp.dot(p1_ref[...], w1_ref[...],
                 preferred_element_type=f32) + b1_ref[...]       # (R, NC)
    up_ref[...] = up                         # park the residual in VMEM

    # ---- BN -> ReLU ----------------------------------------------------------
    h1 = jnp.maximum(batchnorm(up, g1_ref, be1_ref), 0.0)

    # ---- conv-2 padded scratch: zero only the read border, aligned interior --
    pad2_ref[pl.ds(0, 1), :, :] = jnp.zeros((1, Wp, NC), f32)
    pad2_ref[pl.ds(H + 1, 1), :, :] = jnp.zeros((1, Wp, NC), f32)
    pad2_ref[:, pl.ds(LPAD - 1, 1), :] = jnp.zeros((H + 2, 1, NC), f32)
    pad2_ref[:, pl.ds(LPAD + W, 1), :] = jnp.zeros((H + 2, 1, NC), f32)
    pad2_ref[pl.ds(1, H), pl.ds(LPAD, W), :] = h1.reshape(H, W, NC)

    # ---- conv-2: 9 accumulating K=NC matmuls straight from shifted windows ---
    acc = jnp.zeros((R, NC), f32)
    for ky in range(3):
        for kx in range(3):
            win = pad2_ref[pl.ds(ky, H), pl.ds(LPAD - 1 + kx, W), :]   # (H, W, NC)
            acc = acc + jnp.dot(win.reshape(R, NC),
                                wc_ref[pl.ds((ky * 3 + kx) * NC, NC), :],
                                preferred_element_type=f32)
    h2 = batchnorm(acc + bc_ref[...], g2_ref, be2_ref)

    # ---- residual + ReLU; park back in up_ref (dead at this point) ----------
    a = jnp.maximum(up_ref[...] + h2, 0.0)
    up_ref[...] = a

    # ---- SE: per-(n,c) global average pool is a plain column sum ------------
    y = jnp.sum(a, axis=0, keepdims=True) * (1.0 / R)            # (1, NC)
    hid = jnp.maximum(
        jnp.dot(y, sw1_ref[...], preferred_element_type=f32) + sb1_ref[...], 0.0)
    z = jnp.dot(hid, sw2_ref[...], preferred_element_type=f32) + sb2_ref[...]
    # exact sigmoid on a single (1, NC) vreg; pl.reciprocal(approx=True) would
    # be cheaper but its error budget is too close to the 1e-3 test tolerance.
    s = 1.0 / (1.0 + jnp.exp(-z))                                 # (1, NC), in (0, 1)

    # ---- MaxPool2d(2); SE scale applied after the pool (s > 0, commutes) -----
    av = up_ref[...]                                              # reload parked `a`
    ah = av.reshape(Hh, 2 * W, NC)
    hmax = jnp.maximum(ah[:, :W, :], ah[:, W:, :])                # (Hh, W, NC)
    aw = hmax.reshape(Hh * Wh, 2, NC)
    pooled = jnp.maximum(aw[:, :1, :], aw[:, 1:, :]).reshape(Hh * Wh, NC)
    out_ref[...] = pooled * s


def cnn_block_forward(x_nchw, params):
    N, Cin, H, W = x_nchw.shape
    C = params["w_up"].shape[0]
    hidden = params["se_w1"].shape[1]
    NC, NH = N * C, N * hidden
    Hh, Wh = H // 2, W // 2
    f32 = jnp.float32

    # ---- conv-1 im2col hoisted into XLA: (H*W, 9*N*Cin) patch slab -----------
    x_hwnc = jnp.transpose(x_nchw.astype(f32), (2, 3, 0, 1))      # (H, W, N, Cin)
    xpad = jnp.pad(x_hwnc, ((1, 1), (1, 1), (0, 0), (0, 0)))
    taps = [xpad[ky:ky + H, kx:kx + W] for ky in range(3) for kx in range(3)]
    patches = jnp.stack(taps, axis=2).reshape(H * W, 9 * N * Cin)

    # ---- batch-block-diagonal weights (lane layout n*C + c) ------------------
    eye_n = jnp.eye(N, dtype=f32)
    w_up_t = jnp.transpose(params["w_up"].astype(f32), (2, 3, 1, 0)).reshape(9, Cin, C)
    w1_blk = jnp.einsum("tic,nm->tnimc", w_up_t, eye_n).reshape(9 * N * Cin, NC)
    w_c_t = jnp.transpose(params["w_c"].astype(f32), (2, 3, 1, 0)).reshape(9, C, C)
    wc_blk = jnp.einsum("tic,nm->tnimc", w_c_t, eye_n).reshape(9 * NC, NC)
    se1_blk = jnp.einsum("ch,nm->ncmh", params["se_w1"].astype(f32), eye_n).reshape(NC, NH)
    se2_blk = jnp.einsum("hc,nm->nhmc", params["se_w2"].astype(f32), eye_n).reshape(NH, NC)

    def tile_lanes(p, width):
        # per-channel vector -> (1, N*width) replicated per sample lane-block
        return jnp.tile(p.reshape(1, width).astype(f32), (1, N))

    inputs = [
        patches,
        w1_blk, tile_lanes(params["b_up"], C),
        tile_lanes(params["gamma1"], C), tile_lanes(params["beta1"], C),
        wc_blk, tile_lanes(params["b_c"], C),
        tile_lanes(params["gamma2"], C), tile_lanes(params["beta2"], C),
        se1_blk, tile_lanes(params["se_b1"], hidden),
        se2_blk, tile_lanes(params["se_b2"], C),
    ]

    def full_spec(a):
        nd = a.ndim
        return pl.BlockSpec(a.shape, lambda *_, _nd=nd: (0,) * _nd)

    Wp = ((LPAD + W + 1 + 7) // 8) * 8      # padded-width of the conv-2 scratch

    kernel = functools.partial(_cnn_block_kernel, H=H, W=W, N=N, C=C)

    out2d = pl.pallas_call(
        kernel,
        out_shape=jax.ShapeDtypeStruct((Hh * Wh, NC), f32),
        grid=(1,),
        in_specs=[full_spec(a) for a in inputs],
        out_specs=pl.BlockSpec((Hh * Wh, NC), lambda *_: (0, 0)),
        scratch_shapes=[
            pltpu.VMEM((H * W, NC), f32),         # residual / activation park
            pltpu.VMEM((H + 2, Wp, NC), f32),     # zero-bordered conv-2 input
        ],
        compiler_params=pltpu.CompilerParams(
            dimension_semantics=("arbitrary",)),
    )(*inputs)

    # rows ordered (hh, wh), lanes ordered (n, c) -> NCHW
    return jnp.transpose(out2d.reshape(Hh, Wh, N, C), (2, 3, 0, 1))


def cnn_block_reference(x, p):
    """Pure-JAX NCHW reference mirroring the PyTorch forward (training-mode BN)."""
    def conv(x, w, b):
        y = lax.conv_general_dilated(x, w, (1, 1), ((1, 1), (1, 1)),
                                     dimension_numbers=("NCHW", "OIHW", "NCHW"))
        return y + b[None, :, None, None]

    def bn(x, g, b):
        m = jnp.mean(x, axis=(0, 2, 3), keepdims=True)
        v = jnp.mean((x - m) ** 2, axis=(0, 2, 3), keepdims=True)
        return (x - m) / jnp.sqrt(v + EPS) * g[None, :, None, None] + b[None, :, None, None]

    up = conv(x, p["w_up"], p["b_up"])
    h = jax.nn.relu(bn(up, p["gamma1"], p["beta1"]))
    h = conv(h, p["w_c"], p["b_c"])
    h = bn(h, p["gamma2"], p["beta2"])
    a = jax.nn.relu(up + h)
    y = jnp.mean(a, axis=(2, 3))
    hid = jax.nn.relu(y @ p["se_w1"] + p["se_b1"])
    s = jax.nn.sigmoid(hid @ p["se_w2"] + p["se_b2"])
    a = a * s[:, :, None, None]
    N, C, H, W = a.shape
    return a.reshape(N, C, H // 2, 2, W // 2, 2).max(axis=(3, 5))


if __name__ == "__main__":
    N, Cin, H, W = 2, 4, 16, 16
    C = 32                      # out_channels (>= 16 so SE hidden = C // 16 >= 1)
    hidden = C // 16

    keys = jax.random.split(jax.random.PRNGKey(0), 13)
    params = {
        "w_up":   0.2 * jax.random.normal(keys[0], (C, Cin, 3, 3), jnp.float32),
        "b_up":   0.1 * jax.random.normal(keys[1], (C,), jnp.float32),
        "gamma1": 1.0 + 0.1 * jax.random.normal(keys[2], (C,), jnp.float32),
        "beta1":  0.1 * jax.random.normal(keys[3], (C,), jnp.float32),
        "w_c":    0.1 * jax.random.normal(keys[4], (C, C, 3, 3), jnp.float32),
        "b_c":    0.1 * jax.random.normal(keys[5], (C,), jnp.float32),
        "gamma2": 1.0 + 0.1 * jax.random.normal(keys[6], (C,), jnp.float32),
        "beta2":  0.1 * jax.random.normal(keys[7], (C,), jnp.float32),
        "se_w1":  0.2 * jax.random.normal(keys[8], (C, hidden), jnp.float32),
        "se_b1":  0.1 * jax.random.normal(keys[9], (hidden,), jnp.float32),
        "se_w2":  0.2 * jax.random.normal(keys[10], (hidden, C), jnp.float32),
        "se_b2":  0.1 * jax.random.normal(keys[11], (C,), jnp.float32),
    }
    x = jax.random.normal(keys[12], (N, Cin, H, W), jnp.float32)

    out = jax.block_until_ready(cnn_block_forward(x, params))
    ref = jax.block_until_ready(cnn_block_reference(x, params))

    assert out.shape == (N, C, H // 2, W // 2), out.shape
    err = float(jnp.max(jnp.abs(out - ref)))
    assert err < 1e-3, f"max abs error vs reference: {err}"
    # TODO(synk): BatchNorm running-stat buffer updates (training side effect) are
    # not modeled; they do not affect the forward output.
    print("KERNEL_OK")
</pallas_src>

<mosaic_0001>
module attributes {stable_mosaic.version = 11 : i64} {
  func.func @_cnn_block_kernel(%arg0: i32, %arg1: memref<256x72xf32, #tpu.memory_space<vmem>>, %arg2: memref<72x64xf32, #tpu.memory_space<vmem>>, %arg3: memref<1x64xf32, #tpu.memory_space<vmem>>, %arg4: memref<1x64xf32, #tpu.memory_space<vmem>>, %arg5: memref<1x64xf32, #tpu.memory_space<vmem>>, %arg6: memref<576x64xf32, #tpu.memory_space<vmem>>, %arg7: memref<1x64xf32, #tpu.memory_space<vmem>>, %arg8: memref<1x64xf32, #tpu.memory_space<vmem>>, %arg9: memref<1x64xf32, #tpu.memory_space<vmem>>, %arg10: memref<64x4xf32, #tpu.memory_space<vmem>>, %arg11: memref<1x4xf32, #tpu.memory_space<vmem>>, %arg12: memref<4x64xf32, #tpu.memory_space<vmem>>, %arg13: memref<1x64xf32, #tpu.memory_space<vmem>>, %arg14: memref<64x64xf32, #tpu.memory_space<vmem>>, %arg15: memref<256x64xf32, #tpu.memory_space<vmem>>, %arg16: memref<18x32x64xf32, #tpu.memory_space<vmem>>) attributes {dimension_semantics = [#tpu.dimension_semantics<arbitrary>], iteration_bounds = array<i64: 1>, scalar_prefetch = 0 : i64, scratch_operands = 2 : i64, tpu.core_type = #tpu.core_type<tc>, window_params = [{pipeline_mode = #tpu.pipeline_mode<synchronous>, transform_indices = @transform_0, window_bounds = array<i64: 256, 72>}, {pipeline_mode = #tpu.pipeline_mode<synchronous>, transform_indices = @transform_1, window_bounds = array<i64: 72, 64>}, {pipeline_mode = #tpu.pipeline_mode<synchronous>, transform_indices = @transform_2, window_bounds = array<i64: 1, 64>}, {pipeline_mode = #tpu.pipeline_mode<synchronous>, transform_indices = @transform_3, window_bounds = array<i64: 1, 64>}, {pipeline_mode = #tpu.pipeline_mode<synchronous>, transform_indices = @transform_4, window_bounds = array<i64: 1, 64>}, {pipeline_mode = #tpu.pipeline_mode<synchronous>, transform_indices = @transform_5, window_bounds = array<i64: 576, 64>}, {pipeline_mode = #tpu.pipeline_mode<synchronous>, transform_indices = @transform_6, window_bounds = array<i64: 1, 64>}, {pipeline_mode = #tpu.pipeline_mode<synchronous>, transform_indices = @transform_7, window_bounds = array<i64: 1, 64>}, {pipeline_mode = #tpu.pipeline_mode<synchronous>, transform_indices = @transform_8, window_bounds = array<i64: 1, 64>}, {pipeline_mode = #tpu.pipeline_mode<synchronous>, transform_indices = @transform_9, window_bounds = array<i64: 64, 4>}, {pipeline_mode = #tpu.pipeline_mode<synchronous>, transform_indices = @transform_10, window_bounds = array<i64: 1, 4>}, {pipeline_mode = #tpu.pipeline_mode<synchronous>, transform_indices = @transform_11, window_bounds = array<i64: 4, 64>}, {pipeline_mode = #tpu.pipeline_mode<synchronous>, transform_indices = @transform_12, window_bounds = array<i64: 1, 64>}, {pipeline_mode = #tpu.pipeline_mode<synchronous>, transform_indices = @transform_13, window_bounds = array<i64: 64, 64>}]} {
    %c0 = arith.constant 0 : index
    %c0_0 = arith.constant 0 : index
    %0 = vector.load %arg1[%c0, %c0_0] : memref<256x72xf32, #tpu.memory_space<vmem>>, vector<256x72xf32>
    %c0_1 = arith.constant 0 : index
    %c0_2 = arith.constant 0 : index
    %1 = vector.load %arg2[%c0_1, %c0_2] : memref<72x64xf32, #tpu.memory_space<vmem>>, vector<72x64xf32>
    %cst = arith.constant dense<0.000000e+00> : vector<256x64xf32>
    %2 = tpu.matmul %0, %1, %cst {dimension_numbers = #tpu.dot_dimension_numbers<[1], [0], [0], [1], [0, 0, 1, 1], [], []>} : vector<256x72xf32>, vector<72x64xf32>, vector<256x64xf32> -> vector<256x64xf32>
    %c0_3 = arith.constant 0 : index
    %c0_4 = arith.constant 0 : index
    %3 = vector.load %arg3[%c0_3, %c0_4] : memref<1x64xf32, #tpu.memory_space<vmem>>, vector<1x64xf32>
    %4 = vector.broadcast %3 : vector<1x64xf32> to vector<256x64xf32>
    %5 = arith.addf %2, %4 : vector<256x64xf32>
    %c0_5 = arith.constant 0 : index
    %c0_6 = arith.constant 0 : index
    %6 = vector.load %arg15[%c0_5, %c0_6] : memref<256x64xf32, #tpu.memory_space<vmem>>, vector<256x64xf32>
    tpu.vector_store %arg15[%c0_5, %c0_6], %5 {strides = array<i32>} : memref<256x64xf32, #tpu.memory_space<vmem>>, vector<256x64xf32>,
    %cst_7 = arith.constant dense<0.000000e+00> : vector<64xf32>
    %7 = vector.multi_reduction <add>, %5, %cst_7 [0] : vector<256x64xf32> to vector<64xf32>
    %8 = vector.shape_cast %7 : vector<64xf32> to vector<1x64xf32>
    %9 = arith.mulf %5, %5 : vector<256x64xf32>
    %cst_8 = arith.constant dense<0.000000e+00> : vector<64xf32>
    %10 = vector.multi_reduction <add>, %9, %cst_8 [0] : vector<256x64xf32> to vector<64xf32>
    %11 = vector.shape_cast %10 : vector<64xf32> to vector<1x64xf32>
    %12 = vector.extract_strided_slice %8 {offsets = [0, 0], sizes = [1, 32], strides = [1, 1]} : vector<1x64xf32> to vector<1x32xf32>
    %13 = vector.extract_strided_slice %8 {offsets = [0, 32], sizes = [1, 32], strides = [1, 1]} : vector<1x64xf32> to vector<1x32xf32>
    %14 = arith.addf %12, %13 : vector<1x32xf32>
    %15 = tpu.concatenate %14, %14 in 1 : vector<1x32xf32>, vector<1x32xf32> -> vector<1x64xf32>
    %cst_9 = arith.constant 0.001953125 : f32
    %16 = vector.broadcast %cst_9 : f32 to vector<1x64xf32>
    %17 = arith.mulf %15, %16 : vector<1x64xf32>
    %18 = vector.extract_strided_slice %11 {offsets = [0, 0], sizes = [1, 32], strides = [1, 1]} : vector<1x64xf32> to vector<1x32xf32>
    %19 = vector.extract_strided_slice %11 {offsets = [0, 32], sizes = [1, 32], strides = [1, 1]} : vector<1x64xf32> to vector<1x32xf32>
    %20 = arith.addf %18, %19 : vector<1x32xf32>
    %21 = tpu.concatenate %20, %20 in 1 : vector<1x32xf32>, vector<1x32xf32> -> vector<1x64xf32>
    %cst_10 = arith.constant 0.001953125 : f32
    %22 = vector.broadcast %cst_10 : f32 to vector<1x64xf32>
    %23 = arith.mulf %21, %22 : vector<1x64xf32>
    %24 = arith.mulf %17, %17 : vector<1x64xf32>
    %25 = arith.subf %23, %24 : vector<1x64xf32>
    %cst_11 = arith.constant 0.000000e+00 : f32
    %26 = vector.broadcast %cst_11 : f32 to vector<1x64xf32>
    %27 = arith.maximumf %25, %26 : vector<1x64xf32>
    %28 = vector.broadcast %17 : vector<1x64xf32> to vector<256x64xf32>
    %29 = arith.subf %5, %28 : vector<256x64xf32>
    %cst_12 = arith.constant 9.99999974E-6 : f32
    %30 = vector.broadcast %cst_12 : f32 to vector<1x64xf32>
    %31 = arith.addf %27, %30 : vector<1x64xf32>
    %32 = math.rsqrt %31 : vector<1x64xf32>
    %c0_13 = arith.constant 0 : index
    %c0_14 = arith.constant 0 : index
    %33 = vector.load %arg4[%c0_13, %c0_14] : memref<1x64xf32, #tpu.memory_space<vmem>>, vector<1x64xf32>
    %34 = arith.mulf %32, %33 : vector<1x64xf32>
    %35 = vector.broadcast %34 : vector<1x64xf32> to vector<256x64xf32>
    %36 = arith.mulf %29, %35 : vector<256x64xf32>
    %c0_15 = arith.constant 0 : index
    %c0_16 = arith.constant 0 : index
    %37 = vector.load %arg5[%c0_15, %c0_16] : memref<1x64xf32, #tpu.memory_space<vmem>>, vector<1x64xf32>
    %38 = vector.broadcast %37 : vector<1x64xf32> to vector<256x64xf32>
    %39 = arith.addf %36, %38 : vector<256x64xf32>
    %cst_17 = arith.constant 0.000000e+00 : f32
    %40 = vector.broadcast %cst_17 : f32 to vector<256x64xf32>
    %41 = arith.maximumf %39, %40 : vector<256x64xf32>
    %cst_18 = arith.constant 0.000000e+00 : f32
    %42 = vector.broadcast %cst_18 : f32 to vector<1x32x64xf32>
    %c0_19 = arith.constant 0 : index
    %c0_20 = arith.constant 0 : index
    %c0_21 = arith.constant 0 : index
    %43 = vector.load %arg16[%c0_19, %c0_20, %c0_21] : memref<18x32x64xf32, #tpu.memory_space<vmem>>, vector<1x32x64xf32>
    tpu.vector_store %arg16[%c0_19, %c0_20, %c0_21], %42 {strides = array<i32>} : memref<18x32x64xf32, #tpu.memory_space<vmem>>, vector<1x32x64xf32>,
    %cst_22 = arith.constant 0.000000e+00 : f32
    %44 = vector.broadcast %cst_22 : f32 to vector<1x32x64xf32>
    %c17 = arith.constant 17 : index
    %c0_23 = arith.constant 0 : index
    %c0_24 = arith.constant 0 : index
    %45 = vector.load %arg16[%c17, %c0_23, %c0_24] : memref<18x32x64xf32, #tpu.memory_space<vmem>>, vector<1x32x64xf32>
    tpu.vector_store %arg16[%c17, %c0_23, %c0_24], %44 {strides = array<i32>} : memref<18x32x64xf32, #tpu.memory_space<vmem>>, vector<1x32x64xf32>,
    %cst_25 = arith.constant 0.000000e+00 : f32
    %46 = vector.broadcast %cst_25 : f32 to vector<18x1x64xf32>
    %c0_26 = arith.constant 0 : index
    %c7 = arith.constant 7 : index
    %c0_27 = arith.constant 0 : index
    %47 = vector.load %arg16[%c0_26, %c7, %c0_27] : memref<18x32x64xf32, #tpu.memory_space<vmem>>, vector<18x1x64xf32>
    tpu.vector_store %arg16[%c0_26, %c7, %c0_27], %46 {strides = array<i32>} : memref<18x32x64xf32, #tpu.memory_space<vmem>>, vector<18x1x64xf32>,
    %cst_28 = arith.constant 0.000000e+00 : f32
    %48 = vector.broadcast %cst_28 : f32 to vector<18x1x64xf32>
    %c0_29 = arith.constant 0 : index
    %c24 = arith.constant 24 : index
    %c0_30 = arith.constant 0 : index
    %49 = vector.load %arg16[%c0_29, %c24, %c0_30] : memref<18x32x64xf32, #tpu.memory_space<vmem>>, vector<18x1x64xf32>
    tpu.vector_store %arg16[%c0_29, %c24, %c0_30], %48 {strides = array<i32>} : memref<18x32x64xf32, #tpu.memory_space<vmem>>, vector<18x1x64xf32>,
    %50 = vector.shape_cast %41 : vector<256x64xf32> to vector<16x16x64xf32>
    %c1 = arith.constant 1 : index
    %c8 = arith.constant 8 : index
    %c0_31 = arith.constant 0 : index
    %51 = vector.load %arg16[%c1, %c8, %c0_31] : memref<18x32x64xf32, #tpu.memory_space<vmem>>, vector<16x16x64xf32>
    tpu.vector_store %arg16[%c1, %c8, %c0_31], %50 {strides = array<i32>} : memref<18x32x64xf32, #tpu.memory_space<vmem>>, vector<16x16x64xf32>,
    %cst_32 = arith.constant 0.000000e+00 : f32
    %52 = vector.broadcast %cst_32 : f32 to vector<256x64xf32>
    %c0_33 = arith.constant 0 : index
    %c7_34 = arith.constant 7 : index
    %c0_35 = arith.constant 0 : index
    %53 = vector.load %arg16[%c0_33, %c7_34, %c0_35] : memref<18x32x64xf32, #tpu.memory_space<vmem>>, vector<16x16x64xf32>
    %54 = vector.shape_cast %53 : vector<16x16x64xf32> to vector<256x64xf32>
    %c0_36 = arith.constant 0 : index
    %c0_37 = arith.constant 0 : index
    %55 = vector.load %arg6[%c0_36, %c0_37] : memref<576x64xf32, #tpu.memory_space<vmem>>, vector<64x64xf32>
    %cst_38 = arith.constant dense<0.000000e+00> : vector<256x64xf32>
    %56 = tpu.matmul %54, %55, %cst_38 {dimension_numbers = #tpu.dot_dimension_numbers<[1], [0], [0], [1], [0, 0, 1, 1], [], []>} : vector<256x64xf32>, vector<64x64xf32>, vector<256x64xf32> -> vector<256x64xf32>
    %57 = arith.addf %52, %56 : vector<256x64xf32>
    %c0_39 = arith.constant 0 : index
    %c8_40 = arith.constant 8 : index
    %c0_41 = arith.constant 0 : index
    %58 = vector.load %arg16[%c0_39, %c8_40, %c0_41] : memref<18x32x64xf32, #tpu.memory_space<vmem>>, vector<16x16x64xf32>
    %59 = vector.shape_cast %58 : vector<16x16x64xf32> to vector<256x64xf32>
    %c64 = arith.constant 64 : index
    %c0_42 = arith.constant 0 : index
    %60 = vector.load %arg6[%c64, %c0_42] : memref<576x64xf32, #tpu.memory_space<vmem>>, vector<64x64xf32>
    %cst_43 = arith.constant dense<0.000000e+00> : vector<256x64xf32>
    %61 = tpu.matmul %59, %60, %cst_43 {dimension_numbers = #tpu.dot_dimension_numbers<[1], [0], [0], [1], [0, 0, 1, 1], [], []>} : vector<256x64xf32>, vector<64x64xf32>, vector<256x64xf32> -> vector<256x64xf32>
    %62 = arith.addf %57, %61 : vector<256x64xf32>
    %c0_44 = arith.constant 0 : index
    %c9 = arith.constant 9 : index
    %c0_45 = arith.constant 0 : index
    %63 = vector.load %arg16[%c0_44, %c9, %c0_45] : memref<18x32x64xf32, #tpu.memory_space<vmem>>, vector<16x16x64xf32>
    %64 = vector.shape_cast %63 : vector<16x16x64xf32> to vector<256x64xf32>
    %c128 = arith.constant 128 : index
    %c0_46 = arith.constant 0 : index
    %65 = vector.load %arg6[%c128, %c0_46] : memref<576x64xf32, #tpu.memory_space<vmem>>, vector<64x64xf32>
    %cst_47 = arith.constant dense<0.000000e+00> : vector<256x64xf32>
    %66 = tpu.matmul %64, %65, %cst_47 {dimension_numbers = #tpu.dot_dimension_numbers<[1], [0], [0], [1], [0, 0, 1, 1], [], []>} : vector<256x64xf32>, vector<64x64xf32>, vector<256x64xf32> -> vector<256x64xf32>
    %67 = arith.addf %62, %66 : vector<256x64xf32>
    %c1_48 = arith.constant 1 : index
    %c7_49 = arith.constant 7 : index
    %c0_50 = arith.constant 0 : index
    %68 = vector.load %arg16[%c1_48, %c7_49, %c0_50] : memref<18x32x64xf32, #tpu.memory_space<vmem>>, vector<16x16x64xf32>
    %69 = vector.shape_cast %68 : vector<16x16x64xf32> to vector<256x64xf32>
    %c192 = arith.constant 192 : index
    %c0_51 = arith.constant 0 : index
    %70 = vector.load %arg6[%c192, %c0_51] : memref<576x64xf32, #tpu.memory_space<vmem>>, vector<64x64xf32>
    %cst_52 = arith.constant dense<0.000000e+00> : vector<256x64xf32>
    %71 = tpu.matmul %69, %70, %cst_52 {dimension_numbers = #tpu.dot_dimension_numbers<[1], [0], [0], [1], [0, 0, 1, 1], [], []>} : vector<256x64xf32>, vector<64x64xf32>, vector<256x64xf32> -> vector<256x64xf32>
    %72 = arith.addf %67, %71 : vector<256x64xf32>
    %c1_53 = arith.constant 1 : index
    %c8_54 = arith.constant 8 : index
    %c0_55 = arith.constant 0 : index
    %73 = vector.load %arg16[%c1_53, %c8_54, %c0_55] : memref<18x32x64xf32, #tpu.memory_space<vmem>>, vector<16x16x64xf32>
    %74 = vector.shape_cast %73 : vector<16x16x64xf32> to vector<256x64xf32>
    %c256 = arith.constant 256 : index
    %c0_56 = arith.constant 0 : index
    %75 = vector.load %arg6[%c256, %c0_56] : memref<576x64xf32, #tpu.memory_space<vmem>>, vector<64x64xf32>
    %cst_57 = arith.constant dense<0.000000e+00> : vector<256x64xf32>
    %76 = tpu.matmul %74, %75, %cst_57 {dimension_numbers = #tpu.dot_dimension_numbers<[1], [0], [0], [1], [0, 0, 1, 1], [], []>} : vector<256x64xf32>, vector<64x64xf32>, vector<256x64xf32> -> vector<256x64xf32>
    %77 = arith.addf %72, %76 : vector<256x64xf32>
    %c1_58 = arith.constant 1 : index
    %c9_59 = arith.constant 9 : index
    %c0_60 = arith.constant 0 : index
    %78 = vector.load %arg16[%c1_58, %c9_59, %c0_60] : memref<18x32x64xf32, #tpu.memory_space<vmem>>, vector<16x16x64xf32>
    %79 = vector.shape_cast %78 : vector<16x16x64xf32> to vector<256x64xf32>
    %c320 = arith.constant 320 : index
    %c0_61 = arith.constant 0 : index
    %80 = vector.load %arg6[%c320, %c0_61] : memref<576x64xf32, #tpu.memory_space<vmem>>, vector<64x64xf32>
    %cst_62 = arith.constant dense<0.000000e+00> : vector<256x64xf32>
    %81 = tpu.matmul %79, %80, %cst_62 {dimension_numbers = #tpu.dot_dimension_numbers<[1], [0], [0], [1], [0, 0, 1, 1], [], []>} : vector<256x64xf32>, vector<64x64xf32>, vector<256x64xf32> -> vector<256x64xf32>
    %82 = arith.addf %77, %81 : vector<256x64xf32>
    %c2 = arith.constant 2 : index
    %c7_63 = arith.constant 7 : index
    %c0_64 = arith.constant 0 : index
    %83 = vector.load %arg16[%c2, %c7_63, %c0_64] : memref<18x32x64xf32, #tpu.memory_space<vmem>>, vector<16x16x64xf32>
    %84 = vector.shape_cast %83 : vector<16x16x64xf32> to vector<256x64xf32>
    %c384 = arith.constant 384 : index
    %c0_65 = arith.constant 0 : index
    %85 = vector.load %arg6[%c384, %c0_65] : memref<576x64xf32, #tpu.memory_space<vmem>>, vector<64x64xf32>
    %cst_66 = arith.constant dense<0.000000e+00> : vector<256x64xf32>
    %86 = tpu.matmul %84, %85, %cst_66 {dimension_numbers = #tpu.dot_dimension_numbers<[1], [0], [0], [1], [0, 0, 1, 1], [], []>} : vector<256x64xf32>, vector<64x64xf32>, vector<256x64xf32> -> vector<256x64xf32>
    %87 = arith.addf %82, %86 : vector<256x64xf32>
    %c2_67 = arith.constant 2 : index
    %c8_68 = arith.constant 8 : index
    %c0_69 = arith.constant 0 : index
    %88 = vector.load %arg16[%c2_67, %c8_68, %c0_69] : memref<18x32x64xf32, #tpu.memory_space<vmem>>, vector<16x16x64xf32>
    %89 = vector.shape_cast %88 : vector<16x16x64xf32> to vector<256x64xf32>
    %c448 = arith.constant 448 : index
    %c0_70 = arith.constant 0 : index
    %90 = vector.load %arg6[%c448, %c0_70] : memref<576x64xf32, #tpu.memory_space<vmem>>, vector<64x64xf32>
    %cst_71 = arith.constant dense<0.000000e+00> : vector<256x64xf32>
    %91 = tpu.matmul %89, %90, %cst_71 {dimension_numbers = #tpu.dot_dimension_numbers<[1], [0], [0], [1], [0, 0, 1, 1], [], []>} : vector<256x64xf32>, vector<64x64xf32>, vector<256x64xf32> -> vector<256x64xf32>
    %92 = arith.addf %87, %91 : vector<256x64xf32>
    %c2_72 = arith.constant 2 : index
    %c9_73 = arith.constant 9 : index
    %c0_74 = arith.constant 0 : index
    %93 = vector.load %arg16[%c2_72, %c9_73, %c0_74] : memref<18x32x64xf32, #tpu.memory_space<vmem>>, vector<16x16x64xf32>
    %94 = vector.shape_cast %93 : vector<16x16x64xf32> to vector<256x64xf32>
    %c512 = arith.constant 512 : index
    %c0_75 = arith.constant 0 : index
    %95 = vector.load %arg6[%c512, %c0_75] : memref<576x64xf32, #tpu.memory_space<vmem>>, vector<64x64xf32>
    %cst_76 = arith.constant dense<0.000000e+00> : vector<256x64xf32>
    %96 = tpu.matmul %94, %95, %cst_76 {dimension_numbers = #tpu.dot_dimension_numbers<[1], [0], [0], [1], [0, 0, 1, 1], [], []>} : vector<256x64xf32>, vector<64x64xf32>, vector<256x64xf32> -> vector<256x64xf32>
    %97 = arith.addf %92, %96 : vector<256x64xf32>
    %c0_77 = arith.constant 0 : index
    %c0_78 = arith.constant 0 : index
    %98 = vector.load %arg7[%c0_77, %c0_78] : memref<1x64xf32, #tpu.memory_space<vmem>>, vector<1x64xf32>
    %99 = vector.broadcast %98 : vector<1x64xf32> to vector<256x64xf32>
    %100 = arith.addf %97, %99 : vector<256x64xf32>
    %cst_79 = arith.constant dense<0.000000e+00> : vector<64xf32>
    %101 = vector.multi_reduction <add>, %100, %cst_79 [0] : vector<256x64xf32> to vector<64xf32>
    %102 = vector.shape_cast %101 : vector<64xf32> to vector<1x64xf32>
    %103 = arith.mulf %100, %100 : vector<256x64xf32>
    %cst_80 = arith.constant dense<0.000000e+00> : vector<64xf32>
    %104 = vector.multi_reduction <add>, %103, %cst_80 [0] : vector<256x64xf32> to vector<64xf32>
    %105 = vector.shape_cast %104 : vector<64xf32> to vector<1x64xf32>
    %106 = vector.extract_strided_slice %102 {offsets = [0, 0], sizes = [1, 32], strides = [1, 1]} : vector<1x64xf32> to vector<1x32xf32>
    %107 = vector.extract_strided_slice %102 {offsets = [0, 32], sizes = [1, 32], strides = [1, 1]} : vector<1x64xf32> to vector<1x32xf32>
    %108 = arith.addf %106, %107 : vector<1x32xf32>
    %109 = tpu.concatenate %108, %108 in 1 : vector<1x32xf32>, vector<1x32xf32> -> vector<1x64xf32>
    %cst_81 = arith.constant 0.001953125 : f32
    %110 = vector.broadcast %cst_81 : f32 to vector<1x64xf32>
    %111 = arith.mulf %109, %110 : vector<1x64xf32>
    %112 = vector.extract_strided_slice %105 {offsets = [0, 0], sizes = [1, 32], strides = [1, 1]} : vector<1x64xf32> to vector<1x32xf32>
    %113 = vector.extract_strided_slice %105 {offsets = [0, 32], sizes = [1, 32], strides = [1, 1]} : vector<1x64xf32> to vector<1x32xf32>
    %114 = arith.addf %112, %113 : vector<1x32xf32>
    %115 = tpu.concatenate %114, %114 in 1 : vector<1x32xf32>, vector<1x32xf32> -> vector<1x64xf32>
    %cst_82 = arith.constant 0.001953125 : f32
    %116 = vector.broadcast %cst_82 : f32 to vector<1x64xf32>
    %117 = arith.mulf %115, %116 : vector<1x64xf32>
    %118 = arith.mulf %111, %111 : vector<1x64xf32>
    %119 = arith.subf %117, %118 : vector<1x64xf32>
    %cst_83 = arith.constant 0.000000e+00 : f32
    %120 = vector.broadcast %cst_83 : f32 to vector<1x64xf32>
    %121 = arith.maximumf %119, %120 : vector<1x64xf32>
    %122 = vector.broadcast %111 : vector<1x64xf32> to vector<256x64xf32>
    %123 = arith.subf %100, %122 : vector<256x64xf32>
    %cst_84 = arith.constant 9.99999974E-6 : f32
    %124 = vector.broadcast %cst_84 : f32 to vector<1x64xf32>
    %125 = arith.addf %121, %124 : vector<1x64xf32>
    %126 = math.rsqrt %125 : vector<1x64xf32>
    %c0_85 = arith.constant 0 : index
    %c0_86 = arith.constant 0 : index
    %127 = vector.load %arg8[%c0_85, %c0_86] : memref<1x64xf32, #tpu.memory_space<vmem>>, vector<1x64xf32>
    %128 = arith.mulf %126, %127 : vector<1x64xf32>
    %129 = vector.broadcast %128 : vector<1x64xf32> to vector<256x64xf32>
    %130 = arith.mulf %123, %129 : vector<256x64xf32>
    %c0_87 = arith.constant 0 : index
    %c0_88 = arith.constant 0 : index
    %131 = vector.load %arg9[%c0_87, %c0_88] : memref<1x64xf32, #tpu.memory_space<vmem>>, vector<1x64xf32>
    %132 = vector.broadcast %131 : vector<1x64xf32> to vector<256x64xf32>
    %133 = arith.addf %130, %132 : vector<256x64xf32>
    %c0_89 = arith.constant 0 : index
    %c0_90 = arith.constant 0 : index
    %134 = vector.load %arg15[%c0_89, %c0_90] : memref<256x64xf32, #tpu.memory_space<vmem>>, vector<256x64xf32>
    %135 = arith.addf %134, %133 : vector<256x64xf32>
    %cst_91 = arith.constant 0.000000e+00 : f32
    %136 = vector.broadcast %cst_91 : f32 to vector<256x64xf32>
    %137 = arith.maximumf %135, %136 : vector<256x64xf32>
    %c0_92 = arith.constant 0 : index
    %c0_93 = arith.constant 0 : index
    %138 = vector.load %arg15[%c0_92, %c0_93] : memref<256x64xf32, #tpu.memory_space<vmem>>, vector<256x64xf32>
    tpu.vector_store %arg15[%c0_92, %c0_93], %137 {strides = array<i32>} : memref<256x64xf32, #tpu.memory_space<vmem>>, vector<256x64xf32>,
    %cst_94 = arith.constant dense<0.000000e+00> : vector<64xf32>
    %139 = vector.multi_reduction <add>, %137, %cst_94 [0] : vector<256x64xf32> to vector<64xf32>
    %140 = vector.shape_cast %139 : vector<64xf32> to vector<1x64xf32>
    %cst_95 = arith.constant 3.906250e-03 : f32
    %141 = vector.broadcast %cst_95 : f32 to vector<1x64xf32>
    %142 = arith.mulf %140, %141 : vector<1x64xf32>
    %c0_96 = arith.constant 0 : index
    %c0_97 = arith.constant 0 : index
    %143 = vector.load %arg10[%c0_96, %c0_97] : memref<64x4xf32, #tpu.memory_space<vmem>>, vector<64x4xf32>
    %cst_98 = arith.constant dense<0.000000e+00> : vector<1x4xf32>
    %144 = tpu.matmul %142, %143, %cst_98 {dimension_numbers = #tpu.dot_dimension_numbers<[1], [0], [0], [1], [0, 0, 1, 1], [], []>} : vector<1x64xf32>, vector<64x4xf32>, vector<1x4xf32> -> vector<1x4xf32>
    %c0_99 = arith.constant 0 : index
    %c0_100 = arith.constant 0 : index
    %145 = vector.load %arg11[%c0_99, %c0_100] : memref<1x4xf32, #tpu.memory_space<vmem>>, vector<1x4xf32>
    %146 = arith.addf %144, %145 : vector<1x4xf32>
    %cst_101 = arith.constant 0.000000e+00 : f32
    %147 = vector.broadcast %cst_101 : f32 to vector<1x4xf32>
    %148 = arith.maximumf %146, %147 : vector<1x4xf32>
    %c0_102 = arith.constant 0 : index
    %c0_103 = arith.constant 0 : index
    %149 = vector.load %arg12[%c0_102, %c0_103] : memref<4x64xf32, #tpu.memory_space<vmem>>, vector<4x64xf32>
    %cst_104 = arith.constant dense<0.000000e+00> : vector<1x64xf32>
    %150 = tpu.matmul %148, %149, %cst_104 {dimension_numbers = #tpu.dot_dimension_numbers<[1], [0], [0], [1], [0, 0, 1, 1], [], []>} : vector<1x4xf32>, vector<4x64xf32>, vector<1x64xf32> -> vector<1x64xf32>
    %c0_105 = arith.constant 0 : index
    %c0_106 = arith.constant 0 : index
    %151 = vector.load %arg13[%c0_105, %c0_106] : memref<1x64xf32, #tpu.memory_space<vmem>>, vector<1x64xf32>
    %152 = arith.addf %150, %151 : vector<1x64xf32>
    %cst_107 = arith.constant 0.000000e+00 : f32
    %153 = vector.broadcast %cst_107 : f32 to vector<1x64xf32>
    %154 = arith.subf %153, %152 : vector<1x64xf32>
    %155 = math.exp %154 : vector<1x64xf32>
    %cst_108 = arith.constant 1.000000e+00 : f32
    %156 = vector.broadcast %cst_108 : f32 to vector<1x64xf32>
    %157 = arith.addf %156, %155 : vector<1x64xf32>
    %cst_109 = arith.constant 1.000000e+00 : f32
    %158 = vector.broadcast %cst_109 : f32 to vector<1x64xf32>
    %159 = arith.divf %158, %157 : vector<1x64xf32>
    %c0_110 = arith.constant 0 : index
    %c0_111 = arith.constant 0 : index
    %160 = vector.load %arg15[%c0_110, %c0_111] : memref<256x64xf32, #tpu.memory_space<vmem>>, vector<256x64xf32>
    %161 = vector.shape_cast %160 : vector<256x64xf32> to vector<8x32x64xf32>
    %162 = vector.extract_strided_slice %161 {offsets = [0, 0, 0], sizes = [8, 16, 64], strides = [1, 1, 1]} : vector<8x32x64xf32> to vector<8x16x64xf32>
    %163 = vector.extract_strided_slice %161 {offsets = [0, 16, 0], sizes = [8, 16, 64], strides = [1, 1, 1]} : vector<8x32x64xf32> to vector<8x16x64xf32>
    %164 = arith.maximumf %162, %163 : vector<8x16x64xf32>
    %165 = vector.shape_cast %164 : vector<8x16x64xf32> to vector<64x2x64xf32>
    %166 = vector.extract_strided_slice %165 {offsets = [0, 0, 0], sizes = [64, 1, 64], strides = [1, 1, 1]} : vector<64x2x64xf32> to vector<64x1x64xf32>
    %167 = vector.extract_strided_slice %165 {offsets = [0, 1, 0], sizes = [64, 1, 64], strides = [1, 1, 1]} : vector<64x2x64xf32> to vector<64x1x64xf32>
    %168 = arith.maximumf %166, %167 : vector<64x1x64xf32>
    %169 = vector.shape_cast %168 : vector<64x1x64xf32> to vector<64x64xf32>
    %170 = vector.broadcast %159 : vector<1x64xf32> to vector<64x64xf32>
    %171 = arith.mulf %169, %170 : vector<64x64xf32>
    %c0_112 = arith.constant 0 : index
    %c0_113 = arith.constant 0 : index
    %172 = vector.load %arg14[%c0_112, %c0_113] : memref<64x64xf32, #tpu.memory_space<vmem>>, vector<64x64xf32>
    tpu.vector_store %arg14[%c0_112, %c0_113], %171 {strides = array<i32>} : memref<64x64xf32, #tpu.memory_space<vmem>>, vector<64x64xf32>,
    return
  }
  func.func @transform_0(%arg0: i32) -> (i32, i32) {
    %c0_i32 = arith.constant 0 : i32
    %c0_i32_0 = arith.constant 0 : i32
    %c0_i32_1 = arith.constant 0 : i32
    return %c0_i32, %c0_i32_0 : i32, i32
  }
  func.func @transform_1(%arg0: i32) -> (i32, i32) {
    %c0_i32 = arith.constant 0 : i32
    %c0_i32_0 = arith.constant 0 : i32
    %c0_i32_1 = arith.constant 0 : i32
    return %c0_i32, %c0_i32_0 : i32, i32
  }
  func.func @transform_2(%arg0: i32) -> (i32, i32) {
    %c0_i32 = arith.constant 0 : i32
    %c0_i32_0 = arith.constant 0 : i32
    %c0_i32_1 = arith.constant 0 : i32
    return %c0_i32, %c0_i32_0 : i32, i32
  }
  func.func @transform_3(%arg0: i32) -> (i32, i32) {
    %c0_i32 = arith.constant 0 : i32
    %c0_i32_0 = arith.constant 0 : i32
    %c0_i32_1 = arith.constant 0 : i32
    return %c0_i32, %c0_i32_0 : i32, i32
  }
  func.func @transform_4(%arg0: i32) -> (i32, i32) {
    %c0_i32 = arith.constant 0 : i32
    %c0_i32_0 = arith.constant 0 : i32
    %c0_i32_1 = arith.constant 0 : i32
    return %c0_i32, %c0_i32_0 : i32, i32
  }
  func.func @transform_5(%arg0: i32) -> (i32, i32) {
    %c0_i32 = arith.constant 0 : i32
    %c0_i32_0 = arith.constant 0 : i32
    %c0_i32_1 = arith.constant 0 : i32
    return %c0_i32, %c0_i32_0 : i32, i32
  }
  func.func @transform_6(%arg0: i32) -> (i32, i32) {
    %c0_i32 = arith.constant 0 : i32
    %c0_i32_0 = arith.constant 0 : i32
    %c0_i32_1 = arith.constant 0 : i32
    return %c0_i32, %c0_i32_0 : i32, i32
  }
  func.func @transform_7(%arg0: i32) -> (i32, i32) {
    %c0_i32 = arith.constant 0 : i32
    %c0_i32_0 = arith.constant 0 : i32
    %c0_i32_1 = arith.constant 0 : i32
    return %c0_i32, %c0_i32_0 : i32, i32
  }
  func.func @transform_8(%arg0: i32) -> (i32, i32) {
    %c0_i32 = arith.constant 0 : i32
    %c0_i32_0 = arith.constant 0 : i32
    %c0_i32_1 = arith.constant 0 : i32
    return %c0_i32, %c0_i32_0 : i32, i32
  }
  func.func @transform_9(%arg0: i32) -> (i32, i32) {
    %c0_i32 = arith.constant 0 : i32
    %c0_i32_0 = arith.constant 0 : i32
    %c0_i32_1 = arith.constant 0 : i32
    return %c0_i32, %c0_i32_0 : i32, i32
  }
  func.func @transform_10(%arg0: i32) -> (i32, i32) {
    %c0_i32 = arith.constant 0 : i32
    %c0_i32_0 = arith.constant 0 : i32
    %c0_i32_1 = arith.constant 0 : i32
    return %c0_i32, %c0_i32_0 : i32, i32
  }
  func.func @transform_11(%arg0: i32) -> (i32, i32) {
    %c0_i32 = arith.constant 0 : i32
    %c0_i32_0 = arith.constant 0 : i32
    %c0_i32_1 = arith.constant 0 : i32
    return %c0_i32, %c0_i32_0 : i32, i32
  }
  func.func @transform_12(%arg0: i32) -> (i32, i32) {
    %c0_i32 = arith.constant 0 : i32
    %c0_i32_0 = arith.constant 0 : i32
    %c0_i32_1 = arith.constant 0 : i32
    return %c0_i32, %c0_i32_0 : i32, i32
  }
  func.func @transform_13(%arg0: i32) -> (i32, i32) {
    %c0_i32 = arith.constant 0 : i32
    %c0_i32_0 = arith.constant 0 : i32
    %c0_i32_1 = arith.constant 0 : i32
    return %c0_i32, %c0_i32_0 : i32, i32
  }
}

</mosaic_0001>

<llo_original>
// kernel: tpu_custom_call.1
$region0: #{tpu_custom_call.1}
  #allocation0 [shape = 'u32[]', space=smem, size = 0x4, offset = 0x4, fixed_abs, tag = 'smem constant byte address 0x4 - core index']
  #allocation1 [shape = 'u32[72,128]{1,0:T(1,128)}', space=vmem, size = 0x9000, scoped, tag = 'internal scratch']
  #allocation2 [shape = 'f32[256,64]{1,0:T(8,128)}', space=vmem, size = 0x20000, scoped, tag = 'scratch operand']
  #allocation3 [shape = 'f32[18,32,64]{2,1,0:T(8,128)}', space=vmem, size = 0x48000, scoped, tag = 'scratch operand']
  %s0 = inlined_call_operand.vmem [shape: f32[256,72], index: 0, kind: input, shape index: {}]
  %s1 = inlined_call_operand.vmem [shape: f32[72,64], index: 1, kind: input, shape index: {}]
  %s2 = inlined_call_operand.vmem [shape: f32[1,64], index: 2, kind: input, shape index: {}]
  %s3 = inlined_call_operand.vmem [shape: f32[1,64], index: 3, kind: input, shape index: {}]
  %s4 = inlined_call_operand.vmem [shape: f32[1,64], index: 4, kind: input, shape index: {}]
  %s5 = inlined_call_operand.vmem [shape: f32[576,64], index: 5, kind: input, shape index: {}]
  %s6 = inlined_call_operand.vmem [shape: f32[1,64], index: 6, kind: input, shape index: {}]
  %s7 = inlined_call_operand.vmem [shape: f32[1,64], index: 7, kind: input, shape index: {}]
  %s8 = inlined_call_operand.vmem [shape: f32[1,64], index: 8, kind: input, shape index: {}]
  %s9 = inlined_call_operand.vmem [shape: f32[64,4], index: 9, kind: input, shape index: {}]
  %s10 = inlined_call_operand.vmem [shape: f32[1,4], index: 10, kind: input, shape index: {}]
  %s11 = inlined_call_operand.vmem [shape: f32[4,64], index: 11, kind: input, shape index: {}]
  %s12 = inlined_call_operand.vmem [shape: f32[1,64], index: 12, kind: input, shape index: {}]
  %s13 = inlined_call_operand.hbm [shape: f32[64,64], index: 13, kind: output, shape index: {}]
  %s14 = sld [smem:[#allocation0]]
  $region62: #{tpu_custom_call.1} parent=0
    _
  %s16 = ssub.s32 1, %s14
  %s17 = scalar_select 0, %s16, %s14
  $region1: #{tpu_custom_call.1} parent=0
    #allocation4 [shape = 'u8[32768]{0}', space=vmem, size = 0x8000, scoped, tag = 'output window, operand 0, single buffered']
    #allocation5 [shape = 's32[1]{0}', space=sflag, size = 0x4, scoped, tag = 'scoped memory for tpu_custom_call.1']
    %18 = vsyncpa [#allocation5], 0
    // Predicated region
    $region2: #{tpu_custom_call.1} parent=1 // pred_check
      _
    $region3: #{tpu_custom_call.1} parent=1 // pred_check_branch
      %20 = sbr.rel (0) target = $region5
    $region4: #{tpu_custom_call.1} parent=1 // pred_region
      _
    $region5: #{tpu_custom_call.1} parent=1 // pred_fallthru
      _
    // Predicated region
    $region6: #{tpu_custom_call.1} parent=1 // pred_check
      _
    $region7: #{tpu_custom_call.1} parent=1 // pred_check_branch
      %22 = sbr.rel (0) target = $region9
    $region8: #{tpu_custom_call.1} parent=1 // pred_region
      _
    $region9: #{tpu_custom_call.1} parent=1 // pred_fallthru
      _
    // Predicated region
    $region10: #{tpu_custom_call.1} parent=1 // pred_check
      _
    $region11: #{tpu_custom_call.1} parent=1 // pred_check_branch
      %24 = sbr.rel (0) target = $region13
    $region12: #{tpu_custom_call.1} parent=1 // pred_region
      _
    $region13: #{tpu_custom_call.1} parent=1 // pred_fallthru
      _
    // Predicated region
    $region14: #{tpu_custom_call.1} parent=1 // pred_check
      _
    $region15: #{tpu_custom_call.1} parent=1 // pred_check_branch
      %26 = sbr.rel (0) target = $region17
    $region16: #{tpu_custom_call.1} parent=1 // pred_region
      _
    $region17: #{tpu_custom_call.1} parent=1 // pred_fallthru
      _
    // Predicated region
    $region18: #{tpu_custom_call.1} parent=1 // pred_check
      _
    $region19: #{tpu_custom_call.1} parent=1 // pred_check_branch
      %28 = sbr.rel (0) target = $region21
    $region20: #{tpu_custom_call.1} parent=1 // pred_region
      _
    $region21: #{tpu_custom_call.1} parent=1 // pred_fallthru
      _
    // Predicated region
    $region22: #{tpu_custom_call.1} parent=1 // pred_check
      _
    $region23: #{tpu_custom_call.1} parent=1 // pred_check_branch
      %30 = sbr.rel (0) target = $region25
    $region24: #{tpu_custom_call.1} parent=1 // pred_region
      _
    $region25: #{tpu_custom_call.1} parent=1 // pred_fallthru
      _
    // Predicated region
    $region26: #{tpu_custom_call.1} parent=1 // pred_check
      _
    $region27: #{tpu_custom_call.1} parent=1 // pred_check_branch
      %32 = sbr.rel (0) target = $region29
    $region28: #{tpu_custom_call.1} parent=1 // pred_region
      _
    $region29: #{tpu_custom_call.1} parent=1 // pred_fallthru
      _
    // Predicated region
    $region30: #{tpu_custom_call.1} parent=1 // pred_check
      _
    $region31: #{tpu_custom_call.1} parent=1 // pred_check_branch
      %34 = sbr.rel (0) target = $region33
    $region32: #{tpu_custom_call.1} parent=1 // pred_region
      _
    $region33: #{tpu_custom_call.1} parent=1 // pred_fallthru
      _
    // Predicated region
    $region34: #{tpu_custom_call.1} parent=1 // pred_check
      _
    $region35: #{tpu_custom_call.1} parent=1 // pred_check_branch
      %36 = sbr.rel (0) target = $region37
    $region36: #{tpu_custom_call.1} parent=1 // pred_region
      _
    $region37: #{tpu_custom_call.1} parent=1 // pred_fallthru
      _
    // Predicated region
    $region38: #{tpu_custom_call.1} parent=1 // pred_check
      _
    $region39: #{tpu_custom_call.1} parent=1 // pred_check_branch
      %38 = sbr.rel (0) target = $region41
    $region40: #{tpu_custom_call.1} parent=1 // pred_region
      _
    $region41: #{tpu_custom_call.1} parent=1 // pred_fallthru
      _
    // Predicated region
    $region42: #{tpu_custom_call.1} parent=1 // pred_check
      _
    $region43: #{tpu_custom_call.1} parent=1 // pred_check_branch
      %40 = sbr.rel (0) target = $region45
    $region44: #{tpu_custom_call.1} parent=1 // pred_region
      _
    $region45: #{tpu_custom_call.1} parent=1 // pred_fallthru
      _
    // Predicated region
    $region46: #{tpu_custom_call.1} parent=1 // pred_check
      _
    $region47: #{tpu_custom_call.1} parent=1 // pred_check_branch
      %42 = sbr.rel (0) target = $region49
    $region48: #{tpu_custom_call.1} parent=1 // pred_region
      _
    $region49: #{tpu_custom_call.1} parent=1 // pred_fallthru
      _
    // Predicated region
    $region50: #{tpu_custom_call.1} parent=1 // pred_check
      _
    $region51: #{tpu_custom_call.1} parent=1 // pred_check_branch
      %44 = sbr.rel (0) target = $region53
    $region52: #{tpu_custom_call.1} parent=1 // pred_region
      _
    $region53: #{tpu_custom_call.1} parent=1 // pred_fallthru
      _
    %v45 = vld [vmem:[%s0] sm:$0xff]
    %v46 = vld [vmem:[%s0 + $0x8] sm:$0xff]
    %v47 = vld [vmem:[%s0 + $0x10] sm:$0xff]
    %v48 = vld [vmem:[%s0 + $0x18] sm:$0xff]
    %v49 = vld [vmem:[%s0 + $0x20] sm:$0xff]
    %v50 = vld [vmem:[%s0 + $0x28] sm:$0xff]
    %v51 = vld [vmem:[%s0 + $0x30] sm:$0xff]
    %v52 = vld [vmem:[%s0 + $0x38] sm:$0xff]
    %v53 = vld [vmem:[%s0 + $0x40] sm:$0xff]
    %v54 = vld [vmem:[%s0 + $0x48] sm:$0xff]
    %v55 = vld [vmem:[%s0 + $0x50] sm:$0xff]
    %v56 = vld [vmem:[%s0 + $0x58] sm:$0xff]
    %v57 = vld [vmem:[%s0 + $0x60] sm:$0xff]
    %v58 = vld [vmem:[%s0 + $0x68] sm:$0xff]
    %v59 = vld [vmem:[%s0 + $0x70] sm:$0xff]
    %v60 = vld [vmem:[%s0 + $0x78] sm:$0xff]
    %v61 = vld [vmem:[%s0 + $0x80] sm:$0xff]
    %v62 = vld [vmem:[%s0 + $0x88] sm:$0xff]
    %v63 = vld [vmem:[%s0 + $0x90] sm:$0xff]
    %v64 = vld [vmem:[%s0 + $0x98] sm:$0xff]
    %v65 = vld [vmem:[%s0 + $0xa0] sm:$0xff]
    %v66 = vld [vmem:[%s0 + $0xa8] sm:$0xff]
    %v67 = vld [vmem:[%s0 + $0xb0] sm:$0xff]
    %v68 = vld [vmem:[%s0 + $0xb8] sm:$0xff]
    %v69 = vld [vmem:[%s0 + $0xc0] sm:$0xff]
    %v70 = vld [vmem:[%s0 + $0xc8] sm:$0xff]
    %v71 = vld [vmem:[%s0 + $0xd0] sm:$0xff]
    %v72 = vld [vmem:[%s0 + $0xd8] sm:$0xff]
    %v73 = vld [vmem:[%s0 + $0xe0] sm:$0xff]
    %v74 = vld [vmem:[%s0 + $0xe8] sm:$0xff]
    %v75 = vld [vmem:[%s0 + $0xf0] sm:$0xff]
    %v76 = vld [vmem:[%s0 + $0xf8] sm:$0xff]
    %v77 = vld [vmem:[%s1] sm:$0xff]
    %v78 = vld [vmem:[%s1 + $0x8] sm:$0xff]
    %v79 = vld [vmem:[%s1 + $0x10] sm:$0xff]
    %v80 = vld [vmem:[%s1 + $0x18] sm:$0xff]
    %v81 = vld [vmem:[%s1 + $0x20] sm:$0xff]
    %v82 = vld [vmem:[%s1 + $0x28] sm:$0xff]
    %v83 = vld [vmem:[%s1 + $0x30] sm:$0xff]
    %v84 = vld [vmem:[%s1 + $0x38] sm:$0xff]
    %v85 = vld [vmem:[%s1 + $0x40] sm:$0xff]
    %v86 = vld [vmem:[%s2] sm:$0x1]
    %v88 = vperm.slane %v86, 0
    %vm90 = vcmask 588800
    %v92 = vsel %vm90, %v45, 0
    %v95 = vsel %vm90, %v46, 0
    %v98 = vsel %vm90, %v47, 0
    %v101 = vsel %vm90, %v48, 0
    %v104 = vsel %vm90, %v49, 0
    %v107 = vsel %vm90, %v50, 0
    %v110 = vsel %vm90, %v51, 0
    %v113 = vsel %vm90, %v52, 0
    %v116 = vsel %vm90, %v53, 0
    %v119 = vsel %vm90, %v54, 0
    %v122 = vsel %vm90, %v55, 0
    %v125 = vsel %vm90, %v56, 0
    %v128 = vsel %vm90, %v57, 0
    %v131 = vsel %vm90, %v58, 0
    %v134 = vsel %vm90, %v59, 0
    %v137 = vsel %vm90, %v60, 0
    %v140 = vsel %vm90, %v61, 0
    %v143 = vsel %vm90, %v62, 0
    %v146 = vsel %vm90, %v63, 0
    %v149 = vsel %vm90, %v64, 0
    %v152 = vsel %vm90, %v65, 0
    %v155 = vsel %vm90, %v66, 0
    %v158 = vsel %vm90, %v67, 0
    %v161 = vsel %vm90, %v68, 0
    %v164 = vsel %vm90, %v69, 0
    %v167 = vsel %vm90, %v70, 0
    %v170 = vsel %vm90, %v71, 0
    %v173 = vsel %vm90, %v72, 0
    %v176 = vsel %vm90, %v73, 0
    %v179 = vsel %vm90, %v74, 0
    %v182 = vsel %vm90, %v75, 0
    %v185 = vsel %vm90, %v76, 0
    %187 = vmatpush.msra.mxu0 0.0
    %188 = vmatpush.msra.mxu0 0.0
    %189 = vmatpush.msra.mxu0 0.0
    %190 = vmatpush.msra.mxu0 0.0
    %191 = vmatpush.msra.mxu0 0.0
    %192 = vmatpush.msra.mxu0 0.0
    %193 = vmatpush.msra.mxu0 0.0
    %194 = vmatpush.msra.mxu0 %v85
    %195 = vmatpush.msra.mxu0 %v84
    %196 = vmatpush.msra.mxu0 %v83
    %197 = vmatpush.msra.mxu0 %v82
    %198 = vmatpush.msra.mxu0 %v81
    %199 = vmatpush.msra.mxu0 %v80
    %200 = vmatpush.msra.mxu0 %v79
    %201 = vmatpush.msra.mxu0 %v78
    %202 = vmatpush.msra.mxu0 %v77
    %203 = vmatmul.f32.gmra.mxu0 %v92
    %v204 = vpop.f32.mrf.mxu0
    %v205 = vadd.f32 %v88, %v204
    %206 = vmatmul.f32.gmra.mxu0 %v95
    %v207 = vpop.f32.mrf.mxu0
    %v208 = vadd.f32 %v88, %v207
    %209 = vmatmul.f32.gmra.mxu0 %v98
    %v210 = vpop.f32.mrf.mxu0
    %v211 = vadd.f32 %v88, %v210
    %212 = vmatmul.f32.gmra.mxu0 %v101
    %v213 = vpop.f32.mrf.mxu0
    %v214 = vadd.f32 %v88, %v213
    %215 = vmatmul.f32.gmra.mxu0 %v104
    %v216 = vpop.f32.mrf.mxu0
    %v217 = vadd.f32 %v88, %v216
    %218 = vmatmul.f32.gmra.mxu0 %v107
    %v219 = vpop.f32.mrf.mxu0
    %v220 = vadd.f32 %v88, %v219
    %221 = vmatmul.f32.gmra.mxu0 %v110
    %v222 = vpop.f32.mrf.mxu0
    %v223 = vadd.f32 %v88, %v222
    %224 = vmatmul.f32.gmra.mxu0 %v113
    %v225 = vpop.f32.mrf.mxu0
    %v226 = vadd.f32 %v88, %v225
    %227 = vmatmul.f32.gmra.mxu0 %v116
    %v228 = vpop.f32.mrf.mxu0
    %v229 = vadd.f32 %v88, %v228
    %230 = vmatmul.f32.gmra.mxu0 %v119
    %v231 = vpop.f32.mrf.mxu0
    %v232 = vadd.f32 %v88, %v231
    %233 = vmatmul.f32.gmra.mxu0 %v122
    %v234 = vpop.f32.mrf.mxu0
    %v235 = vadd.f32 %v88, %v234
    %236 = vmatmul.f32.gmra.mxu0 %v125
    %v237 = vpop.f32.mrf.mxu0
    %v238 = vadd.f32 %v88, %v237
    %239 = vmatmul.f32.gmra.mxu0 %v128
    %v240 = vpop.f32.mrf.mxu0
    %v241 = vadd.f32 %v88, %v240
    %242 = vmatmul.f32.gmra.mxu0 %v131
    %v243 = vpop.f32.mrf.mxu0
    %v244 = vadd.f32 %v88, %v243
    %245 = vmatmul.f32.gmra.mxu0 %v134
    %v246 = vpop.f32.mrf.mxu0
    %v247 = vadd.f32 %v88, %v246
    %248 = vmatmul.f32.gmra.mxu0 %v137
    %v249 = vpop.f32.mrf.mxu0
    %v250 = vadd.f32 %v88, %v249
    %251 = vmatmul.f32.gmra.mxu0 %v140
    %v252 = vpop.f32.mrf.mxu0
    %v253 = vadd.f32 %v88, %v252
    %254 = vmatmul.f32.gmra.mxu0 %v143
    %v255 = vpop.f32.mrf.mxu0
    %v256 = vadd.f32 %v88, %v255
    %257 = vmatmul.f32.gmra.mxu0 %v146
    %v258 = vpop.f32.mrf.mxu0
    %v259 = vadd.f32 %v88, %v258
    %260 = vmatmul.f32.gmra.mxu0 %v149
    %v261 = vpop.f32.mrf.mxu0
    %v262 = vadd.f32 %v88, %v261
    %263 = vmatmul.f32.gmra.mxu0 %v152
    %v264 = vpop.f32.mrf.mxu0
    %v265 = vadd.f32 %v88, %v264
    %266 = vmatmul.f32.gmra.mxu0 %v155
    %v267 = vpop.f32.mrf.mxu0
    %v268 = vadd.f32 %v88, %v267
    %269 = vmatmul.f32.gmra.mxu0 %v158
    %v270 = vpop.f32.mrf.mxu0
    %v271 = vadd.f32 %v88, %v270
    %272 = vmatmul.f32.gmra.mxu0 %v161
    %v273 = vpop.f32.mrf.mxu0
    %v274 = vadd.f32 %v88, %v273
    %275 = vmatmul.f32.gmra.mxu0 %v164
    %v276 = vpop.f32.mrf.mxu0
    %v277 = vadd.f32 %v88, %v276
    %278 = vmatmul.f32.gmra.mxu0 %v167
    %v279 = vpop.f32.mrf.mxu0
    %v280 = vadd.f32 %v88, %v279
    %281 = vmatmul.f32.gmra.mxu0 %v170
    %v282 = vpop.f32.mrf.mxu0
    %v283 = vadd.f32 %v88, %v282
    %284 = vmatmul.f32.gmra.mxu0 %v173
    %v285 = vpop.f32.mrf.mxu0
    %v286 = vadd.f32 %v88, %v285
    %287 = vmatmul.f32.gmra.mxu0 %v176
    %v288 = vpop.f32.mrf.mxu0
    %v289 = vadd.f32 %v88, %v288
    %290 = vmatmul.f32.gmra.mxu0 %v179
    %v291 = vpop.f32.mrf.mxu0
    %v292 = vadd.f32 %v88, %v291
    %293 = vmatmul.f32.gmra.mxu0 %v182
    %v294 = vpop.f32.mrf.mxu0
    %v295 = vadd.f32 %v88, %v294
    %296 = vmatmul.f32.gmra.mxu0 %v185
    %v297 = vpop.f32.mrf.mxu0
    %v298 = vadd.f32 %v88, %v297
    %299 = vdwg.mxu0
    %vm300 = vcmask 523264
    %301 = vst.msk [vmem:[#allocation2] sm:$0xff] %vm300, %v205
    %302 = vst.msk [vmem:[#allocation2 + $0x8] sm:$0xff] %vm300, %v208
    %303 = vst.msk [vmem:[#allocation2 + $0x10] sm:$0xff] %vm300, %v211
    %304 = vst.msk [vmem:[#allocation2 + $0x18] sm:$0xff] %vm300, %v214
    %305 = vst.msk [vmem:[#allocation2 + $0x20] sm:$0xff] %vm300, %v217
    %306 = vst.msk [vmem:[#allocation2 + $0x28] sm:$0xff] %vm300, %v220
    %307 = vst.msk [vmem:[#allocation2 + $0x30] sm:$0xff] %vm300, %v223
    %308 = vst.msk [vmem:[#allocation2 + $0x38] sm:$0xff] %vm300, %v226
    %309 = vst.msk [vmem:[#allocation2 + $0x40] sm:$0xff] %vm300, %v229
    %310 = vst.msk [vmem:[#allocation2 + $0x48] sm:$0xff] %vm300, %v232
    %311 = vst.msk [vmem:[#allocation2 + $0x50] sm:$0xff] %vm300, %v235
    %312 = vst.msk [vmem:[#allocation2 + $0x58] sm:$0xff] %vm300, %v238
    %313 = vst.msk [vmem:[#allocation2 + $0x60] sm:$0xff] %vm300, %v241
    %314 = vst.msk [vmem:[#allocation2 + $0x68] sm:$0xff] %vm300, %v244
    %315 = vst.msk [vmem:[#allocation2 + $0x70] sm:$0xff] %vm300, %v247
    %316 = vst.msk [vmem:[#allocation2 + $0x78] sm:$0xff] %vm300, %v250
    %317 = vst.msk [vmem:[#allocation2 + $0x80] sm:$0xff] %vm300, %v253
    %318 = vst.msk [vmem:[#allocation2 + $0x88] sm:$0xff] %vm300, %v256
    %319 = vst.msk [vmem:[#allocation2 + $0x90] sm:$0xff] %vm300, %v259
    %320 = vst.msk [vmem:[#allocation2 + $0x98] sm:$0xff] %vm300, %v262
    %321 = vst.msk [vmem:[#allocation2 + $0xa0] sm:$0xff] %vm300, %v265
    %322 = vst.msk [vmem:[#allocation2 + $0xa8] sm:$0xff] %vm300, %v268
    %323 = vst.msk [vmem:[#allocation2 + $0xb0] sm:$0xff] %vm300, %v271
    %324 = vst.msk [vmem:[#allocation2 + $0xb8] sm:$0xff] %vm300, %v274
    %325 = vst.msk [vmem:[#allocation2 + $0xc0] sm:$0xff] %vm300, %v277
    %326 = vst.msk [vmem:[#allocation2 + $0xc8] sm:$0xff] %vm300, %v280
    %327 = vst.msk [vmem:[#allocation2 + $0xd0] sm:$0xff] %vm300, %v283
    %328 = vst.msk [vmem:[#allocation2 + $0xd8] sm:$0xff] %vm300, %v286
    %329 = vst.msk [vmem:[#allocation2 + $0xe0] sm:$0xff] %vm300, %v289
    %330 = vst.msk [vmem:[#allocation2 + $0xe8] sm:$0xff] %vm300, %v292
    %331 = vst.msk [vmem:[#allocation2 + $0xf0] sm:$0xff] %vm300, %v295
    %332 = vst.msk [vmem:[#allocation2 + $0xf8] sm:$0xff] %vm300, %v298
    %v333 = vsel %vm300, %v205, 0.0
    %v334 = vsel %vm300, %v208, 0.0
    %v335 = vadd.f32 %v333, %v334
    %v336 = vsel %vm300, %v211, 0.0
    %v337 = vadd.f32 %v335, %v336
    %v338 = vsel %vm300, %v214, 0.0
    %v339 = vadd.f32 %v337, %v338
    %v340 = vsel %vm300, %v217, 0.0
    %v341 = vadd.f32 %v339, %v340
    %v342 = vsel %vm300, %v220, 0.0
    %v343 = vadd.f32 %v341, %v342
    %v344 = vsel %vm300, %v223, 0.0
    %v345 = vadd.f32 %v343, %v344
    %v346 = vsel %vm300, %v226, 0.0
    %v347 = vadd.f32 %v345, %v346
    %v348 = vsel %vm300, %v229, 0.0
    %v349 = vadd.f32 %v347, %v348
    %v350 = vsel %vm300, %v232, 0.0
    %v351 = vadd.f32 %v349, %v350
    %v352 = vsel %vm300, %v235, 0.0
    %v353 = vadd.f32 %v351, %v352
    %v354 = vsel %vm300, %v238, 0.0
    %v355 = vadd.f32 %v353, %v354
    %v356 = vsel %vm300, %v241, 0.0
    %v357 = vadd.f32 %v355, %v356
    %v358 = vsel %vm300, %v244, 0.0
    %v359 = vadd.f32 %v357, %v358
    %v360 = vsel %vm300, %v247, 0.0
    %v361 = vadd.f32 %v359, %v360
    %v362 = vsel %vm300, %v250, 0.0
    %v363 = vadd.f32 %v361, %v362
    %v364 = vsel %vm300, %v253, 0.0
    %v365 = vadd.f32 %v363, %v364
    %v366 = vsel %vm300, %v256, 0.0
    %v367 = vadd.f32 %v365, %v366
    %v368 = vsel %vm300, %v259, 0.0
    %v369 = vadd.f32 %v367, %v368
    %v370 = vsel %vm300, %v262, 0.0
    %v371 = vadd.f32 %v369, %v370
    %v372 = vsel %vm300, %v265, 0.0
    %v373 = vadd.f32 %v371, %v372
    %v374 = vsel %vm300, %v268, 0.0
    %v375 = vadd.f32 %v373, %v374
    %v376 = vsel %vm300, %v271, 0.0
    %v377 = vadd.f32 %v375, %v376
    %v378 = vsel %vm300, %v274, 0.0
    %v379 = vadd.f32 %v377, %v378
    %v380 = vsel %vm300, %v277, 0.0
    %v381 = vadd.f32 %v379, %v380
    %v382 = vsel %vm300, %v280, 0.0
    %v383 = vadd.f32 %v381, %v382
    %v384 = vsel %vm300, %v283, 0.0
    %v385 = vadd.f32 %v383, %v384
    %v386 = vsel %vm300, %v286, 0.0
    %v387 = vadd.f32 %v385, %v386
    %v388 = vsel %vm300, %v289, 0.0
    %v389 = vadd.f32 %v387, %v388
    %v390 = vsel %vm300, %v292, 0.0
    %v391 = vadd.f32 %v389, %v390
    %v392 = vsel %vm300, %v295, 0.0
    %v393 = vadd.f32 %v391, %v392
    %v394 = vsel %vm300, %v298, 0.0
    %v395 = vadd.f32 %v393, %v394
    %v396 = vrot.slane %v395, 4
    %v397 = vadd.f32 %v395, %v396
    %v398 = vrot.slane %v397, 2
    %v399 = vadd.f32 %v397, %v398
    %v400 = vrot.slane %v399, 1
    %v401 = vadd.f32 %v399, %v400
    %v402 = vmul.f32 %v205, %v205
    %v403 = vmul.f32 %v208, %v208
    %v404 = vmul.f32 %v211, %v211
    %v405 = vmul.f32 %v214, %v214
    %v406 = vmul.f32 %v217, %v217
    %v407 = vmul.f32 %v220, %v220
    %v408 = vmul.f32 %v223, %v223
    %v409 = vmul.f32 %v226, %v226
    %v410 = vmul.f32 %v229, %v229
    %v411 = vmul.f32 %v232, %v232
    %v412 = vmul.f32 %v235, %v235
    %v413 = vmul.f32 %v238, %v238
    %v414 = vmul.f32 %v241, %v241
    %v415 = vmul.f32 %v244, %v244
    %v416 = vmul.f32 %v247, %v247
    %v417 = vmul.f32 %v250, %v250
    %v418 = vmul.f32 %v253, %v253
    %v419 = vmul.f32 %v256, %v256
    %v420 = vmul.f32 %v259, %v259
    %v421 = vmul.f32 %v262, %v262
    %v422 = vmul.f32 %v265, %v265
    %v423 = vmul.f32 %v268, %v268
    %v424 = vmul.f32 %v271, %v271
    %v425 = vmul.f32 %v274, %v274
    %v426 = vmul.f32 %v277, %v277
    %v427 = vmul.f32 %v280, %v280
    %v428 = vmul.f32 %v283, %v283
    %v429 = vmul.f32 %v286, %v286
    %v430 = vmul.f32 %v289, %v289
    %v431 = vmul.f32 %v292, %v292
    %v432 = vmul.f32 %v295, %v295
    %v433 = vmul.f32 %v298, %v298
    %v434 = vsel %vm300, %v402, 0.0
    %v435 = vsel %vm300, %v403, 0.0
    %v436 = vadd.f32 %v434, %v435
    %v437 = vsel %vm300, %v404, 0.0
    %v438 = vadd.f32 %v436, %v437
    %v439 = vsel %vm300, %v405, 0.0
    %v440 = vadd.f32 %v438, %v439
    %v441 = vsel %vm300, %v406, 0.0
    %v442 = vadd.f32 %v440, %v441
    %v443 = vsel %vm300, %v407, 0.0
    %v444 = vadd.f32 %v442, %v443
    %v445 = vsel %vm300, %v408, 0.0
    %v446 = vadd.f32 %v444, %v445
    %v447 = vsel %vm300, %v409, 0.0
    %v448 = vadd.f32 %v446, %v447
    %v449 = vsel %vm300, %v410, 0.0
    %v450 = vadd.f32 %v448, %v449
    %v451 = vsel %vm300, %v411, 0.0
    %v452 = vadd.f32 %v450, %v451
    %v453 = vsel %vm300, %v412, 0.0
    %v454 = vadd.f32 %v452, %v453
    %v455 = vsel %vm300, %v413, 0.0
    %v456 = vadd.f32 %v454, %v455
    %v457 = vsel %vm300, %v414, 0.0
    %v458 = vadd.f32 %v456, %v457
    %v459 = vsel %vm300, %v415, 0.0
    %v460 = vadd.f32 %v458, %v459
    %v461 = vsel %vm300, %v416, 0.0
    %v462 = vadd.f32 %v460, %v461
    %v463 = vsel %vm300, %v417, 0.0
    %v464 = vadd.f32 %v462, %v463
    %v465 = vsel %vm300, %v418, 0.0
    %v466 = vadd.f32 %v464, %v465
    %v467 = vsel %vm300, %v419, 0.0
    %v468 = vadd.f32 %v466, %v467
    %v469 = vsel %vm300, %v420, 0.0
    %v470 = vadd.f32 %v468, %v469
    %v471 = vsel %vm300, %v421, 0.0
    %v472 = vadd.f32 %v470, %v471
    %v473 = vsel %vm300, %v422, 0.0
    %v474 = vadd.f32 %v472, %v473
    %v475 = vsel %vm300, %v423, 0.0
    %v476 = vadd.f32 %v474, %v475
    %v477 = vsel %vm300, %v424, 0.0
    %v478 = vadd.f32 %v476, %v477
    %v479 = vsel %vm300, %v425, 0.0
    %v480 = vadd.f32 %v478, %v479
    %v481 = vsel %vm300, %v426, 0.0
    %v482 = vadd.f32 %v480, %v481
    %v483 = vsel %vm300, %v427, 0.0
    %v484 = vadd.f32 %v482, %v483
    %v485 = vsel %vm300, %v428, 0.0
    %v486 = vadd.f32 %v484, %v485
    %v487 = vsel %vm300, %v429, 0.0
    %v488 = vadd.f32 %v486, %v487
    %v489 = vsel %vm300, %v430, 0.0
    %v490 = vadd.f32 %v488, %v489
    %v491 = vsel %vm300, %v431, 0.0
    %v492 = vadd.f32 %v490, %v491
    %v493 = vsel %vm300, %v432, 0.0
    %v494 = vadd.f32 %v492, %v493
    %v495 = vsel %vm300, %v433, 0.0
    %v496 = vadd.f32 %v494, %v495
    %v497 = vrot.slane %v496, 4
    %v498 = vadd.f32 %v496, %v497
    %v499 = vrot.slane %v498, 2
    %v500 = vadd.f32 %v498, %v499
    %v501 = vrot.slane %v500, 1
    %v502 = vadd.f32 %v500, %v501
    %504 = vrot.lane.b32.xlu0 %v401, 96
    %v505 = vpop.permute.xlu0 %504
    %v507 = vadd.f32 %v401, %v505
    %509 = vrot.lane.b32.xlu0 %v507, 32
    %v510 = vpop.permute.xlu0 %509
    %vm512 = vcmask 261120
    %v513 = vsel %vm512, %v507, %v510
    %v514 = vmul.f32 %v513, 0.001953125
    %516 = vrot.lane.b32.xlu0 %v502, 96
    %v517 = vpop.permute.xlu0 %516
    %v519 = vadd.f32 %v502, %v517
    %521 = vrot.lane.b32.xlu0 %v519, 32
    %v522 = vpop.permute.xlu0 %521
    %v524 = vsel %vm512, %v519, %v522
    %v525 = vmul.f32 %v524, 0.001953125
    %v526 = vmul.f32 %v514, %v514
    %v527 = vsub.f32 %v525, %v526
    %v528 = vmax.f32 %v527, 0.0
    %v529 = vperm.slane %v514, 0
    %v530 = vsub.f32 %v205, %v529
    %v531 = vsub.f32 %v208, %v529
    %v532 = vsub.f32 %v211, %v529
    %v533 = vsub.f32 %v214, %v529
    %v534 = vsub.f32 %v217, %v529
    %v535 = vsub.f32 %v220, %v529
    %v536 = vsub.f32 %v223, %v529
    %v537 = vsub.f32 %v226, %v529
    %v538 = vsub.f32 %v229, %v529
    %v539 = vsub.f32 %v232, %v529
    %v540 = vsub.f32 %v235, %v529
    %v541 = vsub.f32 %v238, %v529
    %v542 = vsub.f32 %v241, %v529
    %v543 = vsub.f32 %v244, %v529
    %v544 = vsub.f32 %v247, %v529
    %v545 = vsub.f32 %v250, %v529
    %v546 = vsub.f32 %v253, %v529
    %v547 = vsub.f32 %v256, %v529
    %v548 = vsub.f32 %v259, %v529
    %v549 = vsub.f32 %v262, %v529
    %v550 = vsub.f32 %v265, %v529
    %v551 = vsub.f32 %v268, %v529
    %v552 = vsub.f32 %v271, %v529
    %v553 = vsub.f32 %v274, %v529
    %v554 = vsub.f32 %v277, %v529
    %v555 = vsub.f32 %v280, %v529
    %v556 = vsub.f32 %v283, %v529
    %v557 = vsub.f32 %v286, %v529
    %v558 = vsub.f32 %v289, %v529
    %v559 = vsub.f32 %v292, %v529
    %v560 = vsub.f32 %v295, %v529
    %v561 = vsub.f32 %v298, %v529
    %v562 = vadd.f32 %v528, 1e-05
    %v563 = vrsqrt.pop %v562
    %v564 = vmul.f32 %v563, %v562
    %v565 = vmul.f32 %v564, %v563
    %v566 = vmul.f32 0.5, %v565
    %v567 = vsub.f32 1.5, %v566
    %v568 = vmul.f32 %v563, %v567
    %vm569 = vweird.f32 %v562
    %vm570 = vweird.f32 %v563
    %vm571 = vmor %vm569, %vm570
    %v572 = vsel %vm571, %v563, %v568
    %v573 = vld [vmem:[%s3] sm:$0x1]
    %v574 = vmul.f32 %v572, %v573
    %v575 = vperm.slane %v574, 0
    %v576 = vmul.f32 %v530, %v575
    %v577 = vmul.f32 %v531, %v575
    %v578 = vmul.f32 %v532, %v575
    %v579 = vmul.f32 %v533, %v575
    %v580 = vmul.f32 %v534, %v575
    %v581 = vmul.f32 %v535, %v575
    %v582 = vmul.f32 %v536, %v575
    %v583 = vmul.f32 %v537, %v575
    %v584 = vmul.f32 %v538, %v575
    %v585 = vmul.f32 %v539, %v575
    %v586 = vmul.f32 %v540, %v575
    %v587 = vmul.f32 %v541, %v575
    %v588 = vmul.f32 %v542, %v575
    %v589 = vmul.f32 %v543, %v575
    %v590 = vmul.f32 %v544, %v575
    %v591 = vmul.f32 %v545, %v575
    %v592 = vmul.f32 %v546, %v575
    %v593 = vmul.f32 %v547, %v575
    %v594 = vmul.f32 %v548, %v575
    %v595 = vmul.f32 %v549, %v575
    %v596 = vmul.f32 %v550, %v575
    %v597 = vmul.f32 %v551, %v575
    %v598 = vmul.f32 %v552, %v575
    %v599 = vmul.f32 %v553, %v575
    %v600 = vmul.f32 %v554, %v575
    %v601 = vmul.f32 %v555, %v575
    %v602 = vmul.f32 %v556, %v575
    %v603 = vmul.f32 %v557, %v575
    %v604 = vmul.f32 %v558, %v575
    %v605 = vmul.f32 %v559, %v575
    %v606 = vmul.f32 %v560, %v575
    %v607 = vmul.f32 %v561, %v575
    %v608 = vld [vmem:[%s4] sm:$0x1]
    %v610 = vperm.slane %v608, 0
    %v612 = vadd.f32 %v576, %v610
    %v613 = vadd.f32 %v577, %v610
    %v614 = vadd.f32 %v578, %v610
    %v615 = vadd.f32 %v579, %v610
    %v616 = vadd.f32 %v580, %v610
    %v617 = vadd.f32 %v581, %v610
    %v618 = vadd.f32 %v582, %v610
    %v619 = vadd.f32 %v583, %v610
    %v620 = vadd.f32 %v584, %v610
    %v621 = vadd.f32 %v585, %v610
    %v622 = vadd.f32 %v586, %v610
    %v623 = vadd.f32 %v587, %v610
    %v624 = vadd.f32 %v588, %v610
    %v625 = vadd.f32 %v589, %v610
    %v626 = vadd.f32 %v590, %v610
    %v627 = vadd.f32 %v591, %v610
    %v628 = vadd.f32 %v592, %v610
    %v629 = vadd.f32 %v593, %v610
    %v630 = vadd.f32 %v594, %v610
    %v631 = vadd.f32 %v595, %v610
    %v632 = vadd.f32 %v596, %v610
    %v633 = vadd.f32 %v597, %v610
    %v634 = vadd.f32 %v598, %v610
    %v635 = vadd.f32 %v599, %v610
    %v636 = vadd.f32 %v600, %v610
    %v637 = vadd.f32 %v601, %v610
    %v638 = vadd.f32 %v602, %v610
    %v639 = vadd.f32 %v603, %v610
    %v640 = vadd.f32 %v604, %v610
    %v641 = vadd.f32 %v605, %v610
    %v642 = vadd.f32 %v606, %v610
    %v643 = vadd.f32 %v607, %v610
    %v644 = vmax.f32 %v612, 0.0
    %v645 = vmax.f32 %v613, 0.0
    %v646 = vmax.f32 %v614, 0.0
    %v647 = vmax.f32 %v615, 0.0
    %v648 = vmax.f32 %v616, 0.0
    %v649 = vmax.f32 %v617, 0.0
    %v650 = vmax.f32 %v618, 0.0
    %v651 = vmax.f32 %v619, 0.0
    %v652 = vmax.f32 %v620, 0.0
    %v653 = vmax.f32 %v621, 0.0
    %v654 = vmax.f32 %v622, 0.0
    %v655 = vmax.f32 %v623, 0.0
    %v656 = vmax.f32 %v624, 0.0
    %v657 = vmax.f32 %v625, 0.0
    %v658 = vmax.f32 %v626, 0.0
    %v659 = vmax.f32 %v627, 0.0
    %v660 = vmax.f32 %v628, 0.0
    %v661 = vmax.f32 %v629, 0.0
    %v662 = vmax.f32 %v630, 0.0
    %v663 = vmax.f32 %v631, 0.0
    %v664 = vmax.f32 %v632, 0.0
    %v665 = vmax.f32 %v633, 0.0
    %v666 = vmax.f32 %v634, 0.0
    %v667 = vmax.f32 %v635, 0.0
    %v668 = vmax.f32 %v636, 0.0
    %v669 = vmax.f32 %v637, 0.0
    %v670 = vmax.f32 %v638, 0.0
    %v671 = vmax.f32 %v639, 0.0
    %v672 = vmax.f32 %v640, 0.0
    %v673 = vmax.f32 %v641, 0.0
    %v674 = vmax.f32 %v642, 0.0
    %v675 = vmax.f32 %v643, 0.0
    %676 = vst.msk [vmem:[#allocation3] sm:$0xff] %vm300, 0.0
    %677 = vst.msk [vmem:[#allocation3 + $0x8] sm:$0xff] %vm300, 0.0
    %678 = vst.msk [vmem:[#allocation3 + $0x10] sm:$0xff] %vm300, 0.0
    %679 = vst.msk [vmem:[#allocation3 + $0x18] sm:$0xff] %vm300, 0.0
    %s680 = scalar_lea.vmem [#allocation3], 544
    %681 = vst.msk [vmem:[%s680] sm:$0xff] %vm300, 0.0
    %682 = vst.msk [vmem:[%s680 + $0x8] sm:$0xff] %vm300, 0.0
    %683 = vst.msk [vmem:[%s680 + $0x10] sm:$0xff] %vm300, 0.0
    %684 = vst.msk [vmem:[%s680 + $0x18] sm:$0xff] %vm300, 0.0
    %vm685 = vcmask 516096
    %686 = vst.msk [vmem:[#allocation3 + $0x7] sm:$0x1] %vm685, 0.0
    %687 = vst.msk [vmem:[#allocation3 + $0x27] sm:$0x1] %vm685, 0.0
    %688 = vst.msk [vmem:[#allocation3 + $0x47] sm:$0x1] %vm685, 0.0
    %689 = vst.msk [vmem:[#allocation3 + $0x67] sm:$0x1] %vm685, 0.0
    %690 = vst.msk [vmem:[#allocation3 + $0x87] sm:$0x1] %vm685, 0.0
    %691 = vst.msk [vmem:[#allocation3 + $0xa7] sm:$0x1] %vm685, 0.0
    %692 = vst.msk [vmem:[#allocation3 + $0xc7] sm:$0x1] %vm685, 0.0
    %693 = vst.msk [vmem:[#allocation3 + $0xe7] sm:$0x1] %vm685, 0.0
    %694 = vst.msk [vmem:[#allocation3 + $0x107] sm:$0x1] %vm685, 0.0
    %695 = vst.msk [vmem:[#allocation3 + $0x127] sm:$0x1] %vm685, 0.0
    %696 = vst.msk [vmem:[#allocation3 + $0x147] sm:$0x1] %vm685, 0.0
    %697 = vst.msk [vmem:[#allocation3 + $0x167] sm:$0x1] %vm685, 0.0
    %698 = vst.msk [vmem:[#allocation3 + $0x187] sm:$0x1] %vm685, 0.0
    %699 = vst.msk [vmem:[#allocation3 + $0x1a7] sm:$0x1] %vm685, 0.0
    %700 = vst.msk [vmem:[#allocation3 + $0x1c7] sm:$0x1] %vm685, 0.0
    %701 = vst.msk [vmem:[#allocation3 + $0x1e7] sm:$0x1] %vm685, 0.0
    %702 = vst.msk [vmem:[#allocation3 + $0x207] sm:$0x1] %vm685, 0.0
    %703 = vst.msk [vmem:[#allocation3 + $0x227] sm:$0x1] %vm685, 0.0
    %704 = vst.msk [vmem:[#allocation3 + $0x18] sm:$0x1] %vm685, 0.0
    %705 = vst.msk [vmem:[#allocation3 + $0x38] sm:$0x1] %vm685, 0.0
    %706 = vst.msk [vmem:[#allocation3 + $0x58] sm:$0x1] %vm685, 0.0
    %707 = vst.msk [vmem:[#allocation3 + $0x78] sm:$0x1] %vm685, 0.0
    %708 = vst.msk [vmem:[#allocation3 + $0x98] sm:$0x1] %vm685, 0.0
    %709 = vst.msk [vmem:[#allocation3 + $0xb8] sm:$0x1] %vm685, 0.0
    %710 = vst.msk [vmem:[#allocation3 + $0xd8] sm:$0x1] %vm685, 0.0
    %711 = vst.msk [vmem:[#allocation3 + $0xf8] sm:$0x1] %vm685, 0.0
    %712 = vst.msk [vmem:[#allocation3 + $0x118] sm:$0x1] %vm685, 0.0
    %713 = vst.msk [vmem:[#allocation3 + $0x138] sm:$0x1] %vm685, 0.0
    %714 = vst.msk [vmem:[#allocation3 + $0x158] sm:$0x1] %vm685, 0.0
    %715 = vst.msk [vmem:[#allocation3 + $0x178] sm:$0x1] %vm685, 0.0
    %716 = vst.msk [vmem:[#allocation3 + $0x198] sm:$0x1] %vm685, 0.0
    %717 = vst.msk [vmem:[#allocation3 + $0x1b8] sm:$0x1] %vm685, 0.0
    %718 = vst.msk [vmem:[#allocation3 + $0x1d8] sm:$0x1] %vm685, 0.0
    %719 = vst.msk [vmem:[#allocation3 + $0x1f8] sm:$0x1] %vm685, 0.0
    %720 = vst.msk [vmem:[#allocation3 + $0x218] sm:$0x1] %vm685, 0.0
    %721 = vst.msk [vmem:[#allocation3 + $0x238] sm:$0x1] %vm685, 0.0
    %s722 = scalar_lea.vmem [#allocation3], 32
    %723 = vst.msk [vmem:[%s722 + $0x8] sm:$0xff] %vm300, %v644
    %724 = vst.msk [vmem:[%s722 + $0x10] sm:$0xff] %vm300, %v645
    %725 = vst.msk [vmem:[%s722 + $0x28] sm:$0xff] %vm300, %v646
    %726 = vst.msk [vmem:[%s722 + $0x30] sm:$0xff] %vm300, %v647
    %727 = vst.msk [vmem:[%s722 + $0x48] sm:$0xff] %vm300, %v648
    %728 = vst.msk [vmem:[%s722 + $0x50] sm:$0xff] %vm300, %v649
    %729 = vst.msk [vmem:[%s722 + $0x68] sm:$0xff] %vm300, %v650
    %730 = vst.msk [vmem:[%s722 + $0x70] sm:$0xff] %vm300, %v651
    %731 = vst.msk [vmem:[%s722 + $0x88] sm:$0xff] %vm300, %v652
    %732 = vst.msk [vmem:[%s722 + $0x90] sm:$0xff] %vm300, %v653
    %733 = vst.msk [vmem:[%s722 + $0xa8] sm:$0xff] %vm300, %v654
    %734 = vst.msk [vmem:[%s722 + $0xb0] sm:$0xff] %vm300, %v655
    %735 = vst.msk [vmem:[%s722 + $0xc8] sm:$0xff] %vm300, %v656
    %736 = vst.msk [vmem:[%s722 + $0xd0] sm:$0xff] %vm300, %v657
    %737 = vst.msk [vmem:[%s722 + $0xe8] sm:$0xff] %vm300, %v658
    %738 = vst.msk [vmem:[%s722 + $0xf0] sm:$0xff] %vm300, %v659
    %739 = vst.msk [vmem:[%s722 + $0x108] sm:$0xff] %vm300, %v660
    %740 = vst.msk [vmem:[%s722 + $0x110] sm:$0xff] %vm300, %v661
    %741 = vst.msk [vmem:[%s722 + $0x128] sm:$0xff] %vm300, %v662
    %742 = vst.msk [vmem:[%s722 + $0x130] sm:$0xff] %vm300, %v663
    %743 = vst.msk [vmem:[%s722 + $0x148] sm:$0xff] %vm300, %v664
    %744 = vst.msk [vmem:[%s722 + $0x150] sm:$0xff] %vm300, %v665
    %745 = vst.msk [vmem:[%s722 + $0x168] sm:$0xff] %vm300, %v666
    %746 = vst.msk [vmem:[%s722 + $0x170] sm:$0xff] %vm300, %v667
    %747 = vst.msk [vmem:[%s722 + $0x188] sm:$0xff] %vm300, %v668
    %748 = vst.msk [vmem:[%s722 + $0x190] sm:$0xff] %vm300, %v669
    %749 = vst.msk [vmem:[%s722 + $0x1a8] sm:$0xff] %vm300, %v670
    %750 = vst.msk [vmem:[%s722 + $0x1b0] sm:$0xff] %vm300, %v671
    %751 = vst.msk [vmem:[%s722 + $0x1c8] sm:$0xff] %vm300, %v672
    %752 = vst.msk [vmem:[%s722 + $0x1d0] sm:$0xff] %vm300, %v673
    %753 = vst.msk [vmem:[%s722 + $0x1e8] sm:$0xff] %vm300, %v674
    %754 = vst.msk [vmem:[%s722 + $0x1f0] sm:$0xff] %vm300, %v675
    %v755 = vld [vmem:[#allocation3 + $0x7] sm:$0xff]
    %v756 = vld [vmem:[#allocation3 + $0xf] sm:$0xff]
    %v757 = vld [vmem:[#allocation3 + $0x27] sm:$0xff]
    %v758 = vld [vmem:[#allocation3 + $0x2f] sm:$0xff]
    %v759 = vld [vmem:[#allocation3 + $0x47] sm:$0xff]
    %v760 = vld [vmem:[#allocation3 + $0x4f] sm:$0xff]
    %v761 = vld [vmem:[#allocation3 + $0x67] sm:$0xff]
    %v762 = vld [vmem:[#allocation3 + $0x6f] sm:$0xff]
    %v763 = vld [vmem:[#allocation3 + $0x87] sm:$0xff]
    %v764 = vld [vmem:[#allocation3 + $0x8f] sm:$0xff]
    %v765 = vld [vmem:[#allocation3 + $0xa7] sm:$0xff]
    %v766 = vld [vmem:[#allocation3 + $0xaf] sm:$0xff]
    %v767 = vld [vmem:[#allocation3 + $0xc7] sm:$0xff]
    %v768 = vld [vmem:[#allocation3 + $0xcf] sm:$0xff]
    %v769 = vld [vmem:[#allocation3 + $0xe7] sm:$0xff]
    %v770 = vld [vmem:[#allocation3 + $0xef] sm:$0xff]
    %v771 = vld [vmem:[#allocation3 + $0x107] sm:$0xff]
    %v772 = vld [vmem:[#allocation3 + $0x10f] sm:$0xff]
    %v773 = vld [vmem:[#allocation3 + $0x127] sm:$0xff]
    %v774 = vld [vmem:[#allocation3 + $0x12f] sm:$0xff]
    %v775 = vld [vmem:[#allocation3 + $0x147] sm:$0xff]
    %v776 = vld [vmem:[#allocation3 + $0x14f] sm:$0xff]
    %v777 = vld [vmem:[#allocation3 + $0x167] sm:$0xff]
    %v778 = vld [vmem:[#allocation3 + $0x16f] sm:$0xff]
    %v779 = vld [vmem:[#allocation3 + $0x187] sm:$0xff]
    %v780 = vld [vmem:[#allocation3 + $0x18f] sm:$0xff]
    %v781 = vld [vmem:[#allocation3 + $0x1a7] sm:$0xff]
    %v782 = vld [vmem:[#allocation3 + $0x1af] sm:$0xff]
    %v783 = vld [vmem:[#allocation3 + $0x1c7] sm:$0xff]
    %v784 = vld [vmem:[#allocation3 + $0x1cf] sm:$0xff]
    %v785 = vld [vmem:[#allocation3 + $0x1e7] sm:$0xff]
    %v786 = vld [vmem:[#allocation3 + $0x1ef] sm:$0xff]
    %v787 = vld [vmem:[%s5] sm:$0xff]
    %v788 = vld [vmem:[%s5 + $0x8] sm:$0xff]
    %v789 = vld [vmem:[%s5 + $0x10] sm:$0xff]
    %v790 = vld [vmem:[%s5 + $0x18] sm:$0xff]
    %v791 = vld [vmem:[%s5 + $0x20] sm:$0xff]
    %v792 = vld [vmem:[%s5 + $0x28] sm:$0xff]
    %v793 = vld [vmem:[%s5 + $0x30] sm:$0xff]
    %v794 = vld [vmem:[%s5 + $0x38] sm:$0xff]
    %v795 = vld [vmem:[#allocation3 + $0x8] sm:$0xff]
    %v796 = vld [vmem:[#allocation3 + $0x10] sm:$0xff]
    %v797 = vld [vmem:[#allocation3 + $0x28] sm:$0xff]
    %v798 = vld [vmem:[#allocation3 + $0x30] sm:$0xff]
    %v799 = vld [vmem:[#allocation3 + $0x48] sm:$0xff]
    %v800 = vld [vmem:[#allocation3 + $0x50] sm:$0xff]
    %v801 = vld [vmem:[#allocation3 + $0x68] sm:$0xff]
    %v802 = vld [vmem:[#allocation3 + $0x70] sm:$0xff]
    %v803 = vld [vmem:[#allocation3 + $0x88] sm:$0xff]
    %v804 = vld [vmem:[#allocation3 + $0x90] sm:$0xff]
    %v805 = vld [vmem:[#allocation3 + $0xa8] sm:$0xff]
    %v806 = vld [vmem:[#allocation3 + $0xb0] sm:$0xff]
    %v807 = vld [vmem:[#allocation3 + $0xc8] sm:$0xff]
    %v808 = vld [vmem:[#allocation3 + $0xd0] sm:$0xff]
    %v809 = vld [vmem:[#allocation3 + $0xe8] sm:$0xff]
    %v810 = vld [vmem:[#allocation3 + $0xf0] sm:$0xff]
    %v811 = vld [vmem:[#allocation3 + $0x108] sm:$0xff]
    %v812 = vld [vmem:[#allocation3 + $0x110] sm:$0xff]
    %v813 = vld [vmem:[#allocation3 + $0x128] sm:$0xff]
    %v814 = vld [vmem:[#allocation3 + $0x130] sm:$0xff]
    %v815 = vld [vmem:[#allocation3 + $0x148] sm:$0xff]
    %v816 = vld [vmem:[#allocation3 + $0x150] sm:$0xff]
    %v817 = vld [vmem:[#allocation3 + $0x168] sm:$0xff]
    %v818 = vld [vmem:[#allocation3 + $0x170] sm:$0xff]
    %v819 = vld [vmem:[#allocation3 + $0x188] sm:$0xff]
    %v820 = vld [vmem:[#allocation3 + $0x190] sm:$0xff]
    %v821 = vld [vmem:[#allocation3 + $0x1a8] sm:$0xff]
    %v822 = vld [vmem:[#allocation3 + $0x1b0] sm:$0xff]
    %v823 = vld [vmem:[#allocation3 + $0x1c8] sm:$0xff]
    %v824 = vld [vmem:[#allocation3 + $0x1d0] sm:$0xff]
    %v825 = vld [vmem:[#allocation3 + $0x1e8] sm:$0xff]
    %v826 = vld [vmem:[#allocation3 + $0x1f0] sm:$0xff]
    %v827 = vld [vmem:[%s5 + $0x40] sm:$0xff]
    %v828 = vld [vmem:[%s5 + $0x48] sm:$0xff]
    %v829 = vld [vmem:[%s5 + $0x50] sm:$0xff]
    %v830 = vld [vmem:[%s5 + $0x58] sm:$0xff]
    %v831 = vld [vmem:[%s5 + $0x60] sm:$0xff]
    %v832 = vld [vmem:[%s5 + $0x68] sm:$0xff]
    %v833 = vld [vmem:[%s5 + $0x70] sm:$0xff]
    %v834 = vld [vmem:[%s5 + $0x78] sm:$0xff]
    %v836 = vsel %vm300, %v795, 0
    %v839 = vsel %vm300, %v796, 0
    %v842 = vsel %vm300, %v797, 0
    %v845 = vsel %vm300, %v798, 0
    %v848 = vsel %vm300, %v799, 0
    %v851 = vsel %vm300, %v800, 0
    %v854 = vsel %vm300, %v801, 0
    %v857 = vsel %vm300, %v802, 0
    %v860 = vsel %vm300, %v803, 0
    %v863 = vsel %vm300, %v804, 0
    %v866 = vsel %vm300, %v805, 0
    %v869 = vsel %vm300, %v806, 0
    %v872 = vsel %vm300, %v807, 0
    %v875 = vsel %vm300, %v808, 0
    %v878 = vsel %vm300, %v809, 0
    %v881 = vsel %vm300, %v810, 0
    %v884 = vsel %vm300, %v811, 0
    %v887 = vsel %vm300, %v812, 0
    %v890 = vsel %vm300, %v813, 0
    %v893 = vsel %vm300, %v814, 0
    %v896 = vsel %vm300, %v815, 0
    %v899 = vsel %vm300, %v816, 0
    %v902 = vsel %vm300, %v817, 0
    %v905 = vsel %vm300, %v818, 0
    %v908 = vsel %vm300, %v819, 0
    %v911 = vsel %vm300, %v820, 0
    %v914 = vsel %vm300, %v821, 0
    %v917 = vsel %vm300, %v822, 0
    %v920 = vsel %vm300, %v823, 0
    %v923 = vsel %vm300, %v824, 0
    %v926 = vsel %vm300, %v825, 0
    %v929 = vsel %vm300, %v826, 0
    %931 = vmatpush.msra.mxu0 0.0
    %932 = vmatpush.msra.mxu0 0.0
    %933 = vmatpush.msra.mxu0 0.0
    %934 = vmatpush.msra.mxu0 0.0
    %935 = vmatpush.msra.mxu0 0.0
    %936 = vmatpush.msra.mxu0 0.0
    %937 = vmatpush.msra.mxu0 0.0
    %938 = vmatpush.msra.mxu0 0.0
    %939 = vmatpush.msra.mxu0 %v834
    %940 = vmatpush.msra.mxu0 %v833
    %941 = vmatpush.msra.mxu0 %v832
    %942 = vmatpush.msra.mxu0 %v831
    %943 = vmatpush.msra.mxu0 %v830
    %944 = vmatpush.msra.mxu0 %v829
    %945 = vmatpush.msra.mxu0 %v828
    %946 = vmatpush.msra.mxu0 %v827
    %947 = vmatmul.f32.gmra.mxu0 %v836
    %v948 = vpop.f32.mrf.mxu0
    %v949 = vadd.f32 0.0, %v948
    %950 = vmatmul.f32.gmra.mxu0 %v839
    %v951 = vpop.f32.mrf.mxu0
    %v952 = vadd.f32 0.0, %v951
    %953 = vmatmul.f32.gmra.mxu0 %v842
    %v954 = vpop.f32.mrf.mxu0
    %v955 = vadd.f32 0.0, %v954
    %956 = vmatmul.f32.gmra.mxu0 %v845
    %v957 = vpop.f32.mrf.mxu0
    %v958 = vadd.f32 0.0, %v957
    %959 = vmatmul.f32.gmra.mxu0 %v848
    %v960 = vpop.f32.mrf.mxu0
    %v961 = vadd.f32 0.0, %v960
    %962 = vmatmul.f32.gmra.mxu0 %v851
    %v963 = vpop.f32.mrf.mxu0
    %v964 = vadd.f32 0.0, %v963
    %965 = vmatmul.f32.gmra.mxu0 %v854
    %v966 = vpop.f32.mrf.mxu0
    %v967 = vadd.f32 0.0, %v966
    %968 = vmatmul.f32.gmra.mxu0 %v857
    %v969 = vpop.f32.mrf.mxu0
    %v970 = vadd.f32 0.0, %v969
    %971 = vmatmul.f32.gmra.mxu0 %v860
    %v972 = vpop.f32.mrf.mxu0
    %v973 = vadd.f32 0.0, %v972
    %974 = vmatmul.f32.gmra.mxu0 %v863
    %v975 = vpop.f32.mrf.mxu0
    %v976 = vadd.f32 0.0, %v975
    %977 = vmatmul.f32.gmra.mxu0 %v866
    %v978 = vpop.f32.mrf.mxu0
    %v979 = vadd.f32 0.0, %v978
    %980 = vmatmul.f32.gmra.mxu0 %v869
    %v981 = vpop.f32.mrf.mxu0
    %v982 = vadd.f32 0.0, %v981
    %983 = vmatmul.f32.gmra.mxu0 %v872
    %v984 = vpop.f32.mrf.mxu0
    %v985 = vadd.f32 0.0, %v984
    %986 = vmatmul.f32.gmra.mxu0 %v875
    %v987 = vpop.f32.mrf.mxu0
    %v988 = vadd.f32 0.0, %v987
    %989 = vmatmul.f32.gmra.mxu0 %v878
    %v990 = vpop.f32.mrf.mxu0
    %v991 = vadd.f32 0.0, %v990
    %992 = vmatmul.f32.gmra.mxu0 %v881
    %v993 = vpop.f32.mrf.mxu0
    %v994 = vadd.f32 0.0, %v993
    %995 = vmatmul.f32.gmra.mxu0 %v884
    %v996 = vpop.f32.mrf.mxu0
    %v997 = vadd.f32 0.0, %v996
    %998 = vmatmul.f32.gmra.mxu0 %v887
    %v999 = vpop.f32.mrf.mxu0
    %v1000 = vadd.f32 0.0, %v999
    %1001 = vmatmul.f32.gmra.mxu0 %v890
    %v1002 = vpop.f32.mrf.mxu0
    %v1003 = vadd.f32 0.0, %v1002
    %1004 = vmatmul.f32.gmra.mxu0 %v893
    %v1005 = vpop.f32.mrf.mxu0
    %v1006 = vadd.f32 0.0, %v1005
    %1007 = vmatmul.f32.gmra.mxu0 %v896
    %v1008 = vpop.f32.mrf.mxu0
    %v1009 = vadd.f32 0.0, %v1008
    %1010 = vmatmul.f32.gmra.mxu0 %v899
    %v1011 = vpop.f32.mrf.mxu0
    %v1012 = vadd.f32 0.0, %v1011
    %1013 = vmatmul.f32.gmra.mxu0 %v902
    %v1014 = vpop.f32.mrf.mxu0
    %v1015 = vadd.f32 0.0, %v1014
    %1016 = vmatmul.f32.gmra.mxu0 %v905
    %v1017 = vpop.f32.mrf.mxu0
    %v1018 = vadd.f32 0.0, %v1017
    %1019 = vmatmul.f32.gmra.mxu0 %v908
    %v1020 = vpop.f32.mrf.mxu0
    %v1021 = vadd.f32 0.0, %v1020
    %1022 = vmatmul.f32.gmra.mxu0 %v911
    %v1023 = vpop.f32.mrf.mxu0
    %v1024 = vadd.f32 0.0, %v1023
    %1025 = vmatmul.f32.gmra.mxu0 %v914
    %v1026 = vpop.f32.mrf.mxu0
    %v1027 = vadd.f32 0.0, %v1026
    %1028 = vmatmul.f32.gmra.mxu0 %v917
    %v1029 = vpop.f32.mrf.mxu0
    %v1030 = vadd.f32 0.0, %v1029
    %1031 = vmatmul.f32.gmra.mxu0 %v920
    %v1032 = vpop.f32.mrf.mxu0
    %v1033 = vadd.f32 0.0, %v1032
    %1034 = vmatmul.f32.gmra.mxu0 %v923
    %v1035 = vpop.f32.mrf.mxu0
    %v1036 = vadd.f32 0.0, %v1035
    %1037 = vmatmul.f32.gmra.mxu0 %v926
    %v1038 = vpop.f32.mrf.mxu0
    %v1039 = vadd.f32 0.0, %v1038
    %1040 = vmatmul.f32.gmra.mxu0 %v929
    %v1041 = vpop.f32.mrf.mxu0
    %v1042 = vadd.f32 0.0, %v1041
    %1043 = vdwg.mxu0
    %v1045 = vsel %vm300, %v755, 0
    %v1048 = vsel %vm300, %v756, 0
    %v1051 = vsel %vm300, %v757, 0
    %v1054 = vsel %vm300, %v758, 0
    %v1057 = vsel %vm300, %v759, 0
    %v1060 = vsel %vm300, %v760, 0
    %v1063 = vsel %vm300, %v761, 0
    %v1066 = vsel %vm300, %v762, 0
    %v1069 = vsel %vm300, %v763, 0
    %v1072 = vsel %vm300, %v764, 0
    %v1075 = vsel %vm300, %v765, 0
    %v1078 = vsel %vm300, %v766, 0
    %v1081 = vsel %vm300, %v767, 0
    %v1084 = vsel %vm300, %v768, 0
    %v1087 = vsel %vm300, %v769, 0
    %v1090 = vsel %vm300, %v770, 0
    %v1093 = vsel %vm300, %v771, 0
    %v1096 = vsel %vm300, %v772, 0
    %v1099 = vsel %vm300, %v773, 0
    %v1102 = vsel %vm300, %v774, 0
    %v1105 = vsel %vm300, %v775, 0
    %v1108 = vsel %vm300, %v776, 0
    %v1111 = vsel %vm300, %v777, 0
    %v1114 = vsel %vm300, %v778, 0
    %v1117 = vsel %vm300, %v779, 0
    %v1120 = vsel %vm300, %v780, 0
    %v1123 = vsel %vm300, %v781, 0
    %v1126 = vsel %vm300, %v782, 0
    %v1129 = vsel %vm300, %v783, 0
    %v1132 = vsel %vm300, %v784, 0
    %v1135 = vsel %vm300, %v785, 0
    %v1138 = vsel %vm300, %v786, 0
    %1140 = vmatpush.msra.mxu0 0.0
    %1141 = vmatpush.msra.mxu0 0.0
    %1142 = vmatpush.msra.mxu0 0.0
    %1143 = vmatpush.msra.mxu0 0.0
    %1144 = vmatpush.msra.mxu0 0.0
    %1145 = vmatpush.msra.mxu0 0.0
    %1146 = vmatpush.msra.mxu0 0.0
    %1147 = vmatpush.msra.mxu0 0.0
    %1148 = vmatpush.msra.mxu0 %v794
    %1149 = vmatpush.msra.mxu0 %v793
    %1150 = vmatpush.msra.mxu0 %v792
    %1151 = vmatpush.msra.mxu0 %v791
    %1152 = vmatpush.msra.mxu0 %v790
    %1153 = vmatpush.msra.mxu0 %v789
    %1154 = vmatpush.msra.mxu0 %v788
    %1155 = vmatpush.msra.mxu0 %v787
    %1156 = vmatmul.f32.gmra.mxu0 %v1045
    %v1157 = vpop.f32.mrf.mxu0
    %v1158 = vadd.f32 %v949, %v1157
    %1159 = vmatmul.f32.gmra.mxu0 %v1048
    %v1160 = vpop.f32.mrf.mxu0
    %v1161 = vadd.f32 %v952, %v1160
    %1162 = vmatmul.f32.gmra.mxu0 %v1051
    %v1163 = vpop.f32.mrf.mxu0
    %v1164 = vadd.f32 %v955, %v1163
    %1165 = vmatmul.f32.gmra.mxu0 %v1054
    %v1166 = vpop.f32.mrf.mxu0
    %v1167 = vadd.f32 %v958, %v1166
    %1168 = vmatmul.f32.gmra.mxu0 %v1057
    %v1169 = vpop.f32.mrf.mxu0
    %v1170 = vadd.f32 %v961, %v1169
    %1171 = vmatmul.f32.gmra.mxu0 %v1060
    %v1172 = vpop.f32.mrf.mxu0
    %v1173 = vadd.f32 %v964, %v1172
    %1174 = vmatmul.f32.gmra.mxu0 %v1063
    %v1175 = vpop.f32.mrf.mxu0
    %v1176 = vadd.f32 %v967, %v1175
    %1177 = vmatmul.f32.gmra.mxu0 %v1066
    %v1178 = vpop.f32.mrf.mxu0
    %v1179 = vadd.f32 %v970, %v1178
    %1180 = vmatmul.f32.gmra.mxu0 %v1069
    %v1181 = vpop.f32.mrf.mxu0
    %v1182 = vadd.f32 %v973, %v1181
    %1183 = vmatmul.f32.gmra.mxu0 %v1072
    %v1184 = vpop.f32.mrf.mxu0
    %v1185 = vadd.f32 %v976, %v1184
    %1186 = vmatmul.f32.gmra.mxu0 %v1075
    %v1187 = vpop.f32.mrf.mxu0
    %v1188 = vadd.f32 %v979, %v1187
    %1189 = vmatmul.f32.gmra.mxu0 %v1078
    %v1190 = vpop.f32.mrf.mxu0
    %v1191 = vadd.f32 %v982, %v1190
    %1192 = vmatmul.f32.gmra.mxu0 %v1081
    %v1193 = vpop.f32.mrf.mxu0
    %v1194 = vadd.f32 %v985, %v1193
    %1195 = vmatmul.f32.gmra.mxu0 %v1084
    %v1196 = vpop.f32.mrf.mxu0
    %v1197 = vadd.f32 %v988, %v1196
    %1198 = vmatmul.f32.gmra.mxu0 %v1087
    %v1199 = vpop.f32.mrf.mxu0
    %v1200 = vadd.f32 %v991, %v1199
    %1201 = vmatmul.f32.gmra.mxu0 %v1090
    %v1202 = vpop.f32.mrf.mxu0
    %v1203 = vadd.f32 %v994, %v1202
    %1204 = vmatmul.f32.gmra.mxu0 %v1093
    %v1205 = vpop.f32.mrf.mxu0
    %v1206 = vadd.f32 %v997, %v1205
    %1207 = vmatmul.f32.gmra.mxu0 %v1096
    %v1208 = vpop.f32.mrf.mxu0
    %v1209 = vadd.f32 %v1000, %v1208
    %1210 = vmatmul.f32.gmra.mxu0 %v1099
    %v1211 = vpop.f32.mrf.mxu0
    %v1212 = vadd.f32 %v1003, %v1211
    %1213 = vmatmul.f32.gmra.mxu0 %v1102
    %v1214 = vpop.f32.mrf.mxu0
    %v1215 = vadd.f32 %v1006, %v1214
    %1216 = vmatmul.f32.gmra.mxu0 %v1105
    %v1217 = vpop.f32.mrf.mxu0
    %v1218 = vadd.f32 %v1009, %v1217
    %1219 = vmatmul.f32.gmra.mxu0 %v1108
    %v1220 = vpop.f32.mrf.mxu0
    %v1221 = vadd.f32 %v1012, %v1220
    %1222 = vmatmul.f32.gmra.mxu0 %v1111
    %v1223 = vpop.f32.mrf.mxu0
    %v1224 = vadd.f32 %v1015, %v1223
    %1225 = vmatmul.f32.gmra.mxu0 %v1114
    %v1226 = vpop.f32.mrf.mxu0
    %v1227 = vadd.f32 %v1018, %v1226
    %1228 = vmatmul.f32.gmra.mxu0 %v1117
    %v1229 = vpop.f32.mrf.mxu0
    %v1230 = vadd.f32 %v1021, %v1229
    %1231 = vmatmul.f32.gmra.mxu0 %v1120
    %v1232 = vpop.f32.mrf.mxu0
    %v1233 = vadd.f32 %v1024, %v1232
    %1234 = vmatmul.f32.gmra.mxu0 %v1123
    %v1235 = vpop.f32.mrf.mxu0
    %v1236 = vadd.f32 %v1027, %v1235
    %1237 = vmatmul.f32.gmra.mxu0 %v1126
    %v1238 = vpop.f32.mrf.mxu0
    %v1239 = vadd.f32 %v1030, %v1238
    %1240 = vmatmul.f32.gmra.mxu0 %v1129
    %v1241 = vpop.f32.mrf.mxu0
    %v1242 = vadd.f32 %v1033, %v1241
    %1243 = vmatmul.f32.gmra.mxu0 %v1132
    %v1244 = vpop.f32.mrf.mxu0
    %v1245 = vadd.f32 %v1036, %v1244
    %1246 = vmatmul.f32.gmra.mxu0 %v1135
    %v1247 = vpop.f32.mrf.mxu0
    %v1248 = vadd.f32 %v1039, %v1247
    %1249 = vmatmul.f32.gmra.mxu0 %v1138
    %v1250 = vpop.f32.mrf.mxu0
    %v1251 = vadd.f32 %v1042, %v1250
    %1252 = vdwg.mxu0
    %v1253 = vld [vmem:[#allocation3 + $0x9] sm:$0xff]
    %v1254 = vld [vmem:[#allocation3 + $0x11] sm:$0xff]
    %v1255 = vld [vmem:[#allocation3 + $0x29] sm:$0xff]
    %v1256 = vld [vmem:[#allocation3 + $0x31] sm:$0xff]
    %v1257 = vld [vmem:[#allocation3 + $0x49] sm:$0xff]
    %v1258 = vld [vmem:[#allocation3 + $0x51] sm:$0xff]
    %v1259 = vld [vmem:[#allocation3 + $0x69] sm:$0xff]
    %v1260 = vld [vmem:[#allocation3 + $0x71] sm:$0xff]
    %v1261 = vld [vmem:[#allocation3 + $0x89] sm:$0xff]
    %v1262 = vld [vmem:[#allocation3 + $0x91] sm:$0xff]
    %v1263 = vld [vmem:[#allocation3 + $0xa9] sm:$0xff]
    %v1264 = vld [vmem:[#allocation3 + $0xb1] sm:$0xff]
    %v1265 = vld [vmem:[#allocation3 + $0xc9] sm:$0xff]
    %v1266 = vld [vmem:[#allocation3 + $0xd1] sm:$0xff]
    %v1267 = vld [vmem:[#allocation3 + $0xe9] sm:$0xff]
    %v1268 = vld [vmem:[#allocation3 + $0xf1] sm:$0xff]
    %v1269 = vld [vmem:[#allocation3 + $0x109] sm:$0xff]
    %v1270 = vld [vmem:[#allocation3 + $0x111] sm:$0xff]
    %v1271 = vld [vmem:[#allocation3 + $0x129] sm:$0xff]
    %v1272 = vld [vmem:[#allocation3 + $0x131] sm:$0xff]
    %v1273 = vld [vmem:[#allocation3 + $0x149] sm:$0xff]
    %v1274 = vld [vmem:[#allocation3 + $0x151] sm:$0xff]
    %v1275 = vld [vmem:[#allocation3 + $0x169] sm:$0xff]
    %v1276 = vld [vmem:[#allocation3 + $0x171] sm:$0xff]
    %v1277 = vld [vmem:[#allocation3 + $0x189] sm:$0xff]
    %v1278 = vld [vmem:[#allocation3 + $0x191] sm:$0xff]
    %v1279 = vld [vmem:[#allocation3 + $0x1a9] sm:$0xff]
    %v1280 = vld [vmem:[#allocation3 + $0x1b1] sm:$0xff]
    %v1281 = vld [vmem:[#allocation3 + $0x1c9] sm:$0xff]
    %v1282 = vld [vmem:[#allocation3 + $0x1d1] sm:$0xff]
    %v1283 = vld [vmem:[#allocation3 + $0x1e9] sm:$0xff]
    %v1284 = vld [vmem:[#allocation3 + $0x1f1] sm:$0xff]
    %v1285 = vld [vmem:[%s5 + $0x80] sm:$0xff]
    %v1286 = vld [vmem:[%s5 + $0x88] sm:$0xff]
    %v1287 = vld [vmem:[%s5 + $0x90] sm:$0xff]
    %v1288 = vld [vmem:[%s5 + $0x98] sm:$0xff]
    %v1289 = vld [vmem:[%s5 + $0xa0] sm:$0xff]
    %v1290 = vld [vmem:[%s5 + $0xa8] sm:$0xff]
    %v1291 = vld [vmem:[%s5 + $0xb0] sm:$0xff]
    %v1292 = vld [vmem:[%s5 + $0xb8] sm:$0xff]
    %v1294 = vsel %vm300, %v1253, 0
    %v1297 = vsel %vm300, %v1254, 0
    %v1300 = vsel %vm300, %v1255, 0
    %v1303 = vsel %vm300, %v1256, 0
    %v1306 = vsel %vm300, %v1257, 0
    %v1309 = vsel %vm300, %v1258, 0
    %v1312 = vsel %vm300, %v1259, 0
    %v1315 = vsel %vm300, %v1260, 0
    %v1318 = vsel %vm300, %v1261, 0
    %v1321 = vsel %vm300, %v1262, 0
    %v1324 = vsel %vm300, %v1263, 0
    %v1327 = vsel %vm300, %v1264, 0
    %v1330 = vsel %vm300, %v1265, 0
    %v1333 = vsel %vm300, %v1266, 0
    %v1336 = vsel %vm300, %v1267, 0
    %v1339 = vsel %vm300, %v1268, 0
    %v1342 = vsel %vm300, %v1269, 0
    %v1345 = vsel %vm300, %v1270, 0
    %v1348 = vsel %vm300, %v1271, 0
    %v1351 = vsel %vm300, %v1272, 0
    %v1354 = vsel %vm300, %v1273, 0
    %v1357 = vsel %vm300, %v1274, 0
    %v1360 = vsel %vm300, %v1275, 0
    %v1363 = vsel %vm300, %v1276, 0
    %v1366 = vsel %vm300, %v1277, 0
    %v1369 = vsel %vm300, %v1278, 0
    %v1372 = vsel %vm300, %v1279, 0
    %v1375 = vsel %vm300, %v1280, 0
    %v1378 = vsel %vm300, %v1281, 0
    %v1381 = vsel %vm300, %v1282, 0
    %v1384 = vsel %vm300, %v1283, 0
    %v1387 = vsel %vm300, %v1284, 0
    %1389 = vmatpush.msra.mxu0 0.0
    %1390 = vmatpush.msra.mxu0 0.0
    %1391 = vmatpush.msra.mxu0 0.0
    %1392 = vmatpush.msra.mxu0 0.0
    %1393 = vmatpush.msra.mxu0 0.0
    %1394 = vmatpush.msra.mxu0 0.0
    %1395 = vmatpush.msra.mxu0 0.0
    %1396 = vmatpush.msra.mxu0 0.0
    %1397 = vmatpush.msra.mxu0 %v1292
    %1398 = vmatpush.msra.mxu0 %v1291
    %1399 = vmatpush.msra.mxu0 %v1290
    %1400 = vmatpush.msra.mxu0 %v1289
    %1401 = vmatpush.msra.mxu0 %v1288
    %1402 = vmatpush.msra.mxu0 %v1287
    %1403 = vmatpush.msra.mxu0 %v1286
    %1404 = vmatpush.msra.mxu0 %v1285
    %1405 = vmatmul.f32.gmra.mxu0 %v1294
    %v1406 = vpop.f32.mrf.mxu0
    %v1407 = vadd.f32 0.0, %v1406
    %1408 = vmatmul.f32.gmra.mxu0 %v1297
    %v1409 = vpop.f32.mrf.mxu0
    %v1410 = vadd.f32 0.0, %v1409
    %1411 = vmatmul.f32.gmra.mxu0 %v1300
    %v1412 = vpop.f32.mrf.mxu0
    %v1413 = vadd.f32 0.0, %v1412
    %1414 = vmatmul.f32.gmra.mxu0 %v1303
    %v1415 = vpop.f32.mrf.mxu0
    %v1416 = vadd.f32 0.0, %v1415
    %1417 = vmatmul.f32.gmra.mxu0 %v1306
    %v1418 = vpop.f32.mrf.mxu0
    %v1419 = vadd.f32 0.0, %v1418
    %1420 = vmatmul.f32.gmra.mxu0 %v1309
    %v1421 = vpop.f32.mrf.mxu0
    %v1422 = vadd.f32 0.0, %v1421
    %1423 = vmatmul.f32.gmra.mxu0 %v1312
    %v1424 = vpop.f32.mrf.mxu0
    %v1425 = vadd.f32 0.0, %v1424
    %1426 = vmatmul.f32.gmra.mxu0 %v1315
    %v1427 = vpop.f32.mrf.mxu0
    %v1428 = vadd.f32 0.0, %v1427
    %1429 = vmatmul.f32.gmra.mxu0 %v1318
    %v1430 = vpop.f32.mrf.mxu0
    %v1431 = vadd.f32 0.0, %v1430
    %1432 = vmatmul.f32.gmra.mxu0 %v1321
    %v1433 = vpop.f32.mrf.mxu0
    %v1434 = vadd.f32 0.0, %v1433
    %1435 = vmatmul.f32.gmra.mxu0 %v1324
    %v1436 = vpop.f32.mrf.mxu0
    %v1437 = vadd.f32 0.0, %v1436
    %1438 = vmatmul.f32.gmra.mxu0 %v1327
    %v1439 = vpop.f32.mrf.mxu0
    %v1440 = vadd.f32 0.0, %v1439
    %1441 = vmatmul.f32.gmra.mxu0 %v1330
    %v1442 = vpop.f32.mrf.mxu0
    %v1443 = vadd.f32 0.0, %v1442
    %1444 = vmatmul.f32.gmra.mxu0 %v1333
    %v1445 = vpop.f32.mrf.mxu0
    %v1446 = vadd.f32 0.0, %v1445
    %1447 = vmatmul.f32.gmra.mxu0 %v1336
    %v1448 = vpop.f32.mrf.mxu0
    %v1449 = vadd.f32 0.0, %v1448
    %1450 = vmatmul.f32.gmra.mxu0 %v1339
    %v1451 = vpop.f32.mrf.mxu0
    %v1452 = vadd.f32 0.0, %v1451
    %1453 = vmatmul.f32.gmra.mxu0 %v1342
    %v1454 = vpop.f32.mrf.mxu0
    %v1455 = vadd.f32 0.0, %v1454
    %1456 = vmatmul.f32.gmra.mxu0 %v1345
    %v1457 = vpop.f32.mrf.mxu0
    %v1458 = vadd.f32 0.0, %v1457
    %1459 = vmatmul.f32.gmra.mxu0 %v1348
    %v1460 = vpop.f32.mrf.mxu0
    %v1461 = vadd.f32 0.0, %v1460
    %1462 = vmatmul.f32.gmra.mxu0 %v1351
    %v1463 = vpop.f32.mrf.mxu0
    %v1464 = vadd.f32 0.0, %v1463
    %1465 = vmatmul.f32.gmra.mxu0 %v1354
    %v1466 = vpop.f32.mrf.mxu0
    %v1467 = vadd.f32 0.0, %v1466
    %1468 = vmatmul.f32.gmra.mxu0 %v1357
    %v1469 = vpop.f32.mrf.mxu0
    %v1470 = vadd.f32 0.0, %v1469
    %1471 = vmatmul.f32.gmra.mxu0 %v1360
    %v1472 = vpop.f32.mrf.mxu0
    %v1473 = vadd.f32 0.0, %v1472
    %1474 = vmatmul.f32.gmra.mxu0 %v1363
    %v1475 = vpop.f32.mrf.mxu0
    %v1476 = vadd.f32 0.0, %v1475
    %1477 = vmatmul.f32.gmra.mxu0 %v1366
    %v1478 = vpop.f32.mrf.mxu0
    %v1479 = vadd.f32 0.0, %v1478
    %1480 = vmatmul.f32.gmra.mxu0 %v1369
    %v1481 = vpop.f32.mrf.mxu0
    %v1482 = vadd.f32 0.0, %v1481
    %1483 = vmatmul.f32.gmra.mxu0 %v1372
    %v1484 = vpop.f32.mrf.mxu0
    %v1485 = vadd.f32 0.0, %v1484
    %1486 = vmatmul.f32.gmra.mxu0 %v1375
    %v1487 = vpop.f32.mrf.mxu0
    %v1488 = vadd.f32 0.0, %v1487
    %1489 = vmatmul.f32.gmra.mxu0 %v1378
    %v1490 = vpop.f32.mrf.mxu0
    %v1491 = vadd.f32 0.0, %v1490
    %1492 = vmatmul.f32.gmra.mxu0 %v1381
    %v1493 = vpop.f32.mrf.mxu0
    %v1494 = vadd.f32 0.0, %v1493
    %1495 = vmatmul.f32.gmra.mxu0 %v1384
    %v1496 = vpop.f32.mrf.mxu0
    %v1497 = vadd.f32 0.0, %v1496
    %1498 = vmatmul.f32.gmra.mxu0 %v1387
    %v1499 = vpop.f32.mrf.mxu0
    %v1500 = vadd.f32 0.0, %v1499
    %1501 = vdwg.mxu0
    %v1502 = vadd.f32 %v1158, %v1407
    %v1503 = vadd.f32 %v1161, %v1410
    %v1504 = vadd.f32 %v1164, %v1413
    %v1505 = vadd.f32 %v1167, %v1416
    %v1506 = vadd.f32 %v1170, %v1419
    %v1507 = vadd.f32 %v1173, %v1422
    %v1508 = vadd.f32 %v1176, %v1425
    %v1509 = vadd.f32 %v1179, %v1428
    %v1510 = vadd.f32 %v1182, %v1431
    %v1511 = vadd.f32 %v1185, %v1434
    %v1512 = vadd.f32 %v1188, %v1437
    %v1513 = vadd.f32 %v1191, %v1440
    %v1514 = vadd.f32 %v1194, %v1443
    %v1515 = vadd.f32 %v1197, %v1446
    %v1516 = vadd.f32 %v1200, %v1449
    %v1517 = vadd.f32 %v1203, %v1452
    %v1518 = vadd.f32 %v1206, %v1455
    %v1519 = vadd.f32 %v1209, %v1458
    %v1520 = vadd.f32 %v1212, %v1461
    %v1521 = vadd.f32 %v1215, %v1464
    %v1522 = vadd.f32 %v1218, %v1467
    %v1523 = vadd.f32 %v1221, %v1470
    %v1524 = vadd.f32 %v1224, %v1473
    %v1525 = vadd.f32 %v1227, %v1476
    %v1526 = vadd.f32 %v1230, %v1479
    %v1527 = vadd.f32 %v1233, %v1482
    %v1528 = vadd.f32 %v1236, %v1485
    %v1529 = vadd.f32 %v1239, %v1488
    %v1530 = vadd.f32 %v1242, %v1491
    %v1531 = vadd.f32 %v1245, %v1494
    %v1532 = vadd.f32 %v1248, %v1497
    %v1533 = vadd.f32 %v1251, %v1500
    %v1534 = vld [vmem:[%s722 + $0x7] sm:$0xff]
    %v1535 = vld [vmem:[%s722 + $0xf] sm:$0xff]
    %v1536 = vld [vmem:[%s722 + $0x27] sm:$0xff]
    %v1537 = vld [vmem:[%s722 + $0x2f] sm:$0xff]
    %v1538 = vld [vmem:[%s722 + $0x47] sm:$0xff]
    %v1539 = vld [vmem:[%s722 + $0x4f] sm:$0xff]
    %v1540 = vld [vmem:[%s722 + $0x67] sm:$0xff]
    %v1541 = vld [vmem:[%s722 + $0x6f] sm:$0xff]
    %v1542 = vld [vmem:[%s722 + $0x87] sm:$0xff]
    %v1543 = vld [vmem:[%s722 + $0x8f] sm:$0xff]
    %v1544 = vld [vmem:[%s722 + $0xa7] sm:$0xff]
    %v1545 = vld [vmem:[%s722 + $0xaf] sm:$0xff]
    %v1546 = vld [vmem:[%s722 + $0xc7] sm:$0xff]
    %v1547 = vld [vmem:[%s722 + $0xcf] sm:$0xff]
    %v1548 = vld [vmem:[%s722 + $0xe7] sm:$0xff]
    %v1549 = vld [vmem:[%s722 + $0xef] sm:$0xff]
    %v1550 = vld [vmem:[%s722 + $0x107] sm:$0xff]
    %v1551 = vld [vmem:[%s722 + $0x10f] sm:$0xff]
    %v1552 = vld [vmem:[%s722 + $0x127] sm:$0xff]
    %v1553 = vld [vmem:[%s722 + $0x12f] sm:$0xff]
    %v1554 = vld [vmem:[%s722 + $0x147] sm:$0xff]
    %v1555 = vld [vmem:[%s722 + $0x14f] sm:$0xff]
    %v1556 = vld [vmem:[%s722 + $0x167] sm:$0xff]
    %v1557 = vld [vmem:[%s722 + $0x16f] sm:$0xff]
    %v1558 = vld [vmem:[%s722 + $0x187] sm:$0xff]
    %v1559 = vld [vmem:[%s722 + $0x18f] sm:$0xff]
    %v1560 = vld [vmem:[%s722 + $0x1a7] sm:$0xff]
    %v1561 = vld [vmem:[%s722 + $0x1af] sm:$0xff]
    %v1562 = vld [vmem:[%s722 + $0x1c7] sm:$0xff]
    %v1563 = vld [vmem:[%s722 + $0x1cf] sm:$0xff]
    %v1564 = vld [vmem:[%s722 + $0x1e7] sm:$0xff]
    %v1565 = vld [vmem:[%s722 + $0x1ef] sm:$0xff]
    %v1566 = vld [vmem:[%s5 + $0xc0] sm:$0xff]
    %v1567 = vld [vmem:[%s5 + $0xc8] sm:$0xff]
    %v1568 = vld [vmem:[%s5 + $0xd0] sm:$0xff]
    %v1569 = vld [vmem:[%s5 + $0xd8] sm:$0xff]
    %v1570 = vld [vmem:[%s5 + $0xe0] sm:$0xff]
    %v1571 = vld [vmem:[%s5 + $0xe8] sm:$0xff]
    %v1572 = vld [vmem:[%s5 + $0xf0] sm:$0xff]
    %v1573 = vld [vmem:[%s5 + $0xf8] sm:$0xff]
    %v1575 = vsel %vm300, %v1534, 0
    %v1578 = vsel %vm300, %v1535, 0
    %v1581 = vsel %vm300, %v1536, 0
    %v1584 = vsel %vm300, %v1537, 0
    %v1587 = vsel %vm300, %v1538, 0
    %v1590 = vsel %vm300, %v1539, 0
    %v1593 = vsel %vm300, %v1540, 0
    %v1596 = vsel %vm300, %v1541, 0
    %v1599 = vsel %vm300, %v1542, 0
    %v1602 = vsel %vm300, %v1543, 0
    %v1605 = vsel %vm300, %v1544, 0
    %v1608 = vsel %vm300, %v1545, 0
    %v1611 = vsel %vm300, %v1546, 0
    %v1614 = vsel %vm300, %v1547, 0
    %v1617 = vsel %vm300, %v1548, 0
    %v1620 = vsel %vm300, %v1549, 0
    %v1623 = vsel %vm300, %v1550, 0
    %v1626 = vsel %vm300, %v1551, 0
    %v1629 = vsel %vm300, %v1552, 0
    %v1632 = vsel %vm300, %v1553, 0
    %v1635 = vsel %vm300, %v1554, 0
    %v1638 = vsel %vm300, %v1555, 0
    %v1641 = vsel %vm300, %v1556, 0
    %v1644 = vsel %vm300, %v1557, 0
    %v1647 = vsel %vm300, %v1558, 0
    %v1650 = vsel %vm300, %v1559, 0
    %v1653 = vsel %vm300, %v1560, 0
    %v1656 = vsel %vm300, %v1561, 0
    %v1659 = vsel %vm300, %v1562, 0
    %v1662 = vsel %vm300, %v1563, 0
    %v1665 = vsel %vm300, %v1564, 0
    %v1668 = vsel %vm300, %v1565, 0
    %1670 = vmatpush.msra.mxu0 0.0
    %1671 = vmatpush.msra.mxu0 0.0
    %1672 = vmatpush.msra.mxu0 0.0
    %1673 = vmatpush.msra.mxu0 0.0
    %1674 = vmatpush.msra.mxu0 0.0
    %1675 = vmatpush.msra.mxu0 0.0
    %1676 = vmatpush.msra.mxu0 0.0
    %1677 = vmatpush.msra.mxu0 0.0
    %1678 = vmatpush.msra.mxu0 %v1573
    %1679 = vmatpush.msra.mxu0 %v1572
    %1680 = vmatpush.msra.mxu0 %v1571
    %1681 = vmatpush.msra.mxu0 %v1570
    %1682 = vmatpush.msra.mxu0 %v1569
    %1683 = vmatpush.msra.mxu0 %v1568
    %1684 = vmatpush.msra.mxu0 %v1567
    %1685 = vmatpush.msra.mxu0 %v1566
    %1686 = vmatmul.f32.gmra.mxu0 %v1575
    %v1687 = vpop.f32.mrf.mxu0
    %v1688 = vadd.f32 0.0, %v1687
    %1689 = vmatmul.f32.gmra.mxu0 %v1578
    %v1690 = vpop.f32.mrf.mxu0
    %v1691 = vadd.f32 0.0, %v1690
    %1692 = vmatmul.f32.gmra.mxu0 %v1581
    %v1693 = vpop.f32.mrf.mxu0
    %v1694 = vadd.f32 0.0, %v1693
    %1695 = vmatmul.f32.gmra.mxu0 %v1584
    %v1696 = vpop.f32.mrf.mxu0
    %v1697 = vadd.f32 0.0, %v1696
    %1698 = vmatmul.f32.gmra.mxu0 %v1587
    %v1699 = vpop.f32.mrf.mxu0
    %v1700 = vadd.f32 0.0, %v1699
    %1701 = vmatmul.f32.gmra.mxu0 %v1590
    %v1702 = vpop.f32.mrf.mxu0
    %v1703 = vadd.f32 0.0, %v1702
    %1704 = vmatmul.f32.gmra.mxu0 %v1593
    %v1705 = vpop.f32.mrf.mxu0
    %v1706 = vadd.f32 0.0, %v1705
    %1707 = vmatmul.f32.gmra.mxu0 %v1596
    %v1708 = vpop.f32.mrf.mxu0
    %v1709 = vadd.f32 0.0, %v1708
    %1710 = vmatmul.f32.gmra.mxu0 %v1599
    %v1711 = vpop.f32.mrf.mxu0
    %v1712 = vadd.f32 0.0, %v1711
    %1713 = vmatmul.f32.gmra.mxu0 %v1602
    %v1714 = vpop.f32.mrf.mxu0
    %v1715 = vadd.f32 0.0, %v1714
    %1716 = vmatmul.f32.gmra.mxu0 %v1605
    %v1717 = vpop.f32.mrf.mxu0
    %v1718 = vadd.f32 0.0, %v1717
    %1719 = vmatmul.f32.gmra.mxu0 %v1608
    %v1720 = vpop.f32.mrf.mxu0
    %v1721 = vadd.f32 0.0, %v1720
    %1722 = vmatmul.f32.gmra.mxu0 %v1611
    %v1723 = vpop.f32.mrf.mxu0
    %v1724 = vadd.f32 0.0, %v1723
    %1725 = vmatmul.f32.gmra.mxu0 %v1614
    %v1726 = vpop.f32.mrf.mxu0
    %v1727 = vadd.f32 0.0, %v1726
    %1728 = vmatmul.f32.gmra.mxu0 %v1617
    %v1729 = vpop.f32.mrf.mxu0
    %v1730 = vadd.f32 0.0, %v1729
    %1731 = vmatmul.f32.gmra.mxu0 %v1620
    %v1732 = vpop.f32.mrf.mxu0
    %v1733 = vadd.f32 0.0, %v1732
    %1734 = vmatmul.f32.gmra.mxu0 %v1623
    %v1735 = vpop.f32.mrf.mxu0
    %v1736 = vadd.f32 0.0, %v1735
    %1737 = vmatmul.f32.gmra.mxu0 %v1626
    %v1738 = vpop.f32.mrf.mxu0
    %v1739 = vadd.f32 0.0, %v1738
    %1740 = vmatmul.f32.gmra.mxu0 %v1629
    %v1741 = vpop.f32.mrf.mxu0
    %v1742 = vadd.f32 0.0, %v1741
    %1743 = vmatmul.f32.gmra.mxu0 %v1632
    %v1744 = vpop.f32.mrf.mxu0
    %v1745 = vadd.f32 0.0, %v1744
    %1746 = vmatmul.f32.gmra.mxu0 %v1635
    %v1747 = vpop.f32.mrf.mxu0
    %v1748 = vadd.f32 0.0, %v1747
    %1749 = vmatmul.f32.gmra.mxu0 %v1638
    %v1750 = vpop.f32.mrf.mxu0
    %v1751 = vadd.f32 0.0, %v1750
    %1752 = vmatmul.f32.gmra.mxu0 %v1641
    %v1753 = vpop.f32.mrf.mxu0
    %v1754 = vadd.f32 0.0, %v1753
    %1755 = vmatmul.f32.gmra.mxu0 %v1644
    %v1756 = vpop.f32.mrf.mxu0
    %v1757 = vadd.f32 0.0, %v1756
    %1758 = vmatmul.f32.gmra.mxu0 %v1647
    %v1759 = vpop.f32.mrf.mxu0
    %v1760 = vadd.f32 0.0, %v1759
    %1761 = vmatmul.f32.gmra.mxu0 %v1650
    %v1762 = vpop.f32.mrf.mxu0
    %v1763 = vadd.f32 0.0, %v1762
    %1764 = vmatmul.f32.gmra.mxu0 %v1653
    %v1765 = vpop.f32.mrf.mxu0
    %v1766 = vadd.f32 0.0, %v1765
    %1767 = vmatmul.f32.gmra.mxu0 %v1656
    %v1768 = vpop.f32.mrf.mxu0
    %v1769 = vadd.f32 0.0, %v1768
    %1770 = vmatmul.f32.gmra.mxu0 %v1659
    %v1771 = vpop.f32.mrf.mxu0
    %v1772 = vadd.f32 0.0, %v1771
    %1773 = vmatmul.f32.gmra.mxu0 %v1662
    %v1774 = vpop.f32.mrf.mxu0
    %v1775 = vadd.f32 0.0, %v1774
    %1776 = vmatmul.f32.gmra.mxu0 %v1665
    %v1777 = vpop.f32.mrf.mxu0
    %v1778 = vadd.f32 0.0, %v1777
    %1779 = vmatmul.f32.gmra.mxu0 %v1668
    %v1780 = vpop.f32.mrf.mxu0
    %v1781 = vadd.f32 0.0, %v1780
    %1782 = vdwg.mxu0
    %v1783 = vadd.f32 %v1502, %v1688
    %v1784 = vadd.f32 %v1503, %v1691
    %v1785 = vadd.f32 %v1504, %v1694
    %v1786 = vadd.f32 %v1505, %v1697
    %v1787 = vadd.f32 %v1506, %v1700
    %v1788 = vadd.f32 %v1507, %v1703
    %v1789 = vadd.f32 %v1508, %v1706
    %v1790 = vadd.f32 %v1509, %v1709
    %v1791 = vadd.f32 %v1510, %v1712
    %v1792 = vadd.f32 %v1511, %v1715
    %v1793 = vadd.f32 %v1512, %v1718
    %v1794 = vadd.f32 %v1513, %v1721
    %v1795 = vadd.f32 %v1514, %v1724
    %v1796 = vadd.f32 %v1515, %v1727
    %v1797 = vadd.f32 %v1516, %v1730
    %v1798 = vadd.f32 %v1517, %v1733
    %v1799 = vadd.f32 %v1518, %v1736
    %v1800 = vadd.f32 %v1519, %v1739
    %v1801 = vadd.f32 %v1520, %v1742
    %v1802 = vadd.f32 %v1521, %v1745
    %v1803 = vadd.f32 %v1522, %v1748
    %v1804 = vadd.f32 %v1523, %v1751
    %v1805 = vadd.f32 %v1524, %v1754
    %v1806 = vadd.f32 %v1525, %v1757
    %v1807 = vadd.f32 %v1526, %v1760
    %v1808 = vadd.f32 %v1527, %v1763
    %v1809 = vadd.f32 %v1528, %v1766
    %v1810 = vadd.f32 %v1529, %v1769
    %v1811 = vadd.f32 %v1530, %v1772
    %v1812 = vadd.f32 %v1531, %v1775
    %v1813 = vadd.f32 %v1532, %v1778
    %v1814 = vadd.f32 %v1533, %v1781
    %v1815 = vld [vmem:[%s722 + $0x8] sm:$0xff]
    %v1816 = vld [vmem:[%s722 + $0x10] sm:$0xff]
    %v1817 = vld [vmem:[%s722 + $0x28] sm:$0xff]
    %v1818 = vld [vmem:[%s722 + $0x30] sm:$0xff]
    %v1819 = vld [vmem:[%s722 + $0x48] sm:$0xff]
    %v1820 = vld [vmem:[%s722 + $0x50] sm:$0xff]
    %v1821 = vld [vmem:[%s722 + $0x68] sm:$0xff]
    %v1822 = vld [vmem:[%s722 + $0x70] sm:$0xff]
    %v1823 = vld [vmem:[%s722 + $0x88] sm:$0xff]
    %v1824 = vld [vmem:[%s722 + $0x90] sm:$0xff]
    %v1825 = vld [vmem:[%s722 + $0xa8] sm:$0xff]
    %v1826 = vld [vmem:[%s722 + $0xb0] sm:$0xff]
    %v1827 = vld [vmem:[%s722 + $0xc8] sm:$0xff]
    %v1828 = vld [vmem:[%s722 + $0xd0] sm:$0xff]
    %v1829 = vld [vmem:[%s722 + $0xe8] sm:$0xff]
    %v1830 = vld [vmem:[%s722 + $0xf0] sm:$0xff]
    %v1831 = vld [vmem:[%s722 + $0x108] sm:$0xff]
    %v1832 = vld [vmem:[%s722 + $0x110] sm:$0xff]
    %v1833 = vld [vmem:[%s722 + $0x128] sm:$0xff]
    %v1834 = vld [vmem:[%s722 + $0x130] sm:$0xff]
    %v1835 = vld [vmem:[%s722 + $0x148] sm:$0xff]
    %v1836 = vld [vmem:[%s722 + $0x150] sm:$0xff]
    %v1837 = vld [vmem:[%s722 + $0x168] sm:$0xff]
    %v1838 = vld [vmem:[%s722 + $0x170] sm:$0xff]
    %v1839 = vld [vmem:[%s722 + $0x188] sm:$0xff]
    %v1840 = vld [vmem:[%s722 + $0x190] sm:$0xff]
    %v1841 = vld [vmem:[%s722 + $0x1a8] sm:$0xff]
    %v1842 = vld [vmem:[%s722 + $0x1b0] sm:$0xff]
    %v1843 = vld [vmem:[%s722 + $0x1c8] sm:$0xff]
    %v1844 = vld [vmem:[%s722 + $0x1d0] sm:$0xff]
    %v1845 = vld [vmem:[%s722 + $0x1e8] sm:$0xff]
    %v1846 = vld [vmem:[%s722 + $0x1f0] sm:$0xff]
    %v1847 = vld [vmem:[%s5 + $0x100] sm:$0xff]
    %v1848 = vld [vmem:[%s5 + $0x108] sm:$0xff]
    %v1849 = vld [vmem:[%s5 + $0x110] sm:$0xff]
    %v1850 = vld [vmem:[%s5 + $0x118] sm:$0xff]
    %v1851 = vld [vmem:[%s5 + $0x120] sm:$0xff]
    %v1852 = vld [vmem:[%s5 + $0x128] sm:$0xff]
    %v1853 = vld [vmem:[%s5 + $0x130] sm:$0xff]
    %v1854 = vld [vmem:[%s5 + $0x138] sm:$0xff]
    %v1856 = vsel %vm300, %v1815, 0
    %v1859 = vsel %vm300, %v1816, 0
    %v1862 = vsel %vm300, %v1817, 0
    %v1865 = vsel %vm300, %v1818, 0
    %v1868 = vsel %vm300, %v1819, 0
    %v1871 = vsel %vm300, %v1820, 0
    %v1874 = vsel %vm300, %v1821, 0
    %v1877 = vsel %vm300, %v1822, 0
    %v1880 = vsel %vm300, %v1823, 0
    %v1883 = vsel %vm300, %v1824, 0
    %v1886 = vsel %vm300, %v1825, 0
    %v1889 = vsel %vm300, %v1826, 0
    %v1892 = vsel %vm300, %v1827, 0
    %v1895 = vsel %vm300, %v1828, 0
    %v1898 = vsel %vm300, %v1829, 0
    %v1901 = vsel %vm300, %v1830, 0
    %v1904 = vsel %vm300, %v1831, 0
    %v1907 = vsel %vm300, %v1832, 0
    %v1910 = vsel %vm300, %v1833, 0
    %v1913 = vsel %vm300, %v1834, 0
    %v1916 = vsel %vm300, %v1835, 0
    %v1919 = vsel %vm300, %v1836, 0
    %v1922 = vsel %vm300, %v1837, 0
    %v1925 = vsel %vm300, %v1838, 0
    %v1928 = vsel %vm300, %v1839, 0
    %v1931 = vsel %vm300, %v1840, 0
    %v1934 = vsel %vm300, %v1841, 0
    %v1937 = vsel %vm300, %v1842, 0
    %v1940 = vsel %vm300, %v1843, 0
    %v1943 = vsel %vm300, %v1844, 0
    %v1946 = vsel %vm300, %v1845, 0
    %v1949 = vsel %vm300, %v1846, 0
    %1951 = vmatpush.msra.mxu0 0.0
    %1952 = vmatpush.msra.mxu0 0.0
    %1953 = vmatpush.msra.mxu0 0.0
    %1954 = vmatpush.msra.mxu0 0.0
    %1955 = vmatpush.msra.mxu0 0.0
    %1956 = vmatpush.msra.mxu0 0.0
    %1957 = vmatpush.msra.mxu0 0.0
    %1958 = vmatpush.msra.mxu0 0.0
    %1959 = vmatpush.msra.mxu0 %v1854
    %1960 = vmatpush.msra.mxu0 %v1853
    %1961 = vmatpush.msra.mxu0 %v1852
    %1962 = vmatpush.msra.mxu0 %v1851
    %1963 = vmatpush.msra.mxu0 %v1850
    %1964 = vmatpush.msra.mxu0 %v1849
    %1965 = vmatpush.msra.mxu0 %v1848
    %1966 = vmatpush.msra.mxu0 %v1847
    %1967 = vmatmul.f32.gmra.mxu0 %v1856
    %v1968 = vpop.f32.mrf.mxu0
    %v1969 = vadd.f32 0.0, %v1968
    %1970 = vmatmul.f32.gmra.mxu0 %v1859
    %v1971 = vpop.f32.mrf.mxu0
    %v1972 = vadd.f32 0.0, %v1971
    %1973 = vmatmul.f32.gmra.mxu0 %v1862
    %v1974 = vpop.f32.mrf.mxu0
    %v1975 = vadd.f32 0.0, %v1974
    %1976 = vmatmul.f32.gmra.mxu0 %v1865
    %v1977 = vpop.f32.mrf.mxu0
    %v1978 = vadd.f32 0.0, %v1977
    %1979 = vmatmul.f32.gmra.mxu0 %v1868
    %v1980 = vpop.f32.mrf.mxu0
    %v1981 = vadd.f32 0.0, %v1980
    %1982 = vmatmul.f32.gmra.mxu0 %v1871
    %v1983 = vpop.f32.mrf.mxu0
    %v1984 = vadd.f32 0.0, %v1983
    %1985 = vmatmul.f32.gmra.mxu0 %v1874
    %v1986 = vpop.f32.mrf.mxu0
    %v1987 = vadd.f32 0.0, %v1986
    %1988 = vmatmul.f32.gmra.mxu0 %v1877
    %v1989 = vpop.f32.mrf.mxu0
    %v1990 = vadd.f32 0.0, %v1989
    %1991 = vmatmul.f32.gmra.mxu0 %v1880
    %v1992 = vpop.f32.mrf.mxu0
    %v1993 = vadd.f32 0.0, %v1992
    %1994 = vmatmul.f32.gmra.mxu0 %v1883
    %v1995 = vpop.f32.mrf.mxu0
    %v1996 = vadd.f32 0.0, %v1995
    %1997 = vmatmul.f32.gmra.mxu0 %v1886
    %v1998 = vpop.f32.mrf.mxu0
    %v1999 = vadd.f32 0.0, %v1998
    %2000 = vmatmul.f32.gmra.mxu0 %v1889
    %v2001 = vpop.f32.mrf.mxu0
    %v2002 = vadd.f32 0.0, %v2001
    %2003 = vmatmul.f32.gmra.mxu0 %v1892
    %v2004 = vpop.f32.mrf.mxu0
    %v2005 = vadd.f32 0.0, %v2004
    %2006 = vmatmul.f32.gmra.mxu0 %v1895
    %v2007 = vpop.f32.mrf.mxu0
    %v2008 = vadd.f32 0.0, %v2007
    %2009 = vmatmul.f32.gmra.mxu0 %v1898
    %v2010 = vpop.f32.mrf.mxu0
    %v2011 = vadd.f32 0.0, %v2010
    %2012 = vmatmul.f32.gmra.mxu0 %v1901
    %v2013 = vpop.f32.mrf.mxu0
    %v2014 = vadd.f32 0.0, %v2013
    %2015 = vmatmul.f32.gmra.mxu0 %v1904
    %v2016 = vpop.f32.mrf.mxu0
    %v2017 = vadd.f32 0.0, %v2016
    %2018 = vmatmul.f32.gmra.mxu0 %v1907
    %v2019 = vpop.f32.mrf.mxu0
    %v2020 = vadd.f32 0.0, %v2019
    %2021 = vmatmul.f32.gmra.mxu0 %v1910
    %v2022 = vpop.f32.mrf.mxu0
    %v2023 = vadd.f32 0.0, %v2022
    %2024 = vmatmul.f32.gmra.mxu0 %v1913
    %v2025 = vpop.f32.mrf.mxu0
    %v2026 = vadd.f32 0.0, %v2025
    %2027 = vmatmul.f32.gmra.mxu0 %v1916
    %v2028 = vpop.f32.mrf.mxu0
    %v2029 = vadd.f32 0.0, %v2028
    %2030 = vmatmul.f32.gmra.mxu0 %v1919
    %v2031 = vpop.f32.mrf.mxu0
    %v2032 = vadd.f32 0.0, %v2031
    %2033 = vmatmul.f32.gmra.mxu0 %v1922
    %v2034 = vpop.f32.mrf.mxu0
    %v2035 = vadd.f32 0.0, %v2034
    %2036 = vmatmul.f32.gmra.mxu0 %v1925
    %v2037 = vpop.f32.mrf.mxu0
    %v2038 = vadd.f32 0.0, %v2037
    %2039 = vmatmul.f32.gmra.mxu0 %v1928
    %v2040 = vpop.f32.mrf.mxu0
    %v2041 = vadd.f32 0.0, %v2040
    %2042 = vmatmul.f32.gmra.mxu0 %v1931
    %v2043 = vpop.f32.mrf.mxu0
    %v2044 = vadd.f32 0.0, %v2043
    %2045 = vmatmul.f32.gmra.mxu0 %v1934
    %v2046 = vpop.f32.mrf.mxu0
    %v2047 = vadd.f32 0.0, %v2046
    %2048 = vmatmul.f32.gmra.mxu0 %v1937
    %v2049 = vpop.f32.mrf.mxu0
    %v2050 = vadd.f32 0.0, %v2049
    %2051 = vmatmul.f32.gmra.mxu0 %v1940
    %v2052 = vpop.f32.mrf.mxu0
    %v2053 = vadd.f32 0.0, %v2052
    %2054 = vmatmul.f32.gmra.mxu0 %v1943
    %v2055 = vpop.f32.mrf.mxu0
    %v2056 = vadd.f32 0.0, %v2055
    %2057 = vmatmul.f32.gmra.mxu0 %v1946
    %v2058 = vpop.f32.mrf.mxu0
    %v2059 = vadd.f32 0.0, %v2058
    %2060 = vmatmul.f32.gmra.mxu0 %v1949
    %v2061 = vpop.f32.mrf.mxu0
    %v2062 = vadd.f32 0.0, %v2061
    %2063 = vdwg.mxu0
    %v2064 = vadd.f32 %v1783, %v1969
    %v2065 = vadd.f32 %v1784, %v1972
    %v2066 = vadd.f32 %v1785, %v1975
    %v2067 = vadd.f32 %v1786, %v1978
    %v2068 = vadd.f32 %v1787, %v1981
    %v2069 = vadd.f32 %v1788, %v1984
    %v2070 = vadd.f32 %v1789, %v1987
    %v2071 = vadd.f32 %v1790, %v1990
    %v2072 = vadd.f32 %v1791, %v1993
    %v2073 = vadd.f32 %v1792, %v1996
    %v2074 = vadd.f32 %v1793, %v1999
    %v2075 = vadd.f32 %v1794, %v2002
    %v2076 = vadd.f32 %v1795, %v2005
    %v2077 = vadd.f32 %v1796, %v2008
    %v2078 = vadd.f32 %v1797, %v2011
    %v2079 = vadd.f32 %v1798, %v2014
    %v2080 = vadd.f32 %v1799, %v2017
    %v2081 = vadd.f32 %v1800, %v2020
    %v2082 = vadd.f32 %v1801, %v2023
    %v2083 = vadd.f32 %v1802, %v2026
    %v2084 = vadd.f32 %v1803, %v2029
    %v2085 = vadd.f32 %v1804, %v2032
    %v2086 = vadd.f32 %v1805, %v2035
    %v2087 = vadd.f32 %v1806, %v2038
    %v2088 = vadd.f32 %v1807, %v2041
    %v2089 = vadd.f32 %v1808, %v2044
    %v2090 = vadd.f32 %v1809, %v2047
    %v2091 = vadd.f32 %v1810, %v2050
    %v2092 = vadd.f32 %v1811, %v2053
    %v2093 = vadd.f32 %v1812, %v2056
    %v2094 = vadd.f32 %v1813, %v2059
    %v2095 = vadd.f32 %v1814, %v2062
    %v2096 = vld [vmem:[%s722 + $0x9] sm:$0xff]
    %v2097 = vld [vmem:[%s722 + $0x11] sm:$0xff]
    %v2098 = vld [vmem:[%s722 + $0x29] sm:$0xff]
    %v2099 = vld [vmem:[%s722 + $0x31] sm:$0xff]
    %v2100 = vld [vmem:[%s722 + $0x49] sm:$0xff]
    %v2101 = vld [vmem:[%s722 + $0x51] sm:$0xff]
    %v2102 = vld [vmem:[%s722 + $0x69] sm:$0xff]
    %v2103 = vld [vmem:[%s722 + $0x71] sm:$0xff]
    %v2104 = vld [vmem:[%s722 + $0x89] sm:$0xff]
    %v2105 = vld [vmem:[%s722 + $0x91] sm:$0xff]
    %v2106 = vld [vmem:[%s722 + $0xa9] sm:$0xff]
    %v2107 = vld [vmem:[%s722 + $0xb1] sm:$0xff]
    %v2108 = vld [vmem:[%s722 + $0xc9] sm:$0xff]
    %v2109 = vld [vmem:[%s722 + $0xd1] sm:$0xff]
    %v2110 = vld [vmem:[%s722 + $0xe9] sm:$0xff]
    %v2111 = vld [vmem:[%s722 + $0xf1] sm:$0xff]
    %v2112 = vld [vmem:[%s722 + $0x109] sm:$0xff]
    %v2113 = vld [vmem:[%s722 + $0x111] sm:$0xff]
    %v2114 = vld [vmem:[%s722 + $0x129] sm:$0xff]
    %v2115 = vld [vmem:[%s722 + $0x131] sm:$0xff]
    %v2116 = vld [vmem:[%s722 + $0x149] sm:$0xff]
    %v2117 = vld [vmem:[%s722 + $0x151] sm:$0xff]
    %v2118 = vld [vmem:[%s722 + $0x169] sm:$0xff]
    %v2119 = vld [vmem:[%s722 + $0x171] sm:$0xff]
    %v2120 = vld [vmem:[%s722 + $0x189] sm:$0xff]
    %v2121 = vld [vmem:[%s722 + $0x191] sm:$0xff]
    %v2122 = vld [vmem:[%s722 + $0x1a9] sm:$0xff]
    %v2123 = vld [vmem:[%s722 + $0x1b1] sm:$0xff]
    %v2124 = vld [vmem:[%s722 + $0x1c9] sm:$0xff]
    %v2125 = vld [vmem:[%s722 + $0x1d1] sm:$0xff]
    %v2126 = vld [vmem:[%s722 + $0x1e9] sm:$0xff]
    %v2127 = vld [vmem:[%s722 + $0x1f1] sm:$0xff]
    %v2128 = vld [vmem:[%s5 + $0x140] sm:$0xff]
    %v2129 = vld [vmem:[%s5 + $0x148] sm:$0xff]
    %v2130 = vld [vmem:[%s5 + $0x150] sm:$0xff]
    %v2131 = vld [vmem:[%s5 + $0x158] sm:$0xff]
    %v2132 = vld [vmem:[%s5 + $0x160] sm:$0xff]
    %v2133 = vld [vmem:[%s5 + $0x168] sm:$0xff]
    %v2134 = vld [vmem:[%s5 + $0x170] sm:$0xff]
    %v2135 = vld [vmem:[%s5 + $0x178] sm:$0xff]
    %v2137 = vsel %vm300, %v2096, 0
    %v2140 = vsel %vm300, %v2097, 0
    %v2143 = vsel %vm300, %v2098, 0
    %v2146 = vsel %vm300, %v2099, 0
    %v2149 = vsel %vm300, %v2100, 0
    %v2152 = vsel %vm300, %v2101, 0
    %v2155 = vsel %vm300, %v2102, 0
    %v2158 = vsel %vm300, %v2103, 0
    %v2161 = vsel %vm300, %v2104, 0
    %v2164 = vsel %vm300, %v2105, 0
    %v2167 = vsel %vm300, %v2106, 0
    %v2170 = vsel %vm300, %v2107, 0
    %v2173 = vsel %vm300, %v2108, 0
    %v2176 = vsel %vm300, %v2109, 0
    %v2179 = vsel %vm300, %v2110, 0
    %v2182 = vsel %vm300, %v2111, 0
    %v2185 = vsel %vm300, %v2112, 0
    %v2188 = vsel %vm300, %v2113, 0
    %v2191 = vsel %vm300, %v2114, 0
    %v2194 = vsel %vm300, %v2115, 0
    %v2197 = vsel %vm300, %v2116, 0
    %v2200 = vsel %vm300, %v2117, 0
    %v2203 = vsel %vm300, %v2118, 0
    %v2206 = vsel %vm300, %v2119, 0
    %v2209 = vsel %vm300, %v2120, 0
    %v2212 = vsel %vm300, %v2121, 0
    %v2215 = vsel %vm300, %v2122, 0
    %v2218 = vsel %vm300, %v2123, 0
    %v2221 = vsel %vm300, %v2124, 0
    %v2224 = vsel %vm300, %v2125, 0
    %v2227 = vsel %vm300, %v2126, 0
    %v2230 = vsel %vm300, %v2127, 0
    %2232 = vmatpush.msra.mxu0 0.0
    %2233 = vmatpush.msra.mxu0 0.0
    %2234 = vmatpush.msra.mxu0 0.0
    %2235 = vmatpush.msra.mxu0 0.0
    %2236 = vmatpush.msra.mxu0 0.0
    %2237 = vmatpush.msra.mxu0 0.0
    %2238 = vmatpush.msra.mxu0 0.0
    %2239 = vmatpush.msra.mxu0 0.0
    %2240 = vmatpush.msra.mxu0 %v2135
    %2241 = vmatpush.msra.mxu0 %v2134
    %2242 = vmatpush.msra.mxu0 %v2133
    %2243 = vmatpush.msra.mxu0 %v2132
    %2244 = vmatpush.msra.mxu0 %v2131
    %2245 = vmatpush.msra.mxu0 %v2130
    %2246 = vmatpush.msra.mxu0 %v2129
    %2247 = vmatpush.msra.mxu0 %v2128
    %2248 = vmatmul.f32.gmra.mxu0 %v2137
    %v2249 = vpop.f32.mrf.mxu0
    %v2250 = vadd.f32 0.0, %v2249
    %2251 = vmatmul.f32.gmra.mxu0 %v2140
    %v2252 = vpop.f32.mrf.mxu0
    %v2253 = vadd.f32 0.0, %v2252
    %2254 = vmatmul.f32.gmra.mxu0 %v2143
    %v2255 = vpop.f32.mrf.mxu0
    %v2256 = vadd.f32 0.0, %v2255
    %2257 = vmatmul.f32.gmra.mxu0 %v2146
    %v2258 = vpop.f32.mrf.mxu0
    %v2259 = vadd.f32 0.0, %v2258
    %2260 = vmatmul.f32.gmra.mxu0 %v2149
    %v2261 = vpop.f32.mrf.mxu0
    %v2262 = vadd.f32 0.0, %v2261
    %2263 = vmatmul.f32.gmra.mxu0 %v2152
    %v2264 = vpop.f32.mrf.mxu0
    %v2265 = vadd.f32 0.0, %v2264
    %2266 = vmatmul.f32.gmra.mxu0 %v2155
    %v2267 = vpop.f32.mrf.mxu0
    %v2268 = vadd.f32 0.0, %v2267
    %2269 = vmatmul.f32.gmra.mxu0 %v2158
    %v2270 = vpop.f32.mrf.mxu0
    %v2271 = vadd.f32 0.0, %v2270
    %2272 = vmatmul.f32.gmra.mxu0 %v2161
    %v2273 = vpop.f32.mrf.mxu0
    %v2274 = vadd.f32 0.0, %v2273
    %2275 = vmatmul.f32.gmra.mxu0 %v2164
    %v2276 = vpop.f32.mrf.mxu0
    %v2277 = vadd.f32 0.0, %v2276
    %2278 = vmatmul.f32.gmra.mxu0 %v2167
    %v2279 = vpop.f32.mrf.mxu0
    %v2280 = vadd.f32 0.0, %v2279
    %2281 = vmatmul.f32.gmra.mxu0 %v2170
    %v2282 = vpop.f32.mrf.mxu0
    %v2283 = vadd.f32 0.0, %v2282
    %2284 = vmatmul.f32.gmra.mxu0 %v2173
    %v2285 = vpop.f32.mrf.mxu0
    %v2286 = vadd.f32 0.0, %v2285
    %2287 = vmatmul.f32.gmra.mxu0 %v2176
    %v2288 = vpop.f32.mrf.mxu0
    %v2289 = vadd.f32 0.0, %v2288
    %2290 = vmatmul.f32.gmra.mxu0 %v2179
    %v2291 = vpop.f32.mrf.mxu0
    %v2292 = vadd.f32 0.0, %v2291
    %2293 = vmatmul.f32.gmra.mxu0 %v2182
    %v2294 = vpop.f32.mrf.mxu0
    %v2295 = vadd.f32 0.0, %v2294
    %2296 = vmatmul.f32.gmra.mxu0 %v2185
    %v2297 = vpop.f32.mrf.mxu0
    %v2298 = vadd.f32 0.0, %v2297
    %2299 = vmatmul.f32.gmra.mxu0 %v2188
    %v2300 = vpop.f32.mrf.mxu0
    %v2301 = vadd.f32 0.0, %v2300
    %2302 = vmatmul.f32.gmra.mxu0 %v2191
    %v2303 = vpop.f32.mrf.mxu0
    %v2304 = vadd.f32 0.0, %v2303
    %2305 = vmatmul.f32.gmra.mxu0 %v2194
    %v2306 = vpop.f32.mrf.mxu0
    %v2307 = vadd.f32 0.0, %v2306
    %2308 = vmatmul.f32.gmra.mxu0 %v2197
    %v2309 = vpop.f32.mrf.mxu0
    %v2310 = vadd.f32 0.0, %v2309
    %2311 = vmatmul.f32.gmra.mxu0 %v2200
    %v2312 = vpop.f32.mrf.mxu0
    %v2313 = vadd.f32 0.0, %v2312
    %2314 = vmatmul.f32.gmra.mxu0 %v2203
    %v2315 = vpop.f32.mrf.mxu0
    %v2316 = vadd.f32 0.0, %v2315
    %2317 = vmatmul.f32.gmra.mxu0 %v2206
    %v2318 = vpop.f32.mrf.mxu0
    %v2319 = vadd.f32 0.0, %v2318
    %2320 = vmatmul.f32.gmra.mxu0 %v2209
    %v2321 = vpop.f32.mrf.mxu0
    %v2322 = vadd.f32 0.0, %v2321
    %2323 = vmatmul.f32.gmra.mxu0 %v2212
    %v2324 = vpop.f32.mrf.mxu0
    %v2325 = vadd.f32 0.0, %v2324
    %2326 = vmatmul.f32.gmra.mxu0 %v2215
    %v2327 = vpop.f32.mrf.mxu0
    %v2328 = vadd.f32 0.0, %v2327
    %2329 = vmatmul.f32.gmra.mxu0 %v2218
    %v2330 = vpop.f32.mrf.mxu0
    %v2331 = vadd.f32 0.0, %v2330
    %2332 = vmatmul.f32.gmra.mxu0 %v2221
    %v2333 = vpop.f32.mrf.mxu0
    %v2334 = vadd.f32 0.0, %v2333
    %2335 = vmatmul.f32.gmra.mxu0 %v2224
    %v2336 = vpop.f32.mrf.mxu0
    %v2337 = vadd.f32 0.0, %v2336
    %2338 = vmatmul.f32.gmra.mxu0 %v2227
    %v2339 = vpop.f32.mrf.mxu0
    %v2340 = vadd.f32 0.0, %v2339
    %2341 = vmatmul.f32.gmra.mxu0 %v2230
    %v2342 = vpop.f32.mrf.mxu0
    %v2343 = vadd.f32 0.0, %v2342
    %2344 = vdwg.mxu0
    %v2345 = vadd.f32 %v2064, %v2250
    %v2346 = vadd.f32 %v2065, %v2253
    %v2347 = vadd.f32 %v2066, %v2256
    %v2348 = vadd.f32 %v2067, %v2259
    %v2349 = vadd.f32 %v2068, %v2262
    %v2350 = vadd.f32 %v2069, %v2265
    %v2351 = vadd.f32 %v2070, %v2268
    %v2352 = vadd.f32 %v2071, %v2271
    %v2353 = vadd.f32 %v2072, %v2274
    %v2354 = vadd.f32 %v2073, %v2277
    %v2355 = vadd.f32 %v2074, %v2280
    %v2356 = vadd.f32 %v2075, %v2283
    %v2357 = vadd.f32 %v2076, %v2286
    %v2358 = vadd.f32 %v2077, %v2289
    %v2359 = vadd.f32 %v2078, %v2292
    %v2360 = vadd.f32 %v2079, %v2295
    %v2361 = vadd.f32 %v2080, %v2298
    %v2362 = vadd.f32 %v2081, %v2301
    %v2363 = vadd.f32 %v2082, %v2304
    %v2364 = vadd.f32 %v2083, %v2307
    %v2365 = vadd.f32 %v2084, %v2310
    %v2366 = vadd.f32 %v2085, %v2313
    %v2367 = vadd.f32 %v2086, %v2316
    %v2368 = vadd.f32 %v2087, %v2319
    %v2369 = vadd.f32 %v2088, %v2322
    %v2370 = vadd.f32 %v2089, %v2325
    %v2371 = vadd.f32 %v2090, %v2328
    %v2372 = vadd.f32 %v2091, %v2331
    %v2373 = vadd.f32 %v2092, %v2334
    %v2374 = vadd.f32 %v2093, %v2337
    %v2375 = vadd.f32 %v2094, %v2340
    %v2376 = vadd.f32 %v2095, %v2343
    %s2377 = scalar_lea.vmem [#allocation3], 64
    %v2378 = vld [vmem:[%s2377 + $0x7] sm:$0xff]
    %v2379 = vld [vmem:[%s2377 + $0xf] sm:$0xff]
    %v2380 = vld [vmem:[%s2377 + $0x27] sm:$0xff]
    %v2381 = vld [vmem:[%s2377 + $0x2f] sm:$0xff]
    %v2382 = vld [vmem:[%s2377 + $0x47] sm:$0xff]
    %v2383 = vld [vmem:[%s2377 + $0x4f] sm:$0xff]
    %v2384 = vld [vmem:[%s2377 + $0x67] sm:$0xff]
    %v2385 = vld [vmem:[%s2377 + $0x6f] sm:$0xff]
    %v2386 = vld [vmem:[%s2377 + $0x87] sm:$0xff]
    %v2387 = vld [vmem:[%s2377 + $0x8f] sm:$0xff]
    %v2388 = vld [vmem:[%s2377 + $0xa7] sm:$0xff]
    %v2389 = vld [vmem:[%s2377 + $0xaf] sm:$0xff]
    %v2390 = vld [vmem:[%s2377 + $0xc7] sm:$0xff]
    %v2391 = vld [vmem:[%s2377 + $0xcf] sm:$0xff]
    %v2392 = vld [vmem:[%s2377 + $0xe7] sm:$0xff]
    %v2393 = vld [vmem:[%s2377 + $0xef] sm:$0xff]
    %v2394 = vld [vmem:[%s2377 + $0x107] sm:$0xff]
    %v2395 = vld [vmem:[%s2377 + $0x10f] sm:$0xff]
    %v2396 = vld [vmem:[%s2377 + $0x127] sm:$0xff]
    %v2397 = vld [vmem:[%s2377 + $0x12f] sm:$0xff]
    %v2398 = vld [vmem:[%s2377 + $0x147] sm:$0xff]
    %v2399 = vld [vmem:[%s2377 + $0x14f] sm:$0xff]
    %v2400 = vld [vmem:[%s2377 + $0x167] sm:$0xff]
    %v2401 = vld [vmem:[%s2377 + $0x16f] sm:$0xff]
    %v2402 = vld [vmem:[%s2377 + $0x187] sm:$0xff]
    %v2403 = vld [vmem:[%s2377 + $0x18f] sm:$0xff]
    %v2404 = vld [vmem:[%s2377 + $0x1a7] sm:$0xff]
    %v2405 = vld [vmem:[%s2377 + $0x1af] sm:$0xff]
    %v2406 = vld [vmem:[%s2377 + $0x1c7] sm:$0xff]
    %v2407 = vld [vmem:[%s2377 + $0x1cf] sm:$0xff]
    %v2408 = vld [vmem:[%s2377 + $0x1e7] sm:$0xff]
    %v2409 = vld [vmem:[%s2377 + $0x1ef] sm:$0xff]
    %v2410 = vld [vmem:[%s5 + $0x180] sm:$0xff]
    %v2411 = vld [vmem:[%s5 + $0x188] sm:$0xff]
    %v2412 = vld [vmem:[%s5 + $0x190] sm:$0xff]
    %v2413 = vld [vmem:[%s5 + $0x198] sm:$0xff]
    %v2414 = vld [vmem:[%s5 + $0x1a0] sm:$0xff]
    %v2415 = vld [vmem:[%s5 + $0x1a8] sm:$0xff]
    %v2416 = vld [vmem:[%s5 + $0x1b0] sm:$0xff]
    %v2417 = vld [vmem:[%s5 + $0x1b8] sm:$0xff]
    %v2419 = vsel %vm300, %v2378, 0
    %v2422 = vsel %vm300, %v2379, 0
    %v2425 = vsel %vm300, %v2380, 0
    %v2428 = vsel %vm300, %v2381, 0
    %v2431 = vsel %vm300, %v2382, 0
    %v2434 = vsel %vm300, %v2383, 0
    %v2437 = vsel %vm300, %v2384, 0
    %v2440 = vsel %vm300, %v2385, 0
    %v2443 = vsel %vm300, %v2386, 0
    %v2446 = vsel %vm300, %v2387, 0
    %v2449 = vsel %vm300, %v2388, 0
    %v2452 = vsel %vm300, %v2389, 0
    %v2455 = vsel %vm300, %v2390, 0
    %v2458 = vsel %vm300, %v2391, 0
    %v2461 = vsel %vm300, %v2392, 0
    %v2464 = vsel %vm300, %v2393, 0
    %v2467 = vsel %vm300, %v2394, 0
    %v2470 = vsel %vm300, %v2395, 0
    %v2473 = vsel %vm300, %v2396, 0
    %v2476 = vsel %vm300, %v2397, 0
    %v2479 = vsel %vm300, %v2398, 0
    %v2482 = vsel %vm300, %v2399, 0
    %v2485 = vsel %vm300, %v2400, 0
    %v2488 = vsel %vm300, %v2401, 0
    %v2491 = vsel %vm300, %v2402, 0
    %v2494 = vsel %vm300, %v2403, 0
    %v2497 = vsel %vm300, %v2404, 0
    %v2500 = vsel %vm300, %v2405, 0
    %v2503 = vsel %vm300, %v2406, 0
    %v2506 = vsel %vm300, %v2407, 0
    %v2509 = vsel %vm300, %v2408, 0
    %v2512 = vsel %vm300, %v2409, 0
    %2514 = vmatpush.msra.mxu0 0.0
    %2515 = vmatpush.msra.mxu0 0.0
    %2516 = vmatpush.msra.mxu0 0.0
    %2517 = vmatpush.msra.mxu0 0.0
    %2518 = vmatpush.msra.mxu0 0.0
    %2519 = vmatpush.msra.mxu0 0.0
    %2520 = vmatpush.msra.mxu0 0.0
    %2521 = vmatpush.msra.mxu0 0.0
    %2522 = vmatpush.msra.mxu0 %v2417
    %2523 = vmatpush.msra.mxu0 %v2416
    %2524 = vmatpush.msra.mxu0 %v2415
    %2525 = vmatpush.msra.mxu0 %v2414
    %2526 = vmatpush.msra.mxu0 %v2413
    %2527 = vmatpush.msra.mxu0 %v2412
    %2528 = vmatpush.msra.mxu0 %v2411
    %2529 = vmatpush.msra.mxu0 %v2410
    %2530 = vmatmul.f32.gmra.mxu0 %v2419
    %v2531 = vpop.f32.mrf.mxu0
    %v2532 = vadd.f32 0.0, %v2531
    %2533 = vmatmul.f32.gmra.mxu0 %v2422
    %v2534 = vpop.f32.mrf.mxu0
    %v2535 = vadd.f32 0.0, %v2534
    %2536 = vmatmul.f32.gmra.mxu0 %v2425
    %v2537 = vpop.f32.mrf.mxu0
    %v2538 = vadd.f32 0.0, %v2537
    %2539 = vmatmul.f32.gmra.mxu0 %v2428
    %v2540 = vpop.f32.mrf.mxu0
    %v2541 = vadd.f32 0.0, %v2540
    %2542 = vmatmul.f32.gmra.mxu0 %v2431
    %v2543 = vpop.f32.mrf.mxu0
    %v2544 = vadd.f32 0.0, %v2543
    %2545 = vmatmul.f32.gmra.mxu0 %v2434
    %v2546 = vpop.f32.mrf.mxu0
    %v2547 = vadd.f32 0.0, %v2546
    %2548 = vmatmul.f32.gmra.mxu0 %v2437
    %v2549 = vpop.f32.mrf.mxu0
    %v2550 = vadd.f32 0.0, %v2549
    %2551 = vmatmul.f32.gmra.mxu0 %v2440
    %v2552 = vpop.f32.mrf.mxu0
    %v2553 = vadd.f32 0.0, %v2552
    %2554 = vmatmul.f32.gmra.mxu0 %v2443
    %v2555 = vpop.f32.mrf.mxu0
    %v2556 = vadd.f32 0.0, %v2555
    %2557 = vmatmul.f32.gmra.mxu0 %v2446
    %v2558 = vpop.f32.mrf.mxu0
    %v2559 = vadd.f32 0.0, %v2558
    %2560 = vmatmul.f32.gmra.mxu0 %v2449
    %v2561 = vpop.f32.mrf.mxu0
    %v2562 = vadd.f32 0.0, %v2561
    %2563 = vmatmul.f32.gmra.mxu0 %v2452
    %v2564 = vpop.f32.mrf.mxu0
    %v2565 = vadd.f32 0.0, %v2564
    %2566 = vmatmul.f32.gmra.mxu0 %v2455
    %v2567 = vpop.f32.mrf.mxu0
    %v2568 = vadd.f32 0.0, %v2567
    %2569 = vmatmul.f32.gmra.mxu0 %v2458
    %v2570 = vpop.f32.mrf.mxu0
    %v2571 = vadd.f32 0.0, %v2570
    %2572 = vmatmul.f32.gmra.mxu0 %v2461
    %v2573 = vpop.f32.mrf.mxu0
    %v2574 = vadd.f32 0.0, %v2573
    %2575 = vmatmul.f32.gmra.mxu0 %v2464
    %v2576 = vpop.f32.mrf.mxu0
    %v2577 = vadd.f32 0.0, %v2576
    %2578 = vmatmul.f32.gmra.mxu0 %v2467
    %v2579 = vpop.f32.mrf.mxu0
    %v2580 = vadd.f32 0.0, %v2579
    %2581 = vmatmul.f32.gmra.mxu0 %v2470
    %v2582 = vpop.f32.mrf.mxu0
    %v2583 = vadd.f32 0.0, %v2582
    %2584 = vmatmul.f32.gmra.mxu0 %v2473
    %v2585 = vpop.f32.mrf.mxu0
    %v2586 = vadd.f32 0.0, %v2585
    %2587 = vmatmul.f32.gmra.mxu0 %v2476
    %v2588 = vpop.f32.mrf.mxu0
    %v2589 = vadd.f32 0.0, %v2588
    %2590 = vmatmul.f32.gmra.mxu0 %v2479
    %v2591 = vpop.f32.mrf.mxu0
    %v2592 = vadd.f32 0.0, %v2591
    %2593 = vmatmul.f32.gmra.mxu0 %v2482
    %v2594 = vpop.f32.mrf.mxu0
    %v2595 = vadd.f32 0.0, %v2594
    %2596 = vmatmul.f32.gmra.mxu0 %v2485
    %v2597 = vpop.f32.mrf.mxu0
    %v2598 = vadd.f32 0.0, %v2597
    %2599 = vmatmul.f32.gmra.mxu0 %v2488
    %v2600 = vpop.f32.mrf.mxu0
    %v2601 = vadd.f32 0.0, %v2600
    %2602 = vmatmul.f32.gmra.mxu0 %v2491
    %v2603 = vpop.f32.mrf.mxu0
    %v2604 = vadd.f32 0.0, %v2603
    %2605 = vmatmul.f32.gmra.mxu0 %v2494
    %v2606 = vpop.f32.mrf.mxu0
    %v2607 = vadd.f32 0.0, %v2606
    %2608 = vmatmul.f32.gmra.mxu0 %v2497
    %v2609 = vpop.f32.mrf.mxu0
    %v2610 = vadd.f32 0.0, %v2609
    %2611 = vmatmul.f32.gmra.mxu0 %v2500
    %v2612 = vpop.f32.mrf.mxu0
    %v2613 = vadd.f32 0.0, %v2612
    %2614 = vmatmul.f32.gmra.mxu0 %v2503
    %v2615 = vpop.f32.mrf.mxu0
    %v2616 = vadd.f32 0.0, %v2615
    %2617 = vmatmul.f32.gmra.mxu0 %v2506
    %v2618 = vpop.f32.mrf.mxu0
    %v2619 = vadd.f32 0.0, %v2618
    %2620 = vmatmul.f32.gmra.mxu0 %v2509
    %v2621 = vpop.f32.mrf.mxu0
    %v2622 = vadd.f32 0.0, %v2621
    %2623 = vmatmul.f32.gmra.mxu0 %v2512
    %v2624 = vpop.f32.mrf.mxu0
    %v2625 = vadd.f32 0.0, %v2624
    %2626 = vdwg.mxu0
    %v2627 = vadd.f32 %v2345, %v2532
    %v2628 = vadd.f32 %v2346, %v2535
    %v2629 = vadd.f32 %v2347, %v2538
    %v2630 = vadd.f32 %v2348, %v2541
    %v2631 = vadd.f32 %v2349, %v2544
    %v2632 = vadd.f32 %v2350, %v2547
    %v2633 = vadd.f32 %v2351, %v2550
    %v2634 = vadd.f32 %v2352, %v2553
    %v2635 = vadd.f32 %v2353, %v2556
    %v2636 = vadd.f32 %v2354, %v2559
    %v2637 = vadd.f32 %v2355, %v2562
    %v2638 = vadd.f32 %v2356, %v2565
    %v2639 = vadd.f32 %v2357, %v2568
    %v2640 = vadd.f32 %v2358, %v2571
    %v2641 = vadd.f32 %v2359, %v2574
    %v2642 = vadd.f32 %v2360, %v2577
    %v2643 = vadd.f32 %v2361, %v2580
    %v2644 = vadd.f32 %v2362, %v2583
    %v2645 = vadd.f32 %v2363, %v2586
    %v2646 = vadd.f32 %v2364, %v2589
    %v2647 = vadd.f32 %v2365, %v2592
    %v2648 = vadd.f32 %v2366, %v2595
    %v2649 = vadd.f32 %v2367, %v2598
    %v2650 = vadd.f32 %v2368, %v2601
    %v2651 = vadd.f32 %v2369, %v2604
    %v2652 = vadd.f32 %v2370, %v2607
    %v2653 = vadd.f32 %v2371, %v2610
    %v2654 = vadd.f32 %v2372, %v2613
    %v2655 = vadd.f32 %v2373, %v2616
    %v2656 = vadd.f32 %v2374, %v2619
    %v2657 = vadd.f32 %v2375, %v2622
    %v2658 = vadd.f32 %v2376, %v2625
    %v2659 = vld [vmem:[%s2377 + $0x8] sm:$0xff]
    %v2660 = vld [vmem:[%s2377 + $0x10] sm:$0xff]
    %v2661 = vld [vmem:[%s2377 + $0x28] sm:$0xff]
    %v2662 = vld [vmem:[%s2377 + $0x30] sm:$0xff]
    %v2663 = vld [vmem:[%s2377 + $0x48] sm:$0xff]
    %v2664 = vld [vmem:[%s2377 + $0x50] sm:$0xff]
    %v2665 = vld [vmem:[%s2377 + $0x68] sm:$0xff]
    %v2666 = vld [vmem:[%s2377 + $0x70] sm:$0xff]
    %v2667 = vld [vmem:[%s2377 + $0x88] sm:$0xff]
    %v2668 = vld [vmem:[%s2377 + $0x90] sm:$0xff]
    %v2669 = vld [vmem:[%s2377 + $0xa8] sm:$0xff]
    %v2670 = vld [vmem:[%s2377 + $0xb0] sm:$0xff]
    %v2671 = vld [vmem:[%s2377 + $0xc8] sm:$0xff]
    %v2672 = vld [vmem:[%s2377 + $0xd0] sm:$0xff]
    %v2673 = vld [vmem:[%s2377 + $0xe8] sm:$0xff]
    %v2674 = vld [vmem:[%s2377 + $0xf0] sm:$0xff]
    %v2675 = vld [vmem:[%s2377 + $0x108] sm:$0xff]
    %v2676 = vld [vmem:[%s2377 + $0x110] sm:$0xff]
    %v2677 = vld [vmem:[%s2377 + $0x128] sm:$0xff]
    %v2678 = vld [vmem:[%s2377 + $0x130] sm:$0xff]
    %v2679 = vld [vmem:[%s2377 + $0x148] sm:$0xff]
    %v2680 = vld [vmem:[%s2377 + $0x150] sm:$0xff]
    %v2681 = vld [vmem:[%s2377 + $0x168] sm:$0xff]
    %v2682 = vld [vmem:[%s2377 + $0x170] sm:$0xff]
    %v2683 = vld [vmem:[%s2377 + $0x188] sm:$0xff]
    %v2684 = vld [vmem:[%s2377 + $0x190] sm:$0xff]
    %v2685 = vld [vmem:[%s2377 + $0x1a8] sm:$0xff]
    %v2686 = vld [vmem:[%s2377 + $0x1b0] sm:$0xff]
    %v2687 = vld [vmem:[%s2377 + $0x1c8] sm:$0xff]
    %v2688 = vld [vmem:[%s2377 + $0x1d0] sm:$0xff]
    %v2689 = vld [vmem:[%s2377 + $0x1e8] sm:$0xff]
    %v2690 = vld [vmem:[%s2377 + $0x1f0] sm:$0xff]
    %v2691 = vld [vmem:[%s5 + $0x1c0] sm:$0xff]
    %v2692 = vld [vmem:[%s5 + $0x1c8] sm:$0xff]
    %v2693 = vld [vmem:[%s5 + $0x1d0] sm:$0xff]
    %v2694 = vld [vmem:[%s5 + $0x1d8] sm:$0xff]
    %v2695 = vld [vmem:[%s5 + $0x1e0] sm:$0xff]
    %v2696 = vld [vmem:[%s5 + $0x1e8] sm:$0xff]
    %v2697 = vld [vmem:[%s5 + $0x1f0] sm:$0xff]
    %v2698 = vld [vmem:[%s5 + $0x1f8] sm:$0xff]
    %v2700 = vsel %vm300, %v2659, 0
    %v2703 = vsel %vm300, %v2660, 0
    %v2706 = vsel %vm300, %v2661, 0
    %v2709 = vsel %vm300, %v2662, 0
    %v2712 = vsel %vm300, %v2663, 0
    %v2715 = vsel %vm300, %v2664, 0
    %v2718 = vsel %vm300, %v2665, 0
    %v2721 = vsel %vm300, %v2666, 0
    %v2724 = vsel %vm300, %v2667, 0
    %v2727 = vsel %vm300, %v2668, 0
    %v2730 = vsel %vm300, %v2669, 0
    %v2733 = vsel %vm300, %v2670, 0
    %v2736 = vsel %vm300, %v2671, 0
    %v2739 = vsel %vm300, %v2672, 0
    %v2742 = vsel %vm300, %v2673, 0
    %v2745 = vsel %vm300, %v2674, 0
    %v2748 = vsel %vm300, %v2675, 0
    %v2751 = vsel %vm300, %v2676, 0
    %v2754 = vsel %vm300, %v2677, 0
    %v2757 = vsel %vm300, %v2678, 0
    %v2760 = vsel %vm300, %v2679, 0
    %v2763 = vsel %vm300, %v2680, 0
    %v2766 = vsel %vm300, %v2681, 0
    %v2769 = vsel %vm300, %v2682, 0
    %v2772 = vsel %vm300, %v2683, 0
    %v2775 = vsel %vm300, %v2684, 0
    %v2778 = vsel %vm300, %v2685, 0
    %v2781 = vsel %vm300, %v2686, 0
    %v2784 = vsel %vm300, %v2687, 0
    %v2787 = vsel %vm300, %v2688, 0
    %v2790 = vsel %vm300, %v2689, 0
    %v2793 = vsel %vm300, %v2690, 0
    %2795 = vmatpush.msra.mxu0 0.0
    %2796 = vmatpush.msra.mxu0 0.0
    %2797 = vmatpush.msra.mxu0 0.0
    %2798 = vmatpush.msra.mxu0 0.0
    %2799 = vmatpush.msra.mxu0 0.0
    %2800 = vmatpush.msra.mxu0 0.0
    %2801 = vmatpush.msra.mxu0 0.0
    %2802 = vmatpush.msra.mxu0 0.0
    %2803 = vmatpush.msra.mxu0 %v2698
    %2804 = vmatpush.msra.mxu0 %v2697
    %2805 = vmatpush.msra.mxu0 %v2696
    %2806 = vmatpush.msra.mxu0 %v2695
    %2807 = vmatpush.msra.mxu0 %v2694
    %2808 = vmatpush.msra.mxu0 %v2693
    %2809 = vmatpush.msra.mxu0 %v2692
    %2810 = vmatpush.msra.mxu0 %v2691
    %2811 = vmatmul.f32.gmra.mxu0 %v2700
    %v2812 = vpop.f32.mrf.mxu0
    %v2813 = vadd.f32 0.0, %v2812
    %2814 = vmatmul.f32.gmra.mxu0 %v2703
    %v2815 = vpop.f32.mrf.mxu0
    %v2816 = vadd.f32 0.0, %v2815
    %2817 = vmatmul.f32.gmra.mxu0 %v2706
    %v2818 = vpop.f32.mrf.mxu0
    %v2819 = vadd.f32 0.0, %v2818
    %2820 = vmatmul.f32.gmra.mxu0 %v2709
    %v2821 = vpop.f32.mrf.mxu0
    %v2822 = vadd.f32 0.0, %v2821
    %2823 = vmatmul.f32.gmra.mxu0 %v2712
    %v2824 = vpop.f32.mrf.mxu0
    %v2825 = vadd.f32 0.0, %v2824
    %2826 = vmatmul.f32.gmra.mxu0 %v2715
    %v2827 = vpop.f32.mrf.mxu0
    %v2828 = vadd.f32 0.0, %v2827
    %2829 = vmatmul.f32.gmra.mxu0 %v2718
    %v2830 = vpop.f32.mrf.mxu0
    %v2831 = vadd.f32 0.0, %v2830
    %2832 = vmatmul.f32.gmra.mxu0 %v2721
    %v2833 = vpop.f32.mrf.mxu0
    %v2834 = vadd.f32 0.0, %v2833
    %2835 = vmatmul.f32.gmra.mxu0 %v2724
    %v2836 = vpop.f32.mrf.mxu0
    %v2837 = vadd.f32 0.0, %v2836
    %2838 = vmatmul.f32.gmra.mxu0 %v2727
    %v2839 = vpop.f32.mrf.mxu0
    %v2840 = vadd.f32 0.0, %v2839
    %2841 = vmatmul.f32.gmra.mxu0 %v2730
    %v2842 = vpop.f32.mrf.mxu0
    %v2843 = vadd.f32 0.0, %v2842
    %2844 = vmatmul.f32.gmra.mxu0 %v2733
    %v2845 = vpop.f32.mrf.mxu0
    %v2846 = vadd.f32 0.0, %v2845
    %2847 = vmatmul.f32.gmra.mxu0 %v2736
    %v2848 = vpop.f32.mrf.mxu0
    %v2849 = vadd.f32 0.0, %v2848
    %2850 = vmatmul.f32.gmra.mxu0 %v2739
    %v2851 = vpop.f32.mrf.mxu0
    %v2852 = vadd.f32 0.0, %v2851
    %2853 = vmatmul.f32.gmra.mxu0 %v2742
    %v2854 = vpop.f32.mrf.mxu0
    %v2855 = vadd.f32 0.0, %v2854
    %2856 = vmatmul.f32.gmra.mxu0 %v2745
    %v2857 = vpop.f32.mrf.mxu0
    %v2858 = vadd.f32 0.0, %v2857
    %2859 = vmatmul.f32.gmra.mxu0 %v2748
    %v2860 = vpop.f32.mrf.mxu0
    %v2861 = vadd.f32 0.0, %v2860
    %2862 = vmatmul.f32.gmra.mxu0 %v2751
    %v2863 = vpop.f32.mrf.mxu0
    %v2864 = vadd.f32 0.0, %v2863
    %2865 = vmatmul.f32.gmra.mxu0 %v2754
    %v2866 = vpop.f32.mrf.mxu0
    %v2867 = vadd.f32 0.0, %v2866
    %2868 = vmatmul.f32.gmra.mxu0 %v2757
    %v2869 = vpop.f32.mrf.mxu0
    %v2870 = vadd.f32 0.0, %v2869
    %2871 = vmatmul.f32.gmra.mxu0 %v2760
    %v2872 = vpop.f32.mrf.mxu0
    %v2873 = vadd.f32 0.0, %v2872
    %2874 = vmatmul.f32.gmra.mxu0 %v2763
    %v2875 = vpop.f32.mrf.mxu0
    %v2876 = vadd.f32 0.0, %v2875
    %2877 = vmatmul.f32.gmra.mxu0 %v2766
    %v2878 = vpop.f32.mrf.mxu0
    %v2879 = vadd.f32 0.0, %v2878
    %2880 = vmatmul.f32.gmra.mxu0 %v2769
    %v2881 = vpop.f32.mrf.mxu0
    %v2882 = vadd.f32 0.0, %v2881
    %2883 = vmatmul.f32.gmra.mxu0 %v2772
    %v2884 = vpop.f32.mrf.mxu0
    %v2885 = vadd.f32 0.0, %v2884
    %2886 = vmatmul.f32.gmra.mxu0 %v2775
    %v2887 = vpop.f32.mrf.mxu0
    %v2888 = vadd.f32 0.0, %v2887
    %2889 = vmatmul.f32.gmra.mxu0 %v2778
    %v2890 = vpop.f32.mrf.mxu0
    %v2891 = vadd.f32 0.0, %v2890
    %2892 = vmatmul.f32.gmra.mxu0 %v2781
    %v2893 = vpop.f32.mrf.mxu0
    %v2894 = vadd.f32 0.0, %v2893
    %2895 = vmatmul.f32.gmra.mxu0 %v2784
    %v2896 = vpop.f32.mrf.mxu0
    %v2897 = vadd.f32 0.0, %v2896
    %2898 = vmatmul.f32.gmra.mxu0 %v2787
    %v2899 = vpop.f32.mrf.mxu0
    %v2900 = vadd.f32 0.0, %v2899
    %2901 = vmatmul.f32.gmra.mxu0 %v2790
    %v2902 = vpop.f32.mrf.mxu0
    %v2903 = vadd.f32 0.0, %v2902
    %2904 = vmatmul.f32.gmra.mxu0 %v2793
    %v2905 = vpop.f32.mrf.mxu0
    %v2906 = vadd.f32 0.0, %v2905
    %2907 = vdwg.mxu0
    %v2908 = vadd.f32 %v2627, %v2813
    %v2909 = vadd.f32 %v2628, %v2816
    %v2910 = vadd.f32 %v2629, %v2819
    %v2911 = vadd.f32 %v2630, %v2822
    %v2912 = vadd.f32 %v2631, %v2825
    %v2913 = vadd.f32 %v2632, %v2828
    %v2914 = vadd.f32 %v2633, %v2831
    %v2915 = vadd.f32 %v2634, %v2834
    %v2916 = vadd.f32 %v2635, %v2837
    %v2917 = vadd.f32 %v2636, %v2840
    %v2918 = vadd.f32 %v2637, %v2843
    %v2919 = vadd.f32 %v2638, %v2846
    %v2920 = vadd.f32 %v2639, %v2849
    %v2921 = vadd.f32 %v2640, %v2852
    %v2922 = vadd.f32 %v2641, %v2855
    %v2923 = vadd.f32 %v2642, %v2858
    %v2924 = vadd.f32 %v2643, %v2861
    %v2925 = vadd.f32 %v2644, %v2864
    %v2926 = vadd.f32 %v2645, %v2867
    %v2927 = vadd.f32 %v2646, %v2870
    %v2928 = vadd.f32 %v2647, %v2873
    %v2929 = vadd.f32 %v2648, %v2876
    %v2930 = vadd.f32 %v2649, %v2879
    %v2931 = vadd.f32 %v2650, %v2882
    %v2932 = vadd.f32 %v2651, %v2885
    %v2933 = vadd.f32 %v2652, %v2888
    %v2934 = vadd.f32 %v2653, %v2891
    %v2935 = vadd.f32 %v2654, %v2894
    %v2936 = vadd.f32 %v2655, %v2897
    %v2937 = vadd.f32 %v2656, %v2900
    %v2938 = vadd.f32 %v2657, %v2903
    %v2939 = vadd.f32 %v2658, %v2906
    %v2940 = vld [vmem:[%s2377 + $0x9] sm:$0xff]
    %v2941 = vld [vmem:[%s2377 + $0x11] sm:$0xff]
    %v2942 = vld [vmem:[%s2377 + $0x29] sm:$0xff]
    %v2943 = vld [vmem:[%s2377 + $0x31] sm:$0xff]
    %v2944 = vld [vmem:[%s2377 + $0x49] sm:$0xff]
    %v2945 = vld [vmem:[%s2377 + $0x51] sm:$0xff]
    %v2946 = vld [vmem:[%s2377 + $0x69] sm:$0xff]
    %v2947 = vld [vmem:[%s2377 + $0x71] sm:$0xff]
    %v2948 = vld [vmem:[%s2377 + $0x89] sm:$0xff]
    %v2949 = vld [vmem:[%s2377 + $0x91] sm:$0xff]
    %v2950 = vld [vmem:[%s2377 + $0xa9] sm:$0xff]
    %v2951 = vld [vmem:[%s2377 + $0xb1] sm:$0xff]
    %v2952 = vld [vmem:[%s2377 + $0xc9] sm:$0xff]
    %v2953 = vld [vmem:[%s2377 + $0xd1] sm:$0xff]
    %v2954 = vld [vmem:[%s2377 + $0xe9] sm:$0xff]
    %v2955 = vld [vmem:[%s2377 + $0xf1] sm:$0xff]
    %v2956 = vld [vmem:[%s2377 + $0x109] sm:$0xff]
    %v2957 = vld [vmem:[%s2377 + $0x111] sm:$0xff]
    %v2958 = vld [vmem:[%s2377 + $0x129] sm:$0xff]
    %v2959 = vld [vmem:[%s2377 + $0x131] sm:$0xff]
    %v2960 = vld [vmem:[%s2377 + $0x149] sm:$0xff]
    %v2961 = vld [vmem:[%s2377 + $0x151] sm:$0xff]
    %v2962 = vld [vmem:[%s2377 + $0x169] sm:$0xff]
    %v2963 = vld [vmem:[%s2377 + $0x171] sm:$0xff]
    %v2964 = vld [vmem:[%s2377 + $0x189] sm:$0xff]
    %v2965 = vld [vmem:[%s2377 + $0x191] sm:$0xff]
    %v2966 = vld [vmem:[%s2377 + $0x1a9] sm:$0xff]
    %v2967 = vld [vmem:[%s2377 + $0x1b1] sm:$0xff]
    %v2968 = vld [vmem:[%s2377 + $0x1c9] sm:$0xff]
    %v2969 = vld [vmem:[%s2377 + $0x1d1] sm:$0xff]
    %v2970 = vld [vmem:[%s2377 + $0x1e9] sm:$0xff]
    %v2971 = vld [vmem:[%s2377 + $0x1f1] sm:$0xff]
    %v2972 = vld [vmem:[%s5 + $0x200] sm:$0xff]
    %v2973 = vld [vmem:[%s5 + $0x208] sm:$0xff]
    %v2974 = vld [vmem:[%s5 + $0x210] sm:$0xff]
    %v2975 = vld [vmem:[%s5 + $0x218] sm:$0xff]
    %v2976 = vld [vmem:[%s5 + $0x220] sm:$0xff]
    %v2977 = vld [vmem:[%s5 + $0x228] sm:$0xff]
    %v2978 = vld [vmem:[%s5 + $0x230] sm:$0xff]
    %v2979 = vld [vmem:[%s5 + $0x238] sm:$0xff]
    %v2981 = vsel %vm300, %v2940, 0
    %v2984 = vsel %vm300, %v2941, 0
    %v2987 = vsel %vm300, %v2942, 0
    %v2990 = vsel %vm300, %v2943, 0
    %v2993 = vsel %vm300, %v2944, 0
    %v2996 = vsel %vm300, %v2945, 0
    %v2999 = vsel %vm300, %v2946, 0
    %v3002 = vsel %vm300, %v2947, 0
    %v3005 = vsel %vm300, %v2948, 0
    %v3008 = vsel %vm300, %v2949, 0
    %v3011 = vsel %vm300, %v2950, 0
    %v3014 = vsel %vm300, %v2951, 0
    %v3017 = vsel %vm300, %v2952, 0
    %v3020 = vsel %vm300, %v2953, 0
    %v3023 = vsel %vm300, %v2954, 0
    %v3026 = vsel %vm300, %v2955, 0
    %v3029 = vsel %vm300, %v2956, 0
    %v3032 = vsel %vm300, %v2957, 0
    %v3035 = vsel %vm300, %v2958, 0
    %v3038 = vsel %vm300, %v2959, 0
    %v3041 = vsel %vm300, %v2960, 0
    %v3044 = vsel %vm300, %v2961, 0
    %v3047 = vsel %vm300, %v2962, 0
    %v3050 = vsel %vm300, %v2963, 0
    %v3053 = vsel %vm300, %v2964, 0
    %v3056 = vsel %vm300, %v2965, 0
    %v3059 = vsel %vm300, %v2966, 0
    %v3062 = vsel %vm300, %v2967, 0
    %v3065 = vsel %vm300, %v2968, 0
    %v3068 = vsel %vm300, %v2969, 0
    %v3071 = vsel %vm300, %v2970, 0
    %v3074 = vsel %vm300, %v2971, 0
    %3076 = vmatpush.msra.mxu0 0.0
    %3077 = vmatpush.msra.mxu0 0.0
    %3078 = vmatpush.msra.mxu0 0.0
    %3079 = vmatpush.msra.mxu0 0.0
    %3080 = vmatpush.msra.mxu0 0.0
    %3081 = vmatpush.msra.mxu0 0.0
    %3082 = vmatpush.msra.mxu0 0.0
    %3083 = vmatpush.msra.mxu0 0.0
    %3084 = vmatpush.msra.mxu0 %v2979
    %3085 = vmatpush.msra.mxu0 %v2978
    %3086 = vmatpush.msra.mxu0 %v2977
    %3087 = vmatpush.msra.mxu0 %v2976
    %3088 = vmatpush.msra.mxu0 %v2975
    %3089 = vmatpush.msra.mxu0 %v2974
    %3090 = vmatpush.msra.mxu0 %v2973
    %3091 = vmatpush.msra.mxu0 %v2972
    %3092 = vmatmul.f32.gmra.mxu0 %v2981
    %v3093 = vpop.f32.mrf.mxu0
    %v3094 = vadd.f32 0.0, %v3093
    %3095 = vmatmul.f32.gmra.mxu0 %v2984
    %v3096 = vpop.f32.mrf.mxu0
    %v3097 = vadd.f32 0.0, %v3096
    %3098 = vmatmul.f32.gmra.mxu0 %v2987
    %v3099 = vpop.f32.mrf.mxu0
    %v3100 = vadd.f32 0.0, %v3099
    %3101 = vmatmul.f32.gmra.mxu0 %v2990
    %v3102 = vpop.f32.mrf.mxu0
    %v3103 = vadd.f32 0.0, %v3102
    %3104 = vmatmul.f32.gmra.mxu0 %v2993
    %v3105 = vpop.f32.mrf.mxu0
    %v3106 = vadd.f32 0.0, %v3105
    %3107 = vmatmul.f32.gmra.mxu0 %v2996
    %v3108 = vpop.f32.mrf.mxu0
    %v3109 = vadd.f32 0.0, %v3108
    %3110 = vmatmul.f32.gmra.mxu0 %v2999
    %v3111 = vpop.f32.mrf.mxu0
    %v3112 = vadd.f32 0.0, %v3111
    %3113 = vmatmul.f32.gmra.mxu0 %v3002
    %v3114 = vpop.f32.mrf.mxu0
    %v3115 = vadd.f32 0.0, %v3114
    %3116 = vmatmul.f32.gmra.mxu0 %v3005
    %v3117 = vpop.f32.mrf.mxu0
    %v3118 = vadd.f32 0.0, %v3117
    %3119 = vmatmul.f32.gmra.mxu0 %v3008
    %v3120 = vpop.f32.mrf.mxu0
    %v3121 = vadd.f32 0.0, %v3120
    %3122 = vmatmul.f32.gmra.mxu0 %v3011
    %v3123 = vpop.f32.mrf.mxu0
    %v3124 = vadd.f32 0.0, %v3123
    %3125 = vmatmul.f32.gmra.mxu0 %v3014
    %v3126 = vpop.f32.mrf.mxu0
    %v3127 = vadd.f32 0.0, %v3126
    %3128 = vmatmul.f32.gmra.mxu0 %v3017
    %v3129 = vpop.f32.mrf.mxu0
    %v3130 = vadd.f32 0.0, %v3129
    %3131 = vmatmul.f32.gmra.mxu0 %v3020
    %v3132 = vpop.f32.mrf.mxu0
    %v3133 = vadd.f32 0.0, %v3132
    %3134 = vmatmul.f32.gmra.mxu0 %v3023
    %v3135 = vpop.f32.mrf.mxu0
    %v3136 = vadd.f32 0.0, %v3135
    %3137 = vmatmul.f32.gmra.mxu0 %v3026
    %v3138 = vpop.f32.mrf.mxu0
    %v3139 = vadd.f32 0.0, %v3138
    %3140 = vmatmul.f32.gmra.mxu0 %v3029
    %v3141 = vpop.f32.mrf.mxu0
    %v3142 = vadd.f32 0.0, %v3141
    %3143 = vmatmul.f32.gmra.mxu0 %v3032
    %v3144 = vpop.f32.mrf.mxu0
    %v3145 = vadd.f32 0.0, %v3144
    %3146 = vmatmul.f32.gmra.mxu0 %v3035
    %v3147 = vpop.f32.mrf.mxu0
    %v3148 = vadd.f32 0.0, %v3147
    %3149 = vmatmul.f32.gmra.mxu0 %v3038
    %v3150 = vpop.f32.mrf.mxu0
    %v3151 = vadd.f32 0.0, %v3150
    %3152 = vmatmul.f32.gmra.mxu0 %v3041
    %v3153 = vpop.f32.mrf.mxu0
    %v3154 = vadd.f32 0.0, %v3153
    %3155 = vmatmul.f32.gmra.mxu0 %v3044
    %v3156 = vpop.f32.mrf.mxu0
    %v3157 = vadd.f32 0.0, %v3156
    %3158 = vmatmul.f32.gmra.mxu0 %v3047
    %v3159 = vpop.f32.mrf.mxu0
    %v3160 = vadd.f32 0.0, %v3159
    %3161 = vmatmul.f32.gmra.mxu0 %v3050
    %v3162 = vpop.f32.mrf.mxu0
    %v3163 = vadd.f32 0.0, %v3162
    %3164 = vmatmul.f32.gmra.mxu0 %v3053
    %v3165 = vpop.f32.mrf.mxu0
    %v3166 = vadd.f32 0.0, %v3165
    %3167 = vmatmul.f32.gmra.mxu0 %v3056
    %v3168 = vpop.f32.mrf.mxu0
    %v3169 = vadd.f32 0.0, %v3168
    %3170 = vmatmul.f32.gmra.mxu0 %v3059
    %v3171 = vpop.f32.mrf.mxu0
    %v3172 = vadd.f32 0.0, %v3171
    %3173 = vmatmul.f32.gmra.mxu0 %v3062
    %v3174 = vpop.f32.mrf.mxu0
    %v3175 = vadd.f32 0.0, %v3174
    %3176 = vmatmul.f32.gmra.mxu0 %v3065
    %v3177 = vpop.f32.mrf.mxu0
    %v3178 = vadd.f32 0.0, %v3177
    %3179 = vmatmul.f32.gmra.mxu0 %v3068
    %v3180 = vpop.f32.mrf.mxu0
    %v3181 = vadd.f32 0.0, %v3180
    %3182 = vmatmul.f32.gmra.mxu0 %v3071
    %v3183 = vpop.f32.mrf.mxu0
    %v3184 = vadd.f32 0.0, %v3183
    %3185 = vmatmul.f32.gmra.mxu0 %v3074
    %v3186 = vpop.f32.mrf.mxu0
    %v3187 = vadd.f32 0.0, %v3186
    %3188 = vdwg.mxu0
    %v3189 = vadd.f32 %v2908, %v3094
    %v3190 = vadd.f32 %v2909, %v3097
    %v3191 = vadd.f32 %v2910, %v3100
    %v3192 = vadd.f32 %v2911, %v3103
    %v3193 = vadd.f32 %v2912, %v3106
    %v3194 = vadd.f32 %v2913, %v3109
    %v3195 = vadd.f32 %v2914, %v3112
    %v3196 = vadd.f32 %v2915, %v3115
    %v3197 = vadd.f32 %v2916, %v3118
    %v3198 = vadd.f32 %v2917, %v3121
    %v3199 = vadd.f32 %v2918, %v3124
    %v3200 = vadd.f32 %v2919, %v3127
    %v3201 = vadd.f32 %v2920, %v3130
    %v3202 = vadd.f32 %v2921, %v3133
    %v3203 = vadd.f32 %v2922, %v3136
    %v3204 = vadd.f32 %v2923, %v3139
    %v3205 = vadd.f32 %v2924, %v3142
    %v3206 = vadd.f32 %v2925, %v3145
    %v3207 = vadd.f32 %v2926, %v3148
    %v3208 = vadd.f32 %v2927, %v3151
    %v3209 = vadd.f32 %v2928, %v3154
    %v3210 = vadd.f32 %v2929, %v3157
    %v3211 = vadd.f32 %v2930, %v3160
    %v3212 = vadd.f32 %v2931, %v3163
    %v3213 = vadd.f32 %v2932, %v3166
    %v3214 = vadd.f32 %v2933, %v3169
    %v3215 = vadd.f32 %v2934, %v3172
    %v3216 = vadd.f32 %v2935, %v3175
    %v3217 = vadd.f32 %v2936, %v3178
    %v3218 = vadd.f32 %v2937, %v3181
    %v3219 = vadd.f32 %v2938, %v3184
    %v3220 = vadd.f32 %v2939, %v3187
    %v3221 = vld [vmem:[%s6] sm:$0x1]
    %v3223 = vperm.slane %v3221, 0
    %v3225 = vadd.f32 %v3189, %v3223
    %v3226 = vadd.f32 %v3190, %v3223
    %v3227 = vadd.f32 %v3191, %v3223
    %v3228 = vadd.f32 %v3192, %v3223
    %v3229 = vadd.f32 %v3193, %v3223
    %v3230 = vadd.f32 %v3194, %v3223
    %v3231 = vadd.f32 %v3195, %v3223
    %v3232 = vadd.f32 %v3196, %v3223
    %v3233 = vadd.f32 %v3197, %v3223
    %v3234 = vadd.f32 %v3198, %v3223
    %v3235 = vadd.f32 %v3199, %v3223
    %v3236 = vadd.f32 %v3200, %v3223
    %v3237 = vadd.f32 %v3201, %v3223
    %v3238 = vadd.f32 %v3202, %v3223
    %v3239 = vadd.f32 %v3203, %v3223
    %v3240 = vadd.f32 %v3204, %v3223
    %v3241 = vadd.f32 %v3205, %v3223
    %v3242 = vadd.f32 %v3206, %v3223
    %v3243 = vadd.f32 %v3207, %v3223
    %v3244 = vadd.f32 %v3208, %v3223
    %v3245 = vadd.f32 %v3209, %v3223
    %v3246 = vadd.f32 %v3210, %v3223
    %v3247 = vadd.f32 %v3211, %v3223
    %v3248 = vadd.f32 %v3212, %v3223
    %v3249 = vadd.f32 %v3213, %v3223
    %v3250 = vadd.f32 %v3214, %v3223
    %v3251 = vadd.f32 %v3215, %v3223
    %v3252 = vadd.f32 %v3216, %v3223
    %v3253 = vadd.f32 %v3217, %v3223
    %v3254 = vadd.f32 %v3218, %v3223
    %v3255 = vadd.f32 %v3219, %v3223
    %v3256 = vadd.f32 %v3220, %v3223
    %v3257 = vsel %vm300, %v3225, 0.0
    %v3258 = vsel %vm300, %v3226, 0.0
    %v3259 = vadd.f32 %v3257, %v3258
    %v3260 = vsel %vm300, %v3227, 0.0
    %v3261 = vadd.f32 %v3259, %v3260
    %v3262 = vsel %vm300, %v3228, 0.0
    %v3263 = vadd.f32 %v3261, %v3262
    %v3264 = vsel %vm300, %v3229, 0.0
    %v3265 = vadd.f32 %v3263, %v3264
    %v3266 = vsel %vm300, %v3230, 0.0
    %v3267 = vadd.f32 %v3265, %v3266
    %v3268 = vsel %vm300, %v3231, 0.0
    %v3269 = vadd.f32 %v3267, %v3268
    %v3270 = vsel %vm300, %v3232, 0.0
    %v3271 = vadd.f32 %v3269, %v3270
    %v3272 = vsel %vm300, %v3233, 0.0
    %v3273 = vadd.f32 %v3271, %v3272
    %v3274 = vsel %vm300, %v3234, 0.0
    %v3275 = vadd.f32 %v3273, %v3274
    %v3276 = vsel %vm300, %v3235, 0.0
    %v3277 = vadd.f32 %v3275, %v3276
    %v3278 = vsel %vm300, %v3236, 0.0
    %v3279 = vadd.f32 %v3277, %v3278
    %v3280 = vsel %vm300, %v3237, 0.0
    %v3281 = vadd.f32 %v3279, %v3280
    %v3282 = vsel %vm300, %v3238, 0.0
    %v3283 = vadd.f32 %v3281, %v3282
    %v3284 = vsel %vm300, %v3239, 0.0
    %v3285 = vadd.f32 %v3283, %v3284
    %v3286 = vsel %vm300, %v3240, 0.0
    %v3287 = vadd.f32 %v3285, %v3286
    %v3288 = vsel %vm300, %v3241, 0.0
    %v3289 = vadd.f32 %v3287, %v3288
    %v3290 = vsel %vm300, %v3242, 0.0
    %v3291 = vadd.f32 %v3289, %v3290
    %v3292 = vsel %vm300, %v3243, 0.0
    %v3293 = vadd.f32 %v3291, %v3292
    %v3294 = vsel %vm300, %v3244, 0.0
    %v3295 = vadd.f32 %v3293, %v3294
    %v3296 = vsel %vm300, %v3245, 0.0
    %v3297 = vadd.f32 %v3295, %v3296
    %v3298 = vsel %vm300, %v3246, 0.0
    %v3299 = vadd.f32 %v3297, %v3298
    %v3300 = vsel %vm300, %v3247, 0.0
    %v3301 = vadd.f32 %v3299, %v3300
    %v3302 = vsel %vm300, %v3248, 0.0
    %v3303 = vadd.f32 %v3301, %v3302
    %v3304 = vsel %vm300, %v3249, 0.0
    %v3305 = vadd.f32 %v3303, %v3304
    %v3306 = vsel %vm300, %v3250, 0.0
    %v3307 = vadd.f32 %v3305, %v3306
    %v3308 = vsel %vm300, %v3251, 0.0
    %v3309 = vadd.f32 %v3307, %v3308
    %v3310 = vsel %vm300, %v3252, 0.0
    %v3311 = vadd.f32 %v3309, %v3310
    %v3312 = vsel %vm300, %v3253, 0.0
    %v3313 = vadd.f32 %v3311, %v3312
    %v3314 = vsel %vm300, %v3254, 0.0
    %v3315 = vadd.f32 %v3313, %v3314
    %v3316 = vsel %vm300, %v3255, 0.0
    %v3317 = vadd.f32 %v3315, %v3316
    %v3318 = vsel %vm300, %v3256, 0.0
    %v3319 = vadd.f32 %v3317, %v3318
    %v3320 = vrot.slane %v3319, 4
    %v3321 = vadd.f32 %v3319, %v3320
    %v3322 = vrot.slane %v3321, 2
    %v3323 = vadd.f32 %v3321, %v3322
    %v3324 = vrot.slane %v3323, 1
    %v3325 = vadd.f32 %v3323, %v3324
    %v3326 = vmul.f32 %v3225, %v3225
    %v3327 = vmul.f32 %v3226, %v3226
    %v3328 = vmul.f32 %v3227, %v3227
    %v3329 = vmul.f32 %v3228, %v3228
    %v3330 = vmul.f32 %v3229, %v3229
    %v3331 = vmul.f32 %v3230, %v3230
    %v3332 = vmul.f32 %v3231, %v3231
    %v3333 = vmul.f32 %v3232, %v3232
    %v3334 = vmul.f32 %v3233, %v3233
    %v3335 = vmul.f32 %v3234, %v3234
    %v3336 = vmul.f32 %v3235, %v3235
    %v3337 = vmul.f32 %v3236, %v3236
    %v3338 = vmul.f32 %v3237, %v3237
    %v3339 = vmul.f32 %v3238, %v3238
    %v3340 = vmul.f32 %v3239, %v3239
    %v3341 = vmul.f32 %v3240, %v3240
    %v3342 = vmul.f32 %v3241, %v3241
    %v3343 = vmul.f32 %v3242, %v3242
    %v3344 = vmul.f32 %v3243, %v3243
    %v3345 = vmul.f32 %v3244, %v3244
    %v3346 = vmul.f32 %v3245, %v3245
    %v3347 = vmul.f32 %v3246, %v3246
    %v3348 = vmul.f32 %v3247, %v3247
    %v3349 = vmul.f32 %v3248, %v3248
    %v3350 = vmul.f32 %v3249, %v3249
    %v3351 = vmul.f32 %v3250, %v3250
    %v3352 = vmul.f32 %v3251, %v3251
    %v3353 = vmul.f32 %v3252, %v3252
    %v3354 = vmul.f32 %v3253, %v3253
    %v3355 = vmul.f32 %v3254, %v3254
    %v3356 = vmul.f32 %v3255, %v3255
    %v3357 = vmul.f32 %v3256, %v3256
    %v3358 = vsel %vm300, %v3326, 0.0
    %v3359 = vsel %vm300, %v3327, 0.0
    %v3360 = vadd.f32 %v3358, %v3359
    %v3361 = vsel %vm300, %v3328, 0.0
    %v3362 = vadd.f32 %v3360, %v3361
    %v3363 = vsel %vm300, %v3329, 0.0
    %v3364 = vadd.f32 %v3362, %v3363
    %v3365 = vsel %vm300, %v3330, 0.0
    %v3366 = vadd.f32 %v3364, %v3365
    %v3367 = vsel %vm300, %v3331, 0.0
    %v3368 = vadd.f32 %v3366, %v3367
    %v3369 = vsel %vm300, %v3332, 0.0
    %v3370 = vadd.f32 %v3368, %v3369
    %v3371 = vsel %vm300, %v3333, 0.0
    %v3372 = vadd.f32 %v3370, %v3371
    %v3373 = vsel %vm300, %v3334, 0.0
    %v3374 = vadd.f32 %v3372, %v3373
    %v3375 = vsel %vm300, %v3335, 0.0
    %v3376 = vadd.f32 %v3374, %v3375
    %v3377 = vsel %vm300, %v3336, 0.0
    %v3378 = vadd.f32 %v3376, %v3377
    %v3379 = vsel %vm300, %v3337, 0.0
    %v3380 = vadd.f32 %v3378, %v3379
    %v3381 = vsel %vm300, %v3338, 0.0
    %v3382 = vadd.f32 %v3380, %v3381
    %v3383 = vsel %vm300, %v3339, 0.0
    %v3384 = vadd.f32 %v3382, %v3383
    %v3385 = vsel %vm300, %v3340, 0.0
    %v3386 = vadd.f32 %v3384, %v3385
    %v3387 = vsel %vm300, %v3341, 0.0
    %v3388 = vadd.f32 %v3386, %v3387
    %v3389 = vsel %vm300, %v3342, 0.0
    %v3390 = vadd.f32 %v3388, %v3389
    %v3391 = vsel %vm300, %v3343, 0.0
    %v3392 = vadd.f32 %v3390, %v3391
    %v3393 = vsel %vm300, %v3344, 0.0
    %v3394 = vadd.f32 %v3392, %v3393
    %v3395 = vsel %vm300, %v3345, 0.0
    %v3396 = vadd.f32 %v3394, %v3395
    %v3397 = vsel %vm300, %v3346, 0.0
    %v3398 = vadd.f32 %v3396, %v3397
    %v3399 = vsel %vm300, %v3347, 0.0
    %v3400 = vadd.f32 %v3398, %v3399
    %v3401 = vsel %vm300, %v3348, 0.0
    %v3402 = vadd.f32 %v3400, %v3401
    %v3403 = vsel %vm300, %v3349, 0.0
    %v3404 = vadd.f32 %v3402, %v3403
    %v3405 = vsel %vm300, %v3350, 0.0
    %v3406 = vadd.f32 %v3404, %v3405
    %v3407 = vsel %vm300, %v3351, 0.0
    %v3408 = vadd.f32 %v3406, %v3407
    %v3409 = vsel %vm300, %v3352, 0.0
    %v3410 = vadd.f32 %v3408, %v3409
    %v3411 = vsel %vm300, %v3353, 0.0
    %v3412 = vadd.f32 %v3410, %v3411
    %v3413 = vsel %vm300, %v3354, 0.0
    %v3414 = vadd.f32 %v3412, %v3413
    %v3415 = vsel %vm300, %v3355, 0.0
    %v3416 = vadd.f32 %v3414, %v3415
    %v3417 = vsel %vm300, %v3356, 0.0
    %v3418 = vadd.f32 %v3416, %v3417
    %v3419 = vsel %vm300, %v3357, 0.0
    %v3420 = vadd.f32 %v3418, %v3419
    %v3421 = vrot.slane %v3420, 4
    %v3422 = vadd.f32 %v3420, %v3421
    %v3423 = vrot.slane %v3422, 2
    %v3424 = vadd.f32 %v3422, %v3423
    %v3425 = vrot.slane %v3424, 1
    %v3426 = vadd.f32 %v3424, %v3425
    %3428 = vrot.lane.b32.xlu0 %v3325, 96
    %v3429 = vpop.permute.xlu0 %3428
    %v3431 = vadd.f32 %v3325, %v3429
    %3433 = vrot.lane.b32.xlu0 %v3431, 32
    %v3434 = vpop.permute.xlu0 %3433
    %v3436 = vsel %vm512, %v3431, %v3434
    %v3437 = vmul.f32 %v3436, 0.001953125
    %3439 = vrot.lane.b32.xlu0 %v3426, 96
    %v3440 = vpop.permute.xlu0 %3439
    %v3442 = vadd.f32 %v3426, %v3440
    %3444 = vrot.lane.b32.xlu0 %v3442, 32
    %v3445 = vpop.permute.xlu0 %3444
    %v3447 = vsel %vm512, %v3442, %v3445
    %v3448 = vmul.f32 %v3447, 0.001953125
    %v3449 = vmul.f32 %v3437, %v3437
    %v3450 = vsub.f32 %v3448, %v3449
    %v3451 = vmax.f32 %v3450, 0.0
    %v3452 = vperm.slane %v3437, 0
    %v3453 = vsub.f32 %v3225, %v3452
    %v3454 = vsub.f32 %v3226, %v3452
    %v3455 = vsub.f32 %v3227, %v3452
    %v3456 = vsub.f32 %v3228, %v3452
    %v3457 = vsub.f32 %v3229, %v3452
    %v3458 = vsub.f32 %v3230, %v3452
    %v3459 = vsub.f32 %v3231, %v3452
    %v3460 = vsub.f32 %v3232, %v3452
    %v3461 = vsub.f32 %v3233, %v3452
    %v3462 = vsub.f32 %v3234, %v3452
    %v3463 = vsub.f32 %v3235, %v3452
    %v3464 = vsub.f32 %v3236, %v3452
    %v3465 = vsub.f32 %v3237, %v3452
    %v3466 = vsub.f32 %v3238, %v3452
    %v3467 = vsub.f32 %v3239, %v3452
    %v3468 = vsub.f32 %v3240, %v3452
    %v3469 = vsub.f32 %v3241, %v3452
    %v3470 = vsub.f32 %v3242, %v3452
    %v3471 = vsub.f32 %v3243, %v3452
    %v3472 = vsub.f32 %v3244, %v3452
    %v3473 = vsub.f32 %v3245, %v3452
    %v3474 = vsub.f32 %v3246, %v3452
    %v3475 = vsub.f32 %v3247, %v3452
    %v3476 = vsub.f32 %v3248, %v3452
    %v3477 = vsub.f32 %v3249, %v3452
    %v3478 = vsub.f32 %v3250, %v3452
    %v3479 = vsub.f32 %v3251, %v3452
    %v3480 = vsub.f32 %v3252, %v3452
    %v3481 = vsub.f32 %v3253, %v3452
    %v3482 = vsub.f32 %v3254, %v3452
    %v3483 = vsub.f32 %v3255, %v3452
    %v3484 = vsub.f32 %v3256, %v3452
    %v3485 = vadd.f32 %v3451, 1e-05
    %v3486 = vrsqrt.pop %v3485
    %v3487 = vmul.f32 %v3486, %v3485
    %v3488 = vmul.f32 %v3487, %v3486
    %v3489 = vmul.f32 0.5, %v3488
    %v3490 = vsub.f32 1.5, %v3489
    %v3491 = vmul.f32 %v3486, %v3490
    %vm3492 = vweird.f32 %v3485
    %vm3493 = vweird.f32 %v3486
    %vm3494 = vmor %vm3492, %vm3493
    %v3495 = vsel %vm3494, %v3486, %v3491
    %v3496 = vld [vmem:[%s7] sm:$0x1]
    %v3497 = vmul.f32 %v3495, %v3496
    %v3498 = vperm.slane %v3497, 0
    %v3499 = vmul.f32 %v3453, %v3498
    %v3500 = vmul.f32 %v3454, %v3498
    %v3501 = vmul.f32 %v3455, %v3498
    %v3502 = vmul.f32 %v3456, %v3498
    %v3503 = vmul.f32 %v3457, %v3498
    %v3504 = vmul.f32 %v3458, %v3498
    %v3505 = vmul.f32 %v3459, %v3498
    %v3506 = vmul.f32 %v3460, %v3498
    %v3507 = vmul.f32 %v3461, %v3498
    %v3508 = vmul.f32 %v3462, %v3498
    %v3509 = vmul.f32 %v3463, %v3498
    %v3510 = vmul.f32 %v3464, %v3498
    %v3511 = vmul.f32 %v3465, %v3498
    %v3512 = vmul.f32 %v3466, %v3498
    %v3513 = vmul.f32 %v3467, %v3498
    %v3514 = vmul.f32 %v3468, %v3498
    %v3515 = vmul.f32 %v3469, %v3498
    %v3516 = vmul.f32 %v3470, %v3498
    %v3517 = vmul.f32 %v3471, %v3498
    %v3518 = vmul.f32 %v3472, %v3498
    %v3519 = vmul.f32 %v3473, %v3498
    %v3520 = vmul.f32 %v3474, %v3498
    %v3521 = vmul.f32 %v3475, %v3498
    %v3522 = vmul.f32 %v3476, %v3498
    %v3523 = vmul.f32 %v3477, %v3498
    %v3524 = vmul.f32 %v3478, %v3498
    %v3525 = vmul.f32 %v3479, %v3498
    %v3526 = vmul.f32 %v3480, %v3498
    %v3527 = vmul.f32 %v3481, %v3498
    %v3528 = vmul.f32 %v3482, %v3498
    %v3529 = vmul.f32 %v3483, %v3498
    %v3530 = vmul.f32 %v3484, %v3498
    %v3531 = vld [vmem:[%s8] sm:$0x1]
    %v3533 = vperm.slane %v3531, 0
    %v3535 = vadd.f32 %v3499, %v3533
    %v3536 = vadd.f32 %v3500, %v3533
    %v3537 = vadd.f32 %v3501, %v3533
    %v3538 = vadd.f32 %v3502, %v3533
    %v3539 = vadd.f32 %v3503, %v3533
    %v3540 = vadd.f32 %v3504, %v3533
    %v3541 = vadd.f32 %v3505, %v3533
    %v3542 = vadd.f32 %v3506, %v3533
    %v3543 = vadd.f32 %v3507, %v3533
    %v3544 = vadd.f32 %v3508, %v3533
    %v3545 = vadd.f32 %v3509, %v3533
    %v3546 = vadd.f32 %v3510, %v3533
    %v3547 = vadd.f32 %v3511, %v3533
    %v3548 = vadd.f32 %v3512, %v3533
    %v3549 = vadd.f32 %v3513, %v3533
    %v3550 = vadd.f32 %v3514, %v3533
    %v3551 = vadd.f32 %v3515, %v3533
    %v3552 = vadd.f32 %v3516, %v3533
    %v3553 = vadd.f32 %v3517, %v3533
    %v3554 = vadd.f32 %v3518, %v3533
    %v3555 = vadd.f32 %v3519, %v3533
    %v3556 = vadd.f32 %v3520, %v3533
    %v3557 = vadd.f32 %v3521, %v3533
    %v3558 = vadd.f32 %v3522, %v3533
    %v3559 = vadd.f32 %v3523, %v3533
    %v3560 = vadd.f32 %v3524, %v3533
    %v3561 = vadd.f32 %v3525, %v3533
    %v3562 = vadd.f32 %v3526, %v3533
    %v3563 = vadd.f32 %v3527, %v3533
    %v3564 = vadd.f32 %v3528, %v3533
    %v3565 = vadd.f32 %v3529, %v3533
    %v3566 = vadd.f32 %v3530, %v3533
    %v3567 = vld [vmem:[#allocation2] sm:$0xff]
    %v3568 = vld [vmem:[#allocation2 + $0x8] sm:$0xff]
    %v3569 = vld [vmem:[#allocation2 + $0x10] sm:$0xff]
    %v3570 = vld [vmem:[#allocation2 + $0x18] sm:$0xff]
    %v3571 = vld [vmem:[#allocation2 + $0x20] sm:$0xff]
    %v3572 = vld [vmem:[#allocation2 + $0x28] sm:$0xff]
    %v3573 = vld [vmem:[#allocation2 + $0x30] sm:$0xff]
    %v3574 = vld [vmem:[#allocation2 + $0x38] sm:$0xff]
    %v3575 = vld [vmem:[#allocation2 + $0x40] sm:$0xff]
    %v3576 = vld [vmem:[#allocation2 + $0x48] sm:$0xff]
    %v3577 = vld [vmem:[#allocation2 + $0x50] sm:$0xff]
    %v3578 = vld [vmem:[#allocation2 + $0x58] sm:$0xff]
    %v3579 = vld [vmem:[#allocation2 + $0x60] sm:$0xff]
    %v3580 = vld [vmem:[#allocation2 + $0x68] sm:$0xff]
    %v3581 = vld [vmem:[#allocation2 + $0x70] sm:$0xff]
    %v3582 = vld [vmem:[#allocation2 + $0x78] sm:$0xff]
    %v3583 = vld [vmem:[#allocation2 + $0x80] sm:$0xff]
    %v3584 = vld [vmem:[#allocation2 + $0x88] sm:$0xff]
    %v3585 = vld [vmem:[#allocation2 + $0x90] sm:$0xff]
    %v3586 = vld [vmem:[#allocation2 + $0x98] sm:$0xff]
    %v3587 = vld [vmem:[#allocation2 + $0xa0] sm:$0xff]
    %v3588 = vld [vmem:[#allocation2 + $0xa8] sm:$0xff]
    %v3589 = vld [vmem:[#allocation2 + $0xb0] sm:$0xff]
    %v3590 = vld [vmem:[#allocation2 + $0xb8] sm:$0xff]
    %v3591 = vld [vmem:[#allocation2 + $0xc0] sm:$0xff]
    %v3592 = vld [vmem:[#allocation2 + $0xc8] sm:$0xff]
    %v3593 = vld [vmem:[#allocation2 + $0xd0] sm:$0xff]
    %v3594 = vld [vmem:[#allocation2 + $0xd8] sm:$0xff]
    %v3595 = vld [vmem:[#allocation2 + $0xe0] sm:$0xff]
    %v3596 = vld [vmem:[#allocation2 + $0xe8] sm:$0xff]
    %v3597 = vld [vmem:[#allocation2 + $0xf0] sm:$0xff]
    %v3598 = vld [vmem:[#allocation2 + $0xf8] sm:$0xff]
    %v3599 = vadd.f32 %v3567, %v3535
    %v3600 = vadd.f32 %v3568, %v3536
    %v3601 = vadd.f32 %v3569, %v3537
    %v3602 = vadd.f32 %v3570, %v3538
    %v3603 = vadd.f32 %v3571, %v3539
    %v3604 = vadd.f32 %v3572, %v3540
    %v3605 = vadd.f32 %v3573, %v3541
    %v3606 = vadd.f32 %v3574, %v3542
    %v3607 = vadd.f32 %v3575, %v3543
    %v3608 = vadd.f32 %v3576, %v3544
    %v3609 = vadd.f32 %v3577, %v3545
    %v3610 = vadd.f32 %v3578, %v3546
    %v3611 = vadd.f32 %v3579, %v3547
    %v3612 = vadd.f32 %v3580, %v3548
    %v3613 = vadd.f32 %v3581, %v3549
    %v3614 = vadd.f32 %v3582, %v3550
    %v3615 = vadd.f32 %v3583, %v3551
    %v3616 = vadd.f32 %v3584, %v3552
    %v3617 = vadd.f32 %v3585, %v3553
    %v3618 = vadd.f32 %v3586, %v3554
    %v3619 = vadd.f32 %v3587, %v3555
    %v3620 = vadd.f32 %v3588, %v3556
    %v3621 = vadd.f32 %v3589, %v3557
    %v3622 = vadd.f32 %v3590, %v3558
    %v3623 = vadd.f32 %v3591, %v3559
    %v3624 = vadd.f32 %v3592, %v3560
    %v3625 = vadd.f32 %v3593, %v3561
    %v3626 = vadd.f32 %v3594, %v3562
    %v3627 = vadd.f32 %v3595, %v3563
    %v3628 = vadd.f32 %v3596, %v3564
    %v3629 = vadd.f32 %v3597, %v3565
    %v3630 = vadd.f32 %v3598, %v3566
    %v3631 = vmax.f32 %v3599, 0.0
    %v3632 = vmax.f32 %v3600, 0.0
    %v3633 = vmax.f32 %v3601, 0.0
    %v3634 = vmax.f32 %v3602, 0.0
    %v3635 = vmax.f32 %v3603, 0.0
    %v3636 = vmax.f32 %v3604, 0.0
    %v3637 = vmax.f32 %v3605, 0.0
    %v3638 = vmax.f32 %v3606, 0.0
    %v3639 = vmax.f32 %v3607, 0.0
    %v3640 = vmax.f32 %v3608, 0.0
    %v3641 = vmax.f32 %v3609, 0.0
    %v3642 = vmax.f32 %v3610, 0.0
    %v3643 = vmax.f32 %v3611, 0.0
    %v3644 = vmax.f32 %v3612, 0.0
    %v3645 = vmax.f32 %v3613, 0.0
    %v3646 = vmax.f32 %v3614, 0.0
    %v3647 = vmax.f32 %v3615, 0.0
    %v3648 = vmax.f32 %v3616, 0.0
    %v3649 = vmax.f32 %v3617, 0.0
    %v3650 = vmax.f32 %v3618, 0.0
    %v3651 = vmax.f32 %v3619, 0.0
    %v3652 = vmax.f32 %v3620, 0.0
    %v3653 = vmax.f32 %v3621, 0.0
    %v3654 = vmax.f32 %v3622, 0.0
    %v3655 = vmax.f32 %v3623, 0.0
    %v3656 = vmax.f32 %v3624, 0.0
    %v3657 = vmax.f32 %v3625, 0.0
    %v3658 = vmax.f32 %v3626, 0.0
    %v3659 = vmax.f32 %v3627, 0.0
    %v3660 = vmax.f32 %v3628, 0.0
    %v3661 = vmax.f32 %v3629, 0.0
    %v3662 = vmax.f32 %v3630, 0.0
    %3663 = vst.msk [vmem:[#allocation2] sm:$0xff] %vm300, %v3631
    %3664 = vst.msk [vmem:[#allocation2 + $0x8] sm:$0xff] %vm300, %v3632
    %3665 = vst.msk [vmem:[#allocation2 + $0x10] sm:$0xff] %vm300, %v3633
    %3666 = vst.msk [vmem:[#allocation2 + $0x18] sm:$0xff] %vm300, %v3634
    %3667 = vst.msk [vmem:[#allocation2 + $0x20] sm:$0xff] %vm300, %v3635
    %3668 = vst.msk [vmem:[#allocation2 + $0x28] sm:$0xff] %vm300, %v3636
    %3669 = vst.msk [vmem:[#allocation2 + $0x30] sm:$0xff] %vm300, %v3637
    %3670 = vst.msk [vmem:[#allocation2 + $0x38] sm:$0xff] %vm300, %v3638
    %3671 = vst.msk [vmem:[#allocation2 + $0x40] sm:$0xff] %vm300, %v3639
    %3672 = vst.msk [vmem:[#allocation2 + $0x48] sm:$0xff] %vm300, %v3640
    %3673 = vst.msk [vmem:[#allocation2 + $0x50] sm:$0xff] %vm300, %v3641
    %3674 = vst.msk [vmem:[#allocation2 + $0x58] sm:$0xff] %vm300, %v3642
    %3675 = vst.msk [vmem:[#allocation2 + $0x60] sm:$0xff] %vm300, %v3643
    %3676 = vst.msk [vmem:[#allocation2 + $0x68] sm:$0xff] %vm300, %v3644
    %3677 = vst.msk [vmem:[#allocation2 + $0x70] sm:$0xff] %vm300, %v3645
    %3678 = vst.msk [vmem:[#allocation2 + $0x78] sm:$0xff] %vm300, %v3646
    %3679 = vst.msk [vmem:[#allocation2 + $0x80] sm:$0xff] %vm300, %v3647
    %3680 = vst.msk [vmem:[#allocation2 + $0x88] sm:$0xff] %vm300, %v3648
    %3681 = vst.msk [vmem:[#allocation2 + $0x90] sm:$0xff] %vm300, %v3649
    %3682 = vst.msk [vmem:[#allocation2 + $0x98] sm:$0xff] %vm300, %v3650
    %3683 = vst.msk [vmem:[#allocation2 + $0xa0] sm:$0xff] %vm300, %v3651
    %3684 = vst.msk [vmem:[#allocation2 + $0xa8] sm:$0xff] %vm300, %v3652
    %3685 = vst.msk [vmem:[#allocation2 + $0xb0] sm:$0xff] %vm300, %v3653
    %3686 = vst.msk [vmem:[#allocation2 + $0xb8] sm:$0xff] %vm300, %v3654
    %3687 = vst.msk [vmem:[#allocation2 + $0xc0] sm:$0xff] %vm300, %v3655
    %3688 = vst.msk [vmem:[#allocation2 + $0xc8] sm:$0xff] %vm300, %v3656
    %3689 = vst.msk [vmem:[#allocation2 + $0xd0] sm:$0xff] %vm300, %v3657
    %3690 = vst.msk [vmem:[#allocation2 + $0xd8] sm:$0xff] %vm300, %v3658
    %3691 = vst.msk [vmem:[#allocation2 + $0xe0] sm:$0xff] %vm300, %v3659
    %3692 = vst.msk [vmem:[#allocation2 + $0xe8] sm:$0xff] %vm300, %v3660
    %3693 = vst.msk [vmem:[#allocation2 + $0xf0] sm:$0xff] %vm300, %v3661
    %3694 = vst.msk [vmem:[#allocation2 + $0xf8] sm:$0xff] %vm300, %v3662
    %v3695 = vsel %vm300, %v3631, 0.0
    %v3696 = vsel %vm300, %v3632, 0.0
    %v3697 = vadd.f32 %v3695, %v3696
    %v3698 = vsel %vm300, %v3633, 0.0
    %v3699 = vadd.f32 %v3697, %v3698
    %v3700 = vsel %vm300, %v3634, 0.0
    %v3701 = vadd.f32 %v3699, %v3700
    %v3702 = vsel %vm300, %v3635, 0.0
    %v3703 = vadd.f32 %v3701, %v3702
    %v3704 = vsel %vm300, %v3636, 0.0
    %v3705 = vadd.f32 %v3703, %v3704
    %v3706 = vsel %vm300, %v3637, 0.0
    %v3707 = vadd.f32 %v3705, %v3706
    %v3708 = vsel %vm300, %v3638, 0.0
    %v3709 = vadd.f32 %v3707, %v3708
    %v3710 = vsel %vm300, %v3639, 0.0
    %v3711 = vadd.f32 %v3709, %v3710
    %v3712 = vsel %vm300, %v3640, 0.0
    %v3713 = vadd.f32 %v3711, %v3712
    %v3714 = vsel %vm300, %v3641, 0.0
    %v3715 = vadd.f32 %v3713, %v3714
    %v3716 = vsel %vm300, %v3642, 0.0
    %v3717 = vadd.f32 %v3715, %v3716
    %v3718 = vsel %vm300, %v3643, 0.0
    %v3719 = vadd.f32 %v3717, %v3718
    %v3720 = vsel %vm300, %v3644, 0.0
    %v3721 = vadd.f32 %v3719, %v3720
    %v3722 = vsel %vm300, %v3645, 0.0
    %v3723 = vadd.f32 %v3721, %v3722
    %v3724 = vsel %vm300, %v3646, 0.0
    %v3725 = vadd.f32 %v3723, %v3724
    %v3726 = vsel %vm300, %v3647, 0.0
    %v3727 = vadd.f32 %v3725, %v3726
    %v3728 = vsel %vm300, %v3648, 0.0
    %v3729 = vadd.f32 %v3727, %v3728
    %v3730 = vsel %vm300, %v3649, 0.0
    %v3731 = vadd.f32 %v3729, %v3730
    %v3732 = vsel %vm300, %v3650, 0.0
    %v3733 = vadd.f32 %v3731, %v3732
    %v3734 = vsel %vm300, %v3651, 0.0
    %v3735 = vadd.f32 %v3733, %v3734
    %v3736 = vsel %vm300, %v3652, 0.0
    %v3737 = vadd.f32 %v3735, %v3736
    %v3738 = vsel %vm300, %v3653, 0.0
    %v3739 = vadd.f32 %v3737, %v3738
    %v3740 = vsel %vm300, %v3654, 0.0
    %v3741 = vadd.f32 %v3739, %v3740
    %v3742 = vsel %vm300, %v3655, 0.0
    %v3743 = vadd.f32 %v3741, %v3742
    %v3744 = vsel %vm300, %v3656, 0.0
    %v3745 = vadd.f32 %v3743, %v3744
    %v3746 = vsel %vm300, %v3657, 0.0
    %v3747 = vadd.f32 %v3745, %v3746
    %v3748 = vsel %vm300, %v3658, 0.0
    %v3749 = vadd.f32 %v3747, %v3748
    %v3750 = vsel %vm300, %v3659, 0.0
    %v3751 = vadd.f32 %v3749, %v3750
    %v3752 = vsel %vm300, %v3660, 0.0
    %v3753 = vadd.f32 %v3751, %v3752
    %v3754 = vsel %vm300, %v3661, 0.0
    %v3755 = vadd.f32 %v3753, %v3754
    %v3756 = vsel %vm300, %v3662, 0.0
    %v3757 = vadd.f32 %v3755, %v3756
    %v3758 = vrot.slane %v3757, 4
    %v3759 = vadd.f32 %v3757, %v3758
    %v3760 = vrot.slane %v3759, 2
    %v3761 = vadd.f32 %v3759, %v3760
    %v3762 = vrot.slane %v3761, 1
    %v3763 = vadd.f32 %v3761, %v3762
    %v3764 = vmul.f32 %v3763, 0.00390625
    %v3765 = vld [vmem:[%s9] sm:$0xff]
    %v3766 = vld [vmem:[%s9 + $0x8] sm:$0xff]
    %v3767 = vld [vmem:[%s9 + $0x10] sm:$0xff]
    %v3768 = vld [vmem:[%s9 + $0x18] sm:$0xff]
    %v3769 = vld [vmem:[%s9 + $0x20] sm:$0xff]
    %v3770 = vld [vmem:[%s9 + $0x28] sm:$0xff]
    %v3771 = vld [vmem:[%s9 + $0x30] sm:$0xff]
    %v3772 = vld [vmem:[%s9 + $0x38] sm:$0xff]
    %v3773 = vld [vmem:[%s10] sm:$0x1]
    %v3775 = vsel %vm300, %v3764, 0
    %3777 = vmatpush.msra.mxu0 0.0
    %3778 = vmatpush.msra.mxu0 0.0
    %3779 = vmatpush.msra.mxu0 0.0
    %3780 = vmatpush.msra.mxu0 0.0
    %3781 = vmatpush.msra.mxu0 0.0
    %3782 = vmatpush.msra.mxu0 0.0
    %3783 = vmatpush.msra.mxu0 0.0
    %3784 = vmatpush.msra.mxu0 0.0
    %3785 = vmatpush.msra.mxu0 %v3772
    %3786 = vmatpush.msra.mxu0 %v3771
    %3787 = vmatpush.msra.mxu0 %v3770
    %3788 = vmatpush.msra.mxu0 %v3769
    %3789 = vmatpush.msra.mxu0 %v3768
    %3790 = vmatpush.msra.mxu0 %v3767
    %3791 = vmatpush.msra.mxu0 %v3766
    %3792 = vmatpush.msra.mxu0 %v3765
    %3793 = vmatmul.f32.gmra.mxu0 %v3775
    %v3794 = vpop.f32.mrf.mxu0
    %v3795 = vadd.f32 %v3773, %v3794
    %3796 = vdwg.mxu0
    %v3797 = vmax.f32 %v3795, 0.0
    %v3798 = vld [vmem:[%s11] sm:$0xf]
    %v3799 = vld [vmem:[%s12] sm:$0x1]
    %vm3800 = vcmask 31744
    %v3802 = vsel %vm3800, %v3797, 0
    %vm3804 = vcmask 1043456
    %v3806 = vsel %vm3804, %v3798, 0
    %3808 = vmatpush.msra.mxu0 0.0
    %3809 = vmatpush.msra.mxu0 0.0
    %3810 = vmatpush.msra.mxu0 0.0
    %3811 = vmatpush.msra.mxu0 0.0
    %3812 = vmatpush.msra.mxu0 0.0
    %3813 = vmatpush.msra.mxu0 0.0
    %3814 = vmatpush.msra.mxu0 0.0
    %3815 = vmatpush.msra.mxu0 0.0
    %3816 = vmatpush.msra.mxu0 0.0
    %3817 = vmatpush.msra.mxu0 0.0
    %3818 = vmatpush.msra.mxu0 0.0
    %3819 = vmatpush.msra.mxu0 0.0
    %3820 = vmatpush.msra.mxu0 0.0
    %3821 = vmatpush.msra.mxu0 0.0
    %3822 = vmatpush.msra.mxu0 0.0
    %3823 = vmatpush.msra.mxu0 %v3806
    %3824 = vmatmul.f32.gmra.mxu0 %v3802
    %v3825 = vpop.f32.mrf.mxu0
    %v3826 = vadd.f32 %v3799, %v3825
    %3827 = vdwg.mxu0
    %v3828 = vsub.f32 0.0, %v3826
    %v3829 = vmul.f32 %v3828, 1.442695
    %v3830 = vpow.pop %v3829
    %v3831 = vadd.f32 %v3830, 1.0
    %v3832 = vrcp.pop %v3831
    %v3833 = vmul.f32 %v3831, %v3832
    %v3834 = vsub.f32 1.0, %v3833
    %v3835 = vmul.f32 %v3832, %v3834
    %v3836 = vadd.f32 %v3832, %v3835
    %vm3837 = vweird.f32 %v3831
    %vm3838 = vweird.f32 %v3832
    %vm3839 = vmor %vm3837, %vm3838
    %v3840 = vsel %vm3839, %v3832, %v3836
    %v3841 = vand.u32 2147483647, %v3831
    %vm3842 = vcmp.eq.f32.partialorder %v3841, 8.507059e+37
    %v3843 = vand.u32 %v3831, 2147483648
    %v3844 = vor.u32 1.1754944e-38, %v3843
    %v3845 = vsel %vm3842, %v3844, %v3840
    %v3846 = vmul.f32 1.0, %v3845
    %v3847 = vld [vmem:[#allocation2] sm:$0xff]
    %v3848 = vld [vmem:[#allocation2 + $0x8] sm:$0xff]
    %v3849 = vld [vmem:[#allocation2 + $0x10] sm:$0xff]
    %v3850 = vld [vmem:[#allocation2 + $0x18] sm:$0xff]
    %v3851 = vld [vmem:[#allocation2 + $0x20] sm:$0xff]
    %v3852 = vld [vmem:[#allocation2 + $0x28] sm:$0xff]
    %v3853 = vld [vmem:[#allocation2 + $0x30] sm:$0xff]
    %v3854 = vld [vmem:[#allocation2 + $0x38] sm:$0xff]
    %v3855 = vld [vmem:[#allocation2 + $0x40] sm:$0xff]
    %v3856 = vld [vmem:[#allocation2 + $0x48] sm:$0xff]
    %v3857 = vld [vmem:[#allocation2 + $0x50] sm:$0xff]
    %v3858 = vld [vmem:[#allocation2 + $0x58] sm:$0xff]
    %v3859 = vld [vmem:[#allocation2 + $0x60] sm:$0xff]
    %v3860 = vld [vmem:[#allocation2 + $0x68] sm:$0xff]
    %v3861 = vld [vmem:[#allocation2 + $0x70] sm:$0xff]
    %v3862 = vld [vmem:[#allocation2 + $0x78] sm:$0xff]
    %v3863 = vld [vmem:[#allocation2 + $0x80] sm:$0xff]
    %v3864 = vld [vmem:[#allocation2 + $0x88] sm:$0xff]
    %v3865 = vld [vmem:[#allocation2 + $0x90] sm:$0xff]
    %v3866 = vld [vmem:[#allocation2 + $0x98] sm:$0xff]
    %v3867 = vld [vmem:[#allocation2 + $0xa0] sm:$0xff]
    %v3868 = vld [vmem:[#allocation2 + $0xa8] sm:$0xff]
    %v3869 = vld [vmem:[#allocation2 + $0xb0] sm:$0xff]
    %v3870 = vld [vmem:[#allocation2 + $0xb8] sm:$0xff]
    %v3871 = vld [vmem:[#allocation2 + $0xc0] sm:$0xff]
    %v3872 = vld [vmem:[#allocation2 + $0xc8] sm:$0xff]
    %v3873 = vld [vmem:[#allocation2 + $0xd0] sm:$0xff]
    %v3874 = vld [vmem:[#allocation2 + $0xd8] sm:$0xff]
    %v3875 = vld [vmem:[#allocation2 + $0xe0] sm:$0xff]
    %v3876 = vld [vmem:[#allocation2 + $0xe8] sm:$0xff]
    %v3877 = vld [vmem:[#allocation2 + $0xf0] sm:$0xff]
    %v3878 = vld [vmem:[#allocation2 + $0xf8] sm:$0xff]
    %v3879 = vmax.f32 %v3847, %v3849
    %v3880 = vmax.f32 %v3848, %v3850
    %v3881 = vmax.f32 %v3851, %v3853
    %v3882 = vmax.f32 %v3852, %v3854
    %v3883 = vmax.f32 %v3855, %v3857
    %v3884 = vmax.f32 %v3856, %v3858
    %v3885 = vmax.f32 %v3859, %v3861
    %v3886 = vmax.f32 %v3860, %v3862
    %v3887 = vmax.f32 %v3863, %v3865
    %v3888 = vmax.f32 %v3864, %v3866
    %v3889 = vmax.f32 %v3867, %v3869
    %v3890 = vmax.f32 %v3868, %v3870
    %v3891 = vmax.f32 %v3871, %v3873
    %v3892 = vmax.f32 %v3872, %v3874
    %v3893 = vmax.f32 %v3875, %v3877
    %v3894 = vmax.f32 %v3876, %v3878
    %v3911 = vrot.slane %v3879, 2
    %v3912 = vrot.slane %v3879, 4
    %v3913 = vrot.slane %v3879, 6
    %v3914 = vrot.slane %v3880, 2
    %v3915 = vrot.slane %v3880, 4
    %v3916 = vrot.slane %v3880, 6
    %v3917 = vrot.slane %v3881, 2
    %v3918 = vrot.slane %v3881, 4
    %v3919 = vrot.slane %v3881, 6
    %v3920 = vrot.slane %v3882, 2
    %v3921 = vrot.slane %v3882, 4
    %v3922 = vrot.slane %v3882, 6
    %v3923 = vrot.slane %v3883, 2
    %v3924 = vrot.slane %v3883, 4
    %v3925 = vrot.slane %v3883, 6
    %v3926 = vrot.slane %v3884, 2
    %v3927 = vrot.slane %v3884, 4
    %v3928 = vrot.slane %v3884, 6
    %v3929 = vrot.slane %v3885, 2
    %v3930 = vrot.slane %v3885, 4
    %v3931 = vrot.slane %v3885, 6
    %v3932 = vrot.slane %v3886, 2
    %v3933 = vrot.slane %v3886, 4
    %v3934 = vrot.slane %v3886, 6
    %v3935 = vrot.slane %v3887, 2
    %v3936 = vrot.slane %v3887, 4
    %v3937 = vrot.slane %v3887, 6
    %v3938 = vrot.slane %v3888, 2
    %v3939 = vrot.slane %v3888, 4
    %v3940 = vrot.slane %v3888, 6
    %v3941 = vrot.slane %v3889, 2
    %v3942 = vrot.slane %v3889, 4
    %v3943 = vrot.slane %v3889, 6
    %v3944 = vrot.slane %v3890, 2
    %v3945 = vrot.slane %v3890, 4
    %v3946 = vrot.slane %v3890, 6
    %v3947 = vrot.slane %v3891, 2
    %v3948 = vrot.slane %v3891, 4
    %v3949 = vrot.slane %v3891, 6
    %v3950 = vrot.slane %v3892, 2
    %v3951 = vrot.slane %v3892, 4
    %v3952 = vrot.slane %v3892, 6
    %v3953 = vrot.slane %v3893, 2
    %v3954 = vrot.slane %v3893, 4
    %v3955 = vrot.slane %v3893, 6
    %v3956 = vrot.slane %v3894, 2
    %v3957 = vrot.slane %v3894, 4
    %v3958 = vrot.slane %v3894, 6
    %v4007 = vrot.slane %v3879, 7
    %v4008 = vrot.slane %v4007, 2
    %v4009 = vrot.slane %v3911, 7
    %v4010 = vrot.slane %v4009, 2
    %v4011 = vrot.slane %v3912, 7
    %v4012 = vrot.slane %v4011, 2
    %v4013 = vrot.slane %v3913, 7
    %v4014 = vrot.slane %v4013, 2
    %v4015 = vrot.slane %v3880, 7
    %v4016 = vrot.slane %v4015, 2
    %v4017 = vrot.slane %v3914, 7
    %v4018 = vrot.slane %v4017, 2
    %v4019 = vrot.slane %v3915, 7
    %v4020 = vrot.slane %v4019, 2
    %v4021 = vrot.slane %v3916, 7
    %v4022 = vrot.slane %v4021, 2
    %v4023 = vrot.slane %v3881, 7
    %v4024 = vrot.slane %v4023, 2
    %v4025 = vrot.slane %v3917, 7
    %v4026 = vrot.slane %v4025, 2
    %v4027 = vrot.slane %v3918, 7
    %v4028 = vrot.slane %v4027, 2
    %v4029 = vrot.slane %v3919, 7
    %v4030 = vrot.slane %v4029, 2
    %v4031 = vrot.slane %v3882, 7
    %v4032 = vrot.slane %v4031, 2
    %v4033 = vrot.slane %v3920, 7
    %v4034 = vrot.slane %v4033, 2
    %v4035 = vrot.slane %v3921, 7
    %v4036 = vrot.slane %v4035, 2
    %v4037 = vrot.slane %v3922, 7
    %v4038 = vrot.slane %v4037, 2
    %v4039 = vrot.slane %v3883, 7
    %v4040 = vrot.slane %v4039, 2
    %v4041 = vrot.slane %v3923, 7
    %v4042 = vrot.slane %v4041, 2
    %v4043 = vrot.slane %v3924, 7
    %v4044 = vrot.slane %v4043, 2
    %v4045 = vrot.slane %v3925, 7
    %v4046 = vrot.slane %v4045, 2
    %v4047 = vrot.slane %v3884, 7
    %v4048 = vrot.slane %v4047, 2
    %v4049 = vrot.slane %v3926, 7
    %v4050 = vrot.slane %v4049, 2
    %v4051 = vrot.slane %v3927, 7
    %v4052 = vrot.slane %v4051, 2
    %v4053 = vrot.slane %v3928, 7
    %v4054 = vrot.slane %v4053, 2
    %v4055 = vrot.slane %v3885, 7
    %v4056 = vrot.slane %v4055, 2
    %v4057 = vrot.slane %v3929, 7
    %v4058 = vrot.slane %v4057, 2
    %v4059 = vrot.slane %v3930, 7
    %v4060 = vrot.slane %v4059, 2
    %v4061 = vrot.slane %v3931, 7
    %v4062 = vrot.slane %v4061, 2
    %v4063 = vrot.slane %v3886, 7
    %v4064 = vrot.slane %v4063, 2
    %v4065 = vrot.slane %v3932, 7
    %v4066 = vrot.slane %v4065, 2
    %v4067 = vrot.slane %v3933, 7
    %v4068 = vrot.slane %v4067, 2
    %v4069 = vrot.slane %v3934, 7
    %v4070 = vrot.slane %v4069, 2
    %v4071 = vrot.slane %v3887, 7
    %v4072 = vrot.slane %v4071, 2
    %v4073 = vrot.slane %v3935, 7
    %v4074 = vrot.slane %v4073, 2
    %v4075 = vrot.slane %v3936, 7
    %v4076 = vrot.slane %v4075, 2
    %v4077 = vrot.slane %v3937, 7
    %v4078 = vrot.slane %v4077, 2
    %v4079 = vrot.slane %v3888, 7
    %v4080 = vrot.slane %v4079, 2
    %v4081 = vrot.slane %v3938, 7
    %v4082 = vrot.slane %v4081, 2
    %v4083 = vrot.slane %v3939, 7
    %v4084 = vrot.slane %v4083, 2
    %v4085 = vrot.slane %v3940, 7
    %v4086 = vrot.slane %v4085, 2
    %v4087 = vrot.slane %v3889, 7
    %v4088 = vrot.slane %v4087, 2
    %v4089 = vrot.slane %v3941, 7
    %v4090 = vrot.slane %v4089, 2
    %v4091 = vrot.slane %v3942, 7
    %v4092 = vrot.slane %v4091, 2
    %v4093 = vrot.slane %v3943, 7
    %v4094 = vrot.slane %v4093, 2
    %v4095 = vrot.slane %v3890, 7
    %v4096 = vrot.slane %v4095, 2
    %v4097 = vrot.slane %v3944, 7
    %v4098 = vrot.slane %v4097, 2
    %v4099 = vrot.slane %v3945, 7
    %v4100 = vrot.slane %v4099, 2
    %v4101 = vrot.slane %v3946, 7
    %v4102 = vrot.slane %v4101, 2
    %v4103 = vrot.slane %v3891, 7
    %v4104 = vrot.slane %v4103, 2
    %v4105 = vrot.slane %v3947, 7
    %v4106 = vrot.slane %v4105, 2
    %v4107 = vrot.slane %v3948, 7
    %v4108 = vrot.slane %v4107, 2
    %v4109 = vrot.slane %v3949, 7
    %v4110 = vrot.slane %v4109, 2
    %v4111 = vrot.slane %v3892, 7
    %v4112 = vrot.slane %v4111, 2
    %v4113 = vrot.slane %v3950, 7
    %v4114 = vrot.slane %v4113, 2
    %v4115 = vrot.slane %v3951, 7
    %v4116 = vrot.slane %v4115, 2
    %v4117 = vrot.slane %v3952, 7
    %v4118 = vrot.slane %v4117, 2
    %v4119 = vrot.slane %v3893, 7
    %v4120 = vrot.slane %v4119, 2
    %v4121 = vrot.slane %v3953, 7
    %v4122 = vrot.slane %v4121, 2
    %v4123 = vrot.slane %v3954, 7
    %v4124 = vrot.slane %v4123, 2
    %v4125 = vrot.slane %v3955, 7
    %v4126 = vrot.slane %v4125, 2
    %v4127 = vrot.slane %v3894, 7
    %v4128 = vrot.slane %v4127, 2
    %v4129 = vrot.slane %v3956, 7
    %v4130 = vrot.slane %v4129, 2
    %v4131 = vrot.slane %v3957, 7
    %v4132 = vrot.slane %v4131, 2
    %v4133 = vrot.slane %v3958, 7
    %v4134 = vrot.slane %v4133, 2
    %v4199 = vmax.f32 %v3879, %v4008
    %v4200 = vmax.f32 %v3911, %v4010
    %v4201 = vmax.f32 %v3912, %v4012
    %v4202 = vmax.f32 %v3913, %v4014
    %v4203 = vmax.f32 %v3880, %v4016
    %v4204 = vmax.f32 %v3914, %v4018
    %v4205 = vmax.f32 %v3915, %v4020
    %v4206 = vmax.f32 %v3916, %v4022
    %v4207 = vmax.f32 %v3881, %v4024
    %v4208 = vmax.f32 %v3917, %v4026
    %v4209 = vmax.f32 %v3918, %v4028
    %v4210 = vmax.f32 %v3919, %v4030
    %v4211 = vmax.f32 %v3882, %v4032
    %v4212 = vmax.f32 %v3920, %v4034
    %v4213 = vmax.f32 %v3921, %v4036
    %v4214 = vmax.f32 %v3922, %v4038
    %v4215 = vmax.f32 %v3883, %v4040
    %v4216 = vmax.f32 %v3923, %v4042
    %v4217 = vmax.f32 %v3924, %v4044
    %v4218 = vmax.f32 %v3925, %v4046
    %v4219 = vmax.f32 %v3884, %v4048
    %v4220 = vmax.f32 %v3926, %v4050
    %v4221 = vmax.f32 %v3927, %v4052
    %v4222 = vmax.f32 %v3928, %v4054
    %v4223 = vmax.f32 %v3885, %v4056
    %v4224 = vmax.f32 %v3929, %v4058
    %v4225 = vmax.f32 %v3930, %v4060
    %v4226 = vmax.f32 %v3931, %v4062
    %v4227 = vmax.f32 %v3886, %v4064
    %v4228 = vmax.f32 %v3932, %v4066
    %v4229 = vmax.f32 %v3933, %v4068
    %v4230 = vmax.f32 %v3934, %v4070
    %v4231 = vmax.f32 %v3887, %v4072
    %v4232 = vmax.f32 %v3935, %v4074
    %v4233 = vmax.f32 %v3936, %v4076
    %v4234 = vmax.f32 %v3937, %v4078
    %v4235 = vmax.f32 %v3888, %v4080
    %v4236 = vmax.f32 %v3938, %v4082
    %v4237 = vmax.f32 %v3939, %v4084
    %v4238 = vmax.f32 %v3940, %v4086
    %v4239 = vmax.f32 %v3889, %v4088
    %v4240 = vmax.f32 %v3941, %v4090
    %v4241 = vmax.f32 %v3942, %v4092
    %v4242 = vmax.f32 %v3943, %v4094
    %v4243 = vmax.f32 %v3890, %v4096
    %v4244 = vmax.f32 %v3944, %v4098
    %v4245 = vmax.f32 %v3945, %v4100
    %v4246 = vmax.f32 %v3946, %v4102
    %v4247 = vmax.f32 %v3891, %v4104
    %v4248 = vmax.f32 %v3947, %v4106
    %v4249 = vmax.f32 %v3948, %v4108
    %v4250 = vmax.f32 %v3949, %v4110
    %v4251 = vmax.f32 %v3892, %v4112
    %v4252 = vmax.f32 %v3950, %v4114
    %v4253 = vmax.f32 %v3951, %v4116
    %v4254 = vmax.f32 %v3952, %v4118
    %v4255 = vmax.f32 %v3893, %v4120
    %v4256 = vmax.f32 %v3953, %v4122
    %v4257 = vmax.f32 %v3954, %v4124
    %v4258 = vmax.f32 %v3955, %v4126
    %v4259 = vmax.f32 %v3894, %v4128
    %v4260 = vmax.f32 %v3956, %v4130
    %v4261 = vmax.f32 %v3957, %v4132
    %v4262 = vmax.f32 %v3958, %v4134
    %v4263 = vperm.slane %v3846, 0
    %v4265 = vrot.slane %v4263, 2
    %v4266 = vrot.slane %v4263, 4
    %v4267 = vrot.slane %v4263, 6
    %v4268 = vrot.slane %v4263, 1
    %v4269 = vrot.slane %v4265, 1
    %v4270 = vrot.slane %v4266, 1
    %v4271 = vrot.slane %v4267, 1
    %v4280 = vmul.f32 %v4199, %v4263
    %v4281 = vmul.f32 %v4200, %v4268
    %v4282 = vmul.f32 %v4201, %v4265
    %v4283 = vmul.f32 %v4202, %v4269
    %v4284 = vmul.f32 %v4203, %v4266
    %v4285 = vmul.f32 %v4204, %v4270
    %v4286 = vmul.f32 %v4205, %v4267
    %v4287 = vmul.f32 %v4206, %v4271
    %v4288 = vmul.f32 %v4207, %v4263
    %v4289 = vmul.f32 %v4208, %v4268
    %v4290 = vmul.f32 %v4209, %v4265
    %v4291 = vmul.f32 %v4210, %v4269
    %v4292 = vmul.f32 %v4211, %v4266
    %v4293 = vmul.f32 %v4212, %v4270
    %v4294 = vmul.f32 %v4213, %v4267
    %v4295 = vmul.f32 %v4214, %v4271
    %v4296 = vmul.f32 %v4215, %v4263
    %v4297 = vmul.f32 %v4216, %v4268
    %v4298 = vmul.f32 %v4217, %v4265
    %v4299 = vmul.f32 %v4218, %v4269
    %v4300 = vmul.f32 %v4219, %v4266
    %v4301 = vmul.f32 %v4220, %v4270
    %v4302 = vmul.f32 %v4221, %v4267
    %v4303 = vmul.f32 %v4222, %v4271
    %v4304 = vmul.f32 %v4223, %v4263
    %v4305 = vmul.f32 %v4224, %v4268
    %v4306 = vmul.f32 %v4225, %v4265
    %v4307 = vmul.f32 %v4226, %v4269
    %v4308 = vmul.f32 %v4227, %v4266
    %v4309 = vmul.f32 %v4228, %v4270
    %v4310 = vmul.f32 %v4229, %v4267
    %v4311 = vmul.f32 %v4230, %v4271
    %v4312 = vmul.f32 %v4231, %v4263
    %v4313 = vmul.f32 %v4232, %v4268
    %v4314 = vmul.f32 %v4233, %v4265
    %v4315 = vmul.f32 %v4234, %v4269
    %v4316 = vmul.f32 %v4235, %v4266
    %v4317 = vmul.f32 %v4236, %v4270
    %v4318 = vmul.f32 %v4237, %v4267
    %v4319 = vmul.f32 %v4238, %v4271
    %v4320 = vmul.f32 %v4239, %v4263
    %v4321 = vmul.f32 %v4240, %v4268
    %v4322 = vmul.f32 %v4241, %v4265
    %v4323 = vmul.f32 %v4242, %v4269
    %v4324 = vmul.f32 %v4243, %v4266
    %v4325 = vmul.f32 %v4244, %v4270
    %v4326 = vmul.f32 %v4245, %v4267
    %v4327 = vmul.f32 %v4246, %v4271
    %v4328 = vmul.f32 %v4247, %v4263
    %v4329 = vmul.f32 %v4248, %v4268
    %v4330 = vmul.f32 %v4249, %v4265
    %v4331 = vmul.f32 %v4250, %v4269
    %v4332 = vmul.f32 %v4251, %v4266
    %v4333 = vmul.f32 %v4252, %v4270
    %v4334 = vmul.f32 %v4253, %v4267
    %v4335 = vmul.f32 %v4254, %v4271
    %v4336 = vmul.f32 %v4255, %v4263
    %v4337 = vmul.f32 %v4256, %v4268
    %v4338 = vmul.f32 %v4257, %v4265
    %v4339 = vmul.f32 %v4258, %v4269
    %v4340 = vmul.f32 %v4259, %v4266
    %v4341 = vmul.f32 %v4260, %v4270
    %v4342 = vmul.f32 %v4261, %v4267
    %v4343 = vmul.f32 %v4262, %v4271
    %v4408 = vperm.slane %v4280, 0
    %v4409 = vperm.slane %v4281, 0
    %v4410 = vperm.slane %v4282, 0
    %v4411 = vperm.slane %v4283, 0
    %v4412 = vperm.slane %v4284, 0
    %v4413 = vperm.slane %v4285, 0
    %v4414 = vperm.slane %v4286, 0
    %v4415 = vperm.slane %v4287, 0
    %v4416 = vperm.slane %v4288, 0
    %v4417 = vperm.slane %v4289, 0
    %v4418 = vperm.slane %v4290, 0
    %v4419 = vperm.slane %v4291, 0
    %v4420 = vperm.slane %v4292, 0
    %v4421 = vperm.slane %v4293, 0
    %v4422 = vperm.slane %v4294, 0
    %v4423 = vperm.slane %v4295, 0
    %v4424 = vperm.slane %v4296, 0
    %v4425 = vperm.slane %v4297, 0
    %v4426 = vperm.slane %v4298, 0
    %v4427 = vperm.slane %v4299, 0
    %v4428 = vperm.slane %v4300, 0
    %v4429 = vperm.slane %v4301, 0
    %v4430 = vperm.slane %v4302, 0
    %v4431 = vperm.slane %v4303, 0
    %v4432 = vperm.slane %v4304, 0
    %v4433 = vperm.slane %v4305, 0
    %v4434 = vperm.slane %v4306, 0
    %v4435 = vperm.slane %v4307, 0
    %v4436 = vperm.slane %v4308, 0
    %v4437 = vperm.slane %v4309, 0
    %v4438 = vperm.slane %v4310, 0
    %v4439 = vperm.slane %v4311, 0
    %v4440 = vperm.slane %v4312, 0
    %v4441 = vperm.slane %v4313, 0
    %v4442 = vperm.slane %v4314, 0
    %v4443 = vperm.slane %v4315, 0
    %v4444 = vperm.slane %v4316, 0
    %v4445 = vperm.slane %v4317, 0
    %v4446 = vperm.slane %v4318, 0
    %v4447 = vperm.slane %v4319, 0
    %v4448 = vperm.slane %v4320, 0
    %v4449 = vperm.slane %v4321, 0
    %v4450 = vperm.slane %v4322, 0
    %v4451 = vperm.slane %v4323, 0
    %v4452 = vperm.slane %v4324, 0
    %v4453 = vperm.slane %v4325, 0
    %v4454 = vperm.slane %v4326, 0
    %v4455 = vperm.slane %v4327, 0
    %v4456 = vperm.slane %v4328, 0
    %v4457 = vperm.slane %v4329, 0
    %v4458 = vperm.slane %v4330, 0
    %v4459 = vperm.slane %v4331, 0
    %v4460 = vperm.slane %v4332, 0
    %v4461 = vperm.slane %v4333, 0
    %v4462 = vperm.slane %v4334, 0
    %v4463 = vperm.slane %v4335, 0
    %v4464 = vperm.slane %v4336, 0
    %v4465 = vperm.slane %v4337, 0
    %v4466 = vperm.slane %v4338, 0
    %v4467 = vperm.slane %v4339, 0
    %v4468 = vperm.slane %v4340, 0
    %v4469 = vperm.slane %v4341, 0
    %v4470 = vperm.slane %v4342, 0
    %v4471 = vperm.slane %v4343, 0
    %vm4472 = vcmask 1041409
    %v4473 = vsel %vm4472, %v4409, %v4408
    %vm4474 = vcmask 1042434
    %v4475 = vsel %vm4474, %v4410, %v4473
    %vm4476 = vcmask 1043459
    %v4477 = vsel %vm4476, %v4411, %v4475
    %vm4478 = vcmask 1044484
    %v4479 = vsel %vm4478, %v4412, %v4477
    %vm4480 = vcmask 1045509
    %v4481 = vsel %vm4480, %v4413, %v4479
    %vm4482 = vcmask 1046534
    %v4483 = vsel %vm4482, %v4414, %v4481
    %vm4484 = vcmask 1047559
    %v4485 = vsel %vm4484, %v4415, %v4483
    %v4486 = vsel %vm4472, %v4417, %v4416
    %v4487 = vsel %vm4474, %v4418, %v4486
    %v4488 = vsel %vm4476, %v4419, %v4487
    %v4489 = vsel %vm4478, %v4420, %v4488
    %v4490 = vsel %vm4480, %v4421, %v4489
    %v4491 = vsel %vm4482, %v4422, %v4490
    %v4492 = vsel %vm4484, %v4423, %v4491
    %v4493 = vsel %vm4472, %v4425, %v4424
    %v4494 = vsel %vm4474, %v4426, %v4493
    %v4495 = vsel %vm4476, %v4427, %v4494
    %v4496 = vsel %vm4478, %v4428, %v4495
    %v4497 = vsel %vm4480, %v4429, %v4496
    %v4498 = vsel %vm4482, %v4430, %v4497
    %v4499 = vsel %vm4484, %v4431, %v4498
    %v4500 = vsel %vm4472, %v4433, %v4432
    %v4501 = vsel %vm4474, %v4434, %v4500
    %v4502 = vsel %vm4476, %v4435, %v4501
    %v4503 = vsel %vm4478, %v4436, %v4502
    %v4504 = vsel %vm4480, %v4437, %v4503
    %v4505 = vsel %vm4482, %v4438, %v4504
    %v4506 = vsel %vm4484, %v4439, %v4505
    %v4507 = vsel %vm4472, %v4441, %v4440
    %v4508 = vsel %vm4474, %v4442, %v4507
    %v4509 = vsel %vm4476, %v4443, %v4508
    %v4510 = vsel %vm4478, %v4444, %v4509
    %v4511 = vsel %vm4480, %v4445, %v4510
    %v4512 = vsel %vm4482, %v4446, %v4511
    %v4513 = vsel %vm4484, %v4447, %v4512
    %v4514 = vsel %vm4472, %v4449, %v4448
    %v4515 = vsel %vm4474, %v4450, %v4514
    %v4516 = vsel %vm4476, %v4451, %v4515
    %v4517 = vsel %vm4478, %v4452, %v4516
    %v4518 = vsel %vm4480, %v4453, %v4517
    %v4519 = vsel %vm4482, %v4454, %v4518
    %v4520 = vsel %vm4484, %v4455, %v4519
    %v4521 = vsel %vm4472, %v4457, %v4456
    %v4522 = vsel %vm4474, %v4458, %v4521
    %v4523 = vsel %vm4476, %v4459, %v4522
    %v4524 = vsel %vm4478, %v4460, %v4523
    %v4525 = vsel %vm4480, %v4461, %v4524
    %v4526 = vsel %vm4482, %v4462, %v4525
    %v4527 = vsel %vm4484, %v4463, %v4526
    %v4528 = vsel %vm4472, %v4465, %v4464
    %v4529 = vsel %vm4474, %v4466, %v4528
    %v4530 = vsel %vm4476, %v4467, %v4529
    %v4531 = vsel %vm4478, %v4468, %v4530
    %v4532 = vsel %vm4480, %v4469, %v4531
    %v4533 = vsel %vm4482, %v4470, %v4532
    %v4534 = vsel %vm4484, %v4471, %v4533
    %4543 = vst.msk [vmem:[#allocation4] sm:$0xff] %vm300, %v4485
    %4544 = vst.msk [vmem:[#allocation4 + $0x8] sm:$0xff] %vm300, %v4492
    %4545 = vst.msk [vmem:[#allocation4 + $0x10] sm:$0xff] %vm300, %v4499
    %4546 = vst.msk [vmem:[#allocation4 + $0x18] sm:$0xff] %vm300, %v4506
    %4547 = vst.msk [vmem:[#allocation4 + $0x20] sm:$0xff] %vm300, %v4513
    %4548 = vst.msk [vmem:[#allocation4 + $0x28] sm:$0xff] %vm300, %v4520
    %4549 = vst.msk [vmem:[#allocation4 + $0x30] sm:$0xff] %vm300, %v4527
    %4550 = vst.msk [vmem:[#allocation4 + $0x38] sm:$0xff] %vm300, %v4534
    // Predicated region
    $region54: #{tpu_custom_call.1} parent=1 // pred_check
      _
    $region55: #{tpu_custom_call.1} parent=1 // pred_check_branch
      %4552 = sbr.rel (0) target = $region57
    $region56: #{tpu_custom_call.1} parent=1 // pred_region
      %4554 = vsyncadd [#allocation5], 0
      %s4555 = sshll.u32 [#allocation4], 4
      %s4556 = int_to_ptr.vmem [resolvable:$true] %s4555
      %s4557 = sshll.u32 %s13, 4
      %s4558 = int_to_ptr.hbm [resolvable:$true] %s4557
      %4563 = dma.vmem_to_hbm [thread:$0]  %s4556, 1024, %s4558, [#allocation5], 128, 128, 8
    $region57: #{tpu_custom_call.1} parent=1 // pred_fallthru
      _
    // Predicated region
    $region58: #{tpu_custom_call.1} parent=1 // pred_check
      _
    $region59: #{tpu_custom_call.1} parent=1 // pred_check_branch
      %4565 = sbr.rel (0) target = $region61
    $region60: #{tpu_custom_call.1} parent=1 // pred_region
      %4567 = dma.done [#allocation5], 1024
    $region61: #{tpu_custom_call.1} parent=1 // pred_fallthru
      _
    %4568 = vsyncpa [#allocation5], 1

</llo_original>
